<compile_context>
chip_gen: v7x
topology: tpu7x:2x2x1
jax: 0.10.0
libtpu: 0.0.40
codegen_flags: <defaults>
</compile_context>

<pallas_src>
import functools

import jax
import jax.numpy as jnp
from jax import lax
from jax.experimental import pallas as pl
from jax.experimental.pallas import tpu as pltpu

LANE = 128


def _round_up(x, m):
    return (x + m - 1) // m * m


def _vmem_capacity_bytes():
    try:
        return int(pltpu.get_tpu_info().vmem_capacity_bytes)
    except Exception:
        return 64 << 20        # conservative (v7x-sized) default


def _choose_chunk_h(th, wt):
    """Row-chunk for the interleaved depthwise/pointwise loop (divides th)."""
    ch = 8
    while ch * 2 <= th and th % (ch * 2) == 0 and ch * wt < 256:
        ch *= 2
    return ch


def _vmem_need(th, ch, wp, wt, cin_p, cout_p):
    xbuf = 2 * (th + 2) * wp * cin_p * 4                 # manual input dbl-buf
    outb = 2 * th * wt * cout_p * 4                       # auto-pipelined out
    wgts = 2 * (9 * cin_p * 4 + cin_p * cout_p * 2 + cout_p * 4)
    chnk = 3 * ch * wp * cin_p * 4 + ch * wt * cin_p * 2 + 2 * ch * wt * cout_p * 4
    return xbuf + outb + wgts + chnk


def _choose_tile_h(H, wp, wt, cin_p, cout_p, budget_bytes):
    """Largest TH (multiple of 8, <= round_up(H,8)) fitting the VMEM budget."""
    th = 8
    h_cap = _round_up(H, 8)
    while True:
        nxt = th * 2
        if nxt > h_cap:
            break
        if _vmem_need(nxt, _choose_chunk_h(nxt, wt), wp, wt,
                      cin_p, cout_p) > budget_bytes:
            break
        th = nxt
    return th


def _make_kernel(TH, Wp, Wt, Cin_p, Cout_p, CH):
    """One grid step == one (batch element, TH-row output tile)."""
    n_chunks = TH // CH

    def kernel(x_hbm, wdw_ref, wpw_ref, shift_ref, o_ref, xbuf, sem):
        # x_hbm    : (N, H_t+2, Wp, Cin_p) zero-padded NHWC input, in HBM
        # wdw_ref  : (3, 3, Cin_p)     depthwise weights (zero in padded chans)
        # wpw_ref  : (Cin_p, Cout_p)   pointwise weights * BN scale, bf16
        # shift_ref: (1, Cout_p)       folded (dw bias, pw bias, BN) shift
        # o_ref    : (TH, Wt, Cout_p)  output row tile
        # xbuf     : (2, TH+2, Wp, Cin_p) VMEM double buffer
        # sem      : DMA semaphores (2,)
        n = pl.program_id(0)
        h = pl.program_id(1)
        nh = pl.num_programs(1)
        slot = h % 2

        def window_copy(hh, s):
            row0 = pl.multiple_of(hh * TH, 8)
            return pltpu.make_async_copy(
                x_hbm.at[n, pl.ds(row0, TH + 2)], xbuf.at[s], sem.at[s])

        # Prime the pipeline at the start of every batch element's row sweep
        # (keeps all DMA state inside one `n`, so the batch axis can be
        # "parallel" / megacore-sharded).
        @pl.when(h == 0)
        def _():
            window_copy(h, slot).start()

        # Prefetch the next row window of the same batch element.
        @pl.when(h + 1 < nh)
        def _():
            window_copy(h + 1, 1 - slot).start()

        # Wait for the current window.
        window_copy(h, slot).wait()
        cur = xbuf.at[slot]

        # Hoist the 9 per-tap depthwise weight vectors out of the chunk loop.
        wtaps = [[wdw_ref[kh, kw, :] for kw in range(3)] for kh in range(3)]

        def chunk_body(c, carry):
            r0 = c * CH
            # ---- depthwise 3x3 (stride=1): VPU, f32 accumulation ----
            acc = None
            for kh in range(3):
                # one aligned slab load per kh; kw taps are static sublane
                # shifts of the loaded value (XLU) instead of misaligned loads
                slab = cur[pl.ds(r0 + kh, CH), :, :]          # (CH, Wp, Cin_p)
                for kw in range(3):
                    term = slab[:, kw:kw + Wt, :] * wtaps[kh][kw]
                    acc = term if acc is None else acc + term
            # ---- pointwise 1x1 == channel matmul: MXU (bf16 in, f32 acc) ----
            dw = acc.reshape(CH * Wt, Cin_p).astype(jnp.bfloat16)
            y = jnp.dot(dw, wpw_ref[...], preferred_element_type=jnp.float32)
            # ---- folded BatchNorm(eval) shift + ReLU: VPU ----
            y = jnp.maximum(y + shift_ref[...], 0.0)
            o_ref[pl.ds(r0, CH), :, :] = y.reshape(
                CH, Wt, Cout_p).astype(o_ref.dtype)
            return carry

        lax.fori_loop(0, n_chunks, chunk_body, None, unroll=n_chunks <= 8)

    return kernel


@functools.partial(jax.jit, static_argnames=("tile_h", "out_dtype"))
def separable_conv2d(x_nchw, w_dw, b_dw, w_pw, b_pw,
                     bn_gamma, bn_beta, bn_mean, bn_var,
                     bn_eps=1e-5, tile_h=None, out_dtype=jnp.float32):
    """Forward pass matching PyTorch SeparableConv2d (stride=1, eval-mode BN).

    x_nchw : (N, Cin, H, W)     float32
    w_dw   : (Cin, 1, 3, 3)     PyTorch depthwise weight layout
    b_dw   : (Cin,)
    w_pw   : (Cout, Cin, 1, 1)  PyTorch pointwise weight layout
    b_pw   : (Cout,)
    returns: (N, Cout, H, W)
    """
    N, Cin, H, W = x_nchw.shape
    Cout = w_pw.shape[0]

    Cin_p = _round_up(Cin, LANE)
    Cout_p = _round_up(Cout, LANE)
    Wt = _round_up(W, 8)          # output width tile (multiple of 8 sublanes)
    Wp = Wt + 2                   # +1 zero column halo on each side

    # ---- generation-aware VMEM budgets ----
    vmem_cap = _vmem_capacity_bytes()
    if vmem_cap >= (100 << 20):                 # v5e / v6e: 128 MiB per TC
        tile_budget, vmem_cap_limit = 48 << 20, 96 << 20
    else:                                       # v7x: 64 MiB per TC
        tile_budget, vmem_cap_limit = 20 << 20, 44 << 20

    if tile_h is None:
        TH = _choose_tile_h(H, Wp, Wt, Cin_p, Cout_p, tile_budget)
    else:
        TH = max(8, _round_up(int(tile_h), 8))
    CH = _choose_chunk_h(TH, Wt)
    H_t = _round_up(H, TH)
    nH = H_t // TH

    # ---- fold parameters (plain JAX, once per call) ----
    # y = ((dw(x)+b_dw) @ Wpw + b_pw)*scale + (beta - mean*scale)
    #   =  dw(x) @ (Wpw*scale) + [(b_dw@Wpw + b_pw)*scale + beta - mean*scale]
    scale = bn_gamma / jnp.sqrt(bn_var + bn_eps)                  # (Cout,)
    wpw = jnp.transpose(w_pw[:, :, 0, 0], (1, 0))                 # (Cin, Cout)
    wpw_folded = wpw * scale[None, :]
    shift = (b_dw @ wpw + b_pw) * scale + (bn_beta - bn_mean * scale)
    wdw = jnp.transpose(w_dw[:, 0, :, :], (1, 2, 0))              # (3, 3, Cin)

    wdw_p = jnp.zeros((3, 3, Cin_p), jnp.float32).at[:, :, :Cin].set(wdw)
    wpw_p = (jnp.zeros((Cin_p, Cout_p), jnp.float32)
             .at[:Cin, :Cout].set(wpw_folded)).astype(jnp.bfloat16)
    shift_p = jnp.zeros((1, Cout_p), jnp.float32).at[0, :Cout].set(shift)

    # ---- layout glue: NCHW -> NHWC, lane-dense channel pad, spatial pad ----
    # (single pass; the overlapping row windows are DMA'd directly from this
    #  array inside the kernel, no halo copy is materialized in HBM)
    x_nhwc = jnp.transpose(x_nchw, (0, 2, 3, 1))
    x_pad = jnp.pad(
        x_nhwc,
        ((0, 0), (1, 1 + (H_t - H)), (1, Wp - 1 - W), (0, Cin_p - Cin)))

    # ---- compiler hints ----
    need = _vmem_need(TH, CH, Wp, Wt, Cin_p, Cout_p)
    vmem_limit = int(min(vmem_cap_limit, max(need * 3 // 2, 32 << 20)))
    out_itemsize = jnp.dtype(out_dtype).itemsize
    cost = pl.CostEstimate(
        flops=2 * N * H * W * (9 * Cin + Cin * Cout),
        transcendentals=0,
        bytes_accessed=int(x_pad.size * 4
                           + N * H_t * Wt * Cout_p * out_itemsize
                           + wdw_p.size * 4 + wpw_p.size * 2 + shift_p.size * 4),
    )

    out_p = pl.pallas_call(
        _make_kernel(TH, Wp, Wt, Cin_p, Cout_p, CH),
        out_shape=jax.ShapeDtypeStruct((N, H_t, Wt, Cout_p), out_dtype),
        grid_spec=pltpu.PrefetchScalarGridSpec(
            num_scalar_prefetch=0,
            grid=(N, nH),
            in_specs=[
                pl.BlockSpec(memory_space=pl.ANY),        # x_pad stays in HBM
                pl.BlockSpec((3, 3, Cin_p), lambda n, h: (0, 0, 0)),
                pl.BlockSpec((Cin_p, Cout_p), lambda n, h: (0, 0)),
                pl.BlockSpec((1, Cout_p), lambda n, h: (0, 0)),
            ],
            out_specs=pl.BlockSpec((None, TH, Wt, Cout_p),
                                   lambda n, h: (n, h, 0, 0)),
            scratch_shapes=[
                pltpu.VMEM((2, TH + 2, Wp, Cin_p), jnp.float32),
                pltpu.SemaphoreType.DMA((2,)),
            ],
        ),
        compiler_params=pltpu.CompilerParams(
            dimension_semantics=("parallel", "arbitrary"),
            vmem_limit_bytes=vmem_limit),
        cost_estimate=cost,
    )(x_pad, wdw_p, wpw_p, shift_p)

    out = out_p[:, :H, :W, :Cout]                 # drop H/W/channel padding
    return jnp.transpose(out, (0, 3, 1, 2))       # NHWC -> NCHW


def _reference(x_nchw, w_dw, b_dw, w_pw, b_pw,
               bn_gamma, bn_beta, bn_mean, bn_var, bn_eps=1e-5):
    """Pure-JAX f32 reference with PyTorch (eval-mode BN) semantics."""
    N, Cin, H, W = x_nchw.shape
    xp = jnp.pad(x_nchw, ((0, 0), (0, 0), (1, 1), (1, 1)))
    dw = jnp.zeros((N, Cin, H, W), jnp.float32)
    for kh in range(3):
        for kw in range(3):
            dw = dw + xp[:, :, kh:kh + H, kw:kw + W] * \
                w_dw[:, 0, kh, kw][None, :, None, None]
    dw = dw + b_dw[None, :, None, None]
    pw = jnp.einsum('nchw,oc->nohw', dw, w_pw[:, :, 0, 0]) + \
        b_pw[None, :, None, None]
    scale = bn_gamma / jnp.sqrt(bn_var + bn_eps)
    shift = bn_beta - bn_mean * scale
    y = pw * scale[None, :, None, None] + shift[None, :, None, None]
    return jnp.maximum(y, 0.0)


if __name__ == "__main__":
    # Small shapes that still exercise every code path:
    #   N=2 (parallel batch axis), Cin=4 / Cout=8 (channel padding to 128),
    #   H=24 with tile_h=16 -> 2 overlapping row windows (manual DMA prefetch),
    #   W=28 -> Wt=32 with right padding, 2 row-chunks per tile.
    N, Cin, Cout, H, W = 2, 4, 8, 24, 28

    key = jax.random.PRNGKey(0)
    ks = jax.random.split(key, 9)
    x = jax.random.normal(ks[0], (N, Cin, H, W), jnp.float32)
    w_dw = jax.random.normal(ks[1], (Cin, 1, 3, 3), jnp.float32) * 0.2
    b_dw = jax.random.normal(ks[2], (Cin,), jnp.float32) * 0.1
    w_pw = jax.random.normal(ks[3], (Cout, Cin, 1, 1), jnp.float32) * 0.2
    b_pw = jax.random.normal(ks[4], (Cout,), jnp.float32) * 0.1
    bn_gamma = 1.0 + 0.1 * jax.random.normal(ks[5], (Cout,), jnp.float32)
    bn_beta = 0.1 * jax.random.normal(ks[6], (Cout,), jnp.float32)
    bn_mean = 0.1 * jax.random.normal(ks[7], (Cout,), jnp.float32)
    bn_var = jnp.abs(1.0 + 0.1 * jax.random.normal(ks[8], (Cout,), jnp.float32))

    out = separable_conv2d(x, w_dw, b_dw, w_pw, b_pw,
                           bn_gamma, bn_beta, bn_mean, bn_var, tile_h=16)
    out = jax.block_until_ready(out)

    ref = _reference(x, w_dw, b_dw, w_pw, b_pw,
                     bn_gamma, bn_beta, bn_mean, bn_var)
    assert out.shape == (N, Cout, H, W), out.shape
    # tolerance accounts for the bf16 feed of the pointwise MXU matmul
    assert jnp.allclose(out, ref, rtol=1e-2, atol=1e-2), \
        float(jnp.max(jnp.abs(out - ref)))

    print("KERNEL_OK")
</pallas_src>

<mosaic_0001>
module attributes {stable_mosaic.version = 11 : i64} {
  func.func @kernel(%arg0: i32, %arg1: i32, %arg2: memref<2x34x34x128xf32, #tpu.memory_space<any>>, %arg3: memref<3x3x128xf32, #tpu.memory_space<vmem>>, %arg4: memref<128x128xbf16, #tpu.memory_space<vmem>>, %arg5: memref<1x128xf32, #tpu.memory_space<vmem>>, %arg6: memref<1x16x32x128xf32, #tpu.memory_space<vmem>>, %arg7: memref<2x18x34x128xf32, #tpu.memory_space<vmem>>, %arg8: memref<2x!tpu.dma_semaphore, #tpu.memory_space<semaphore_mem>>) attributes {dimension_semantics = [#tpu.dimension_semantics<parallel>, #tpu.dimension_semantics<arbitrary>], iteration_bounds = array<i64: 2, 2>, scalar_prefetch = 0 : i64, scratch_operands = 2 : i64, tpu.core_type = #tpu.core_type<tc>, window_params = [{}, {pipeline_mode = #tpu.pipeline_mode<synchronous>, transform_indices = @transform_1, window_bounds = array<i64: 3, 3, 128>}, {pipeline_mode = #tpu.pipeline_mode<synchronous>, transform_indices = @transform_2, window_bounds = array<i64: 128, 128>}, {pipeline_mode = #tpu.pipeline_mode<synchronous>, transform_indices = @transform_3, window_bounds = array<i64: 1, 128>}, {transform_indices = @transform_4, window_bounds = array<i64: 1, 16, 32, 128>}]} {
    %c2_i32 = arith.constant 2 : i32
    %c0_i32 = arith.constant 0 : i32
    %0 = arith.cmpi eq, %c2_i32, %c0_i32 : i32
    %c1_i32 = arith.constant 1 : i32
    %1 = arith.select %0, %c1_i32, %c2_i32 : i32
    %2 = arith.remsi %arg1, %1 : i32
    %c0_i32_0 = arith.constant 0 : i32
    %3 = arith.cmpi ne, %2, %c0_i32_0 : i32
    %c0_i32_1 = arith.constant 0 : i32
    %4 = arith.cmpi slt, %2, %c0_i32_1 : i32
    %c0_i32_2 = arith.constant 0 : i32
    %5 = arith.cmpi slt, %1, %c0_i32_2 : i32
    %6 = arith.xori %4, %5 : i1
    %7 = arith.andi %6, %3 : i1
    %8 = arith.addi %2, %1 : i32
    %9 = arith.select %7, %8, %2 : i32
    %c0_i32_3 = arith.constant 0 : i32
    %10 = arith.cmpi eq, %arg1, %c0_i32_3 : i32
    %11 = arith.extui %10 : i1 to i32
    %c0_i32_4 = arith.constant 0 : i32
    %12 = arith.cmpi ne, %11, %c0_i32_4 : i32
    scf.if %12 {
      %c16_i32_94 = arith.constant 16 : i32
      %191 = arith.muli %arg1, %c16_i32_94 : i32
      %192 = tpu.assume_multiple %191, 8 : i32
      %c0_i32_95 = arith.constant 0 : i32
      %c0_i32_96 = arith.constant 0 : i32
      %193 = tpu.memref_slice %arg2[%arg0, %192, %c0_i32_95, %c0_i32_96] : memref<2x34x34x128xf32, #tpu.memory_space<any>> -> memref<1x18x34x128xf32, #tpu.memory_space<any>>
      %194 = tpu.memref_squeeze %193 : memref<1x18x34x128xf32, #tpu.memory_space<any>> -> memref<18x34x128xf32, #tpu.memory_space<any>>
      %c0_i32_97 = arith.constant 0 : i32
      %c0_i32_98 = arith.constant 0 : i32
      %c0_i32_99 = arith.constant 0 : i32
      %195 = tpu.memref_slice %arg7[%9, %c0_i32_97, %c0_i32_98, %c0_i32_99] : memref<2x18x34x128xf32, #tpu.memory_space<vmem>> -> memref<1x18x34x128xf32, #tpu.memory_space<vmem>>
      %196 = tpu.memref_squeeze %195 : memref<1x18x34x128xf32, #tpu.memory_space<vmem>> -> memref<18x34x128xf32, #tpu.memory_space<vmem>>
      %197 = tpu.memref_slice %arg8[%9] : memref<2x!tpu.dma_semaphore, #tpu.memory_space<semaphore_mem>> -> memref<1x!tpu.dma_semaphore, #tpu.memory_space<semaphore_mem>>
      %198 = tpu.memref_squeeze %197 : memref<1x!tpu.dma_semaphore, #tpu.memory_space<semaphore_mem>> -> memref<!tpu.dma_semaphore, #tpu.memory_space<semaphore_mem>>
      tpu.enqueue_dma source(%194 : memref<18x34x128xf32, #tpu.memory_space<any>>) target(%196 : memref<18x34x128xf32, #tpu.memory_space<vmem>>) target_semaphore(%198 : memref<!tpu.dma_semaphore, #tpu.memory_space<semaphore_mem>>)
    } else {
    }
    %c1_i32_5 = arith.constant 1 : i32
    %13 = arith.addi %arg1, %c1_i32_5 : i32
    %c2_i32_6 = arith.constant 2 : i32
    %14 = arith.cmpi slt, %13, %c2_i32_6 : i32
    %15 = arith.extui %14 : i1 to i32
    %c0_i32_7 = arith.constant 0 : i32
    %16 = arith.cmpi ne, %15, %c0_i32_7 : i32
    scf.if %16 {
      %c1_i32_94 = arith.constant 1 : i32
      %191 = arith.addi %arg1, %c1_i32_94 : i32
      %c1_i32_95 = arith.constant 1 : i32
      %192 = arith.subi %c1_i32_95, %9 : i32
      %c16_i32_96 = arith.constant 16 : i32
      %193 = arith.muli %191, %c16_i32_96 : i32
      %194 = tpu.assume_multiple %193, 8 : i32
      %c0_i32_97 = arith.constant 0 : i32
      %c0_i32_98 = arith.constant 0 : i32
      %195 = tpu.memref_slice %arg2[%arg0, %194, %c0_i32_97, %c0_i32_98] : memref<2x34x34x128xf32, #tpu.memory_space<any>> -> memref<1x18x34x128xf32, #tpu.memory_space<any>>
      %196 = tpu.memref_squeeze %195 : memref<1x18x34x128xf32, #tpu.memory_space<any>> -> memref<18x34x128xf32, #tpu.memory_space<any>>
      %c0_i32_99 = arith.constant 0 : i32
      %c0_i32_100 = arith.constant 0 : i32
      %c0_i32_101 = arith.constant 0 : i32
      %197 = tpu.memref_slice %arg7[%192, %c0_i32_99, %c0_i32_100, %c0_i32_101] : memref<2x18x34x128xf32, #tpu.memory_space<vmem>> -> memref<1x18x34x128xf32, #tpu.memory_space<vmem>>
      %198 = tpu.memref_squeeze %197 : memref<1x18x34x128xf32, #tpu.memory_space<vmem>> -> memref<18x34x128xf32, #tpu.memory_space<vmem>>
      %199 = tpu.memref_slice %arg8[%192] : memref<2x!tpu.dma_semaphore, #tpu.memory_space<semaphore_mem>> -> memref<1x!tpu.dma_semaphore, #tpu.memory_space<semaphore_mem>>
      %200 = tpu.memref_squeeze %199 : memref<1x!tpu.dma_semaphore, #tpu.memory_space<semaphore_mem>> -> memref<!tpu.dma_semaphore, #tpu.memory_space<semaphore_mem>>
      tpu.enqueue_dma source(%196 : memref<18x34x128xf32, #tpu.memory_space<any>>) target(%198 : memref<18x34x128xf32, #tpu.memory_space<vmem>>) target_semaphore(%200 : memref<!tpu.dma_semaphore, #tpu.memory_space<semaphore_mem>>)
    } else {
    }
    %c16_i32 = arith.constant 16 : i32
    %17 = arith.muli %arg1, %c16_i32 : i32
    %18 = tpu.assume_multiple %17, 8 : i32
    %c0_i32_8 = arith.constant 0 : i32
    %c0_i32_9 = arith.constant 0 : i32
    %19 = tpu.memref_slice %arg2[%arg0, %18, %c0_i32_8, %c0_i32_9] : memref<2x34x34x128xf32, #tpu.memory_space<any>> -> memref<1x18x34x128xf32, #tpu.memory_space<any>>
    %20 = tpu.memref_squeeze %19 : memref<1x18x34x128xf32, #tpu.memory_space<any>> -> memref<18x34x128xf32, #tpu.memory_space<any>>
    %c0_i32_10 = arith.constant 0 : i32
    %c0_i32_11 = arith.constant 0 : i32
    %c0_i32_12 = arith.constant 0 : i32
    %21 = tpu.memref_slice %arg7[%9, %c0_i32_10, %c0_i32_11, %c0_i32_12] : memref<2x18x34x128xf32, #tpu.memory_space<vmem>> -> memref<1x18x34x128xf32, #tpu.memory_space<vmem>>
    %22 = tpu.memref_squeeze %21 : memref<1x18x34x128xf32, #tpu.memory_space<vmem>> -> memref<18x34x128xf32, #tpu.memory_space<vmem>>
    %23 = tpu.memref_slice %arg8[%9] : memref<2x!tpu.dma_semaphore, #tpu.memory_space<semaphore_mem>> -> memref<1x!tpu.dma_semaphore, #tpu.memory_space<semaphore_mem>>
    %24 = tpu.memref_squeeze %23 : memref<1x!tpu.dma_semaphore, #tpu.memory_space<semaphore_mem>> -> memref<!tpu.dma_semaphore, #tpu.memory_space<semaphore_mem>>
    tpu.wait_dma2 semaphore(%24 : memref<!tpu.dma_semaphore, #tpu.memory_space<semaphore_mem>>) src(%20 : memref<18x34x128xf32, #tpu.memory_space<any>>) dst(%22 : memref<18x34x128xf32, #tpu.memory_space<vmem>>)
    %c0 = arith.constant 0 : index
    %c0_13 = arith.constant 0 : index
    %c0_14 = arith.constant 0 : index
    %25 = vector.load %arg3[%c0, %c0_13, %c0_14] : memref<3x3x128xf32, #tpu.memory_space<vmem>>, vector<1x1x128xf32>
    %26 = vector.shape_cast %25 : vector<1x1x128xf32> to vector<128xf32>
    %c0_15 = arith.constant 0 : index
    %c1 = arith.constant 1 : index
    %c0_16 = arith.constant 0 : index
    %27 = vector.load %arg3[%c0_15, %c1, %c0_16] : memref<3x3x128xf32, #tpu.memory_space<vmem>>, vector<1x1x128xf32>
    %28 = vector.shape_cast %27 : vector<1x1x128xf32> to vector<128xf32>
    %c0_17 = arith.constant 0 : index
    %c2 = arith.constant 2 : index
    %c0_18 = arith.constant 0 : index
    %29 = vector.load %arg3[%c0_17, %c2, %c0_18] : memref<3x3x128xf32, #tpu.memory_space<vmem>>, vector<1x1x128xf32>
    %30 = vector.shape_cast %29 : vector<1x1x128xf32> to vector<128xf32>
    %c1_19 = arith.constant 1 : index
    %c0_20 = arith.constant 0 : index
    %c0_21 = arith.constant 0 : index
    %31 = vector.load %arg3[%c1_19, %c0_20, %c0_21] : memref<3x3x128xf32, #tpu.memory_space<vmem>>, vector<1x1x128xf32>
    %32 = vector.shape_cast %31 : vector<1x1x128xf32> to vector<128xf32>
    %c1_22 = arith.constant 1 : index
    %c1_23 = arith.constant 1 : index
    %c0_24 = arith.constant 0 : index
    %33 = vector.load %arg3[%c1_22, %c1_23, %c0_24] : memref<3x3x128xf32, #tpu.memory_space<vmem>>, vector<1x1x128xf32>
    %34 = vector.shape_cast %33 : vector<1x1x128xf32> to vector<128xf32>
    %c1_25 = arith.constant 1 : index
    %c2_26 = arith.constant 2 : index
    %c0_27 = arith.constant 0 : index
    %35 = vector.load %arg3[%c1_25, %c2_26, %c0_27] : memref<3x3x128xf32, #tpu.memory_space<vmem>>, vector<1x1x128xf32>
    %36 = vector.shape_cast %35 : vector<1x1x128xf32> to vector<128xf32>
    %c2_28 = arith.constant 2 : index
    %c0_29 = arith.constant 0 : index
    %c0_30 = arith.constant 0 : index
    %37 = vector.load %arg3[%c2_28, %c0_29, %c0_30] : memref<3x3x128xf32, #tpu.memory_space<vmem>>, vector<1x1x128xf32>
    %38 = vector.shape_cast %37 : vector<1x1x128xf32> to vector<128xf32>
    %c2_31 = arith.constant 2 : index
    %c1_32 = arith.constant 1 : index
    %c0_33 = arith.constant 0 : index
    %39 = vector.load %arg3[%c2_31, %c1_32, %c0_33] : memref<3x3x128xf32, #tpu.memory_space<vmem>>, vector<1x1x128xf32>
    %40 = vector.shape_cast %39 : vector<1x1x128xf32> to vector<128xf32>
    %c2_34 = arith.constant 2 : index
    %c2_35 = arith.constant 2 : index
    %c0_36 = arith.constant 0 : index
    %41 = vector.load %arg3[%c2_34, %c2_35, %c0_36] : memref<3x3x128xf32, #tpu.memory_space<vmem>>, vector<1x1x128xf32>
    %42 = vector.shape_cast %41 : vector<1x1x128xf32> to vector<128xf32>
    %c0_i32_37 = arith.constant 0 : i32
    %c8_i32 = arith.constant 8 : i32
    %43 = arith.muli %c0_i32_37, %c8_i32 : i32
    %c0_i32_38 = arith.constant 0 : i32
    %44 = arith.addi %43, %c0_i32_38 : i32
    %c0_i32_39 = arith.constant 0 : i32
    %c0_i32_40 = arith.constant 0 : i32
    %c0_i32_41 = arith.constant 0 : i32
    %45 = tpu.memref_slice %arg7[%9, %c0_i32_39, %c0_i32_40, %c0_i32_41] : memref<2x18x34x128xf32, #tpu.memory_space<vmem>> -> memref<1x18x34x128xf32, #tpu.memory_space<vmem>>
    %46 = tpu.memref_squeeze %45 : memref<1x18x34x128xf32, #tpu.memory_space<vmem>> -> memref<18x34x128xf32, #tpu.memory_space<vmem>>
    %47 = arith.index_cast %44 : i32 to index
    %c0_42 = arith.constant 0 : index
    %c0_43 = arith.constant 0 : index
    %48 = vector.load %46[%47, %c0_42, %c0_43] : memref<18x34x128xf32, #tpu.memory_space<vmem>>, vector<8x34x128xf32>
    %49 = vector.extract_strided_slice %48 {offsets = [0, 0, 0], sizes = [8, 32, 128], strides = [1, 1, 1]} : vector<8x34x128xf32> to vector<8x32x128xf32>
    %50 = vector.shape_cast %26 : vector<128xf32> to vector<1x1x128xf32>
    %51 = vector.broadcast %50 : vector<1x1x128xf32> to vector<8x32x128xf32>
    %52 = arith.mulf %49, %51 : vector<8x32x128xf32>
    %53 = vector.extract_strided_slice %48 {offsets = [0, 1, 0], sizes = [8, 32, 128], strides = [1, 1, 1]} : vector<8x34x128xf32> to vector<8x32x128xf32>
    %54 = vector.shape_cast %28 : vector<128xf32> to vector<1x1x128xf32>
    %55 = vector.broadcast %54 : vector<1x1x128xf32> to vector<8x32x128xf32>
    %56 = arith.mulf %53, %55 : vector<8x32x128xf32>
    %57 = arith.addf %52, %56 : vector<8x32x128xf32>
    %58 = vector.extract_strided_slice %48 {offsets = [0, 2, 0], sizes = [8, 32, 128], strides = [1, 1, 1]} : vector<8x34x128xf32> to vector<8x32x128xf32>
    %59 = vector.shape_cast %30 : vector<128xf32> to vector<1x1x128xf32>
    %60 = vector.broadcast %59 : vector<1x1x128xf32> to vector<8x32x128xf32>
    %61 = arith.mulf %58, %60 : vector<8x32x128xf32>
    %62 = arith.addf %57, %61 : vector<8x32x128xf32>
    %c1_i32_44 = arith.constant 1 : i32
    %63 = arith.addi %43, %c1_i32_44 : i32
    %c0_i32_45 = arith.constant 0 : i32
    %c0_i32_46 = arith.constant 0 : i32
    %c0_i32_47 = arith.constant 0 : i32
    %64 = tpu.memref_slice %arg7[%9, %c0_i32_45, %c0_i32_46, %c0_i32_47] : memref<2x18x34x128xf32, #tpu.memory_space<vmem>> -> memref<1x18x34x128xf32, #tpu.memory_space<vmem>>
    %65 = tpu.memref_squeeze %64 : memref<1x18x34x128xf32, #tpu.memory_space<vmem>> -> memref<18x34x128xf32, #tpu.memory_space<vmem>>
    %66 = arith.index_cast %63 : i32 to index
    %c0_48 = arith.constant 0 : index
    %c0_49 = arith.constant 0 : index
    %67 = vector.load %65[%66, %c0_48, %c0_49] : memref<18x34x128xf32, #tpu.memory_space<vmem>>, vector<8x34x128xf32>
    %68 = vector.extract_strided_slice %67 {offsets = [0, 0, 0], sizes = [8, 32, 128], strides = [1, 1, 1]} : vector<8x34x128xf32> to vector<8x32x128xf32>
    %69 = vector.shape_cast %32 : vector<128xf32> to vector<1x1x128xf32>
    %70 = vector.broadcast %69 : vector<1x1x128xf32> to vector<8x32x128xf32>
    %71 = arith.mulf %68, %70 : vector<8x32x128xf32>
    %72 = arith.addf %62, %71 : vector<8x32x128xf32>
    %73 = vector.extract_strided_slice %67 {offsets = [0, 1, 0], sizes = [8, 32, 128], strides = [1, 1, 1]} : vector<8x34x128xf32> to vector<8x32x128xf32>
    %74 = vector.shape_cast %34 : vector<128xf32> to vector<1x1x128xf32>
    %75 = vector.broadcast %74 : vector<1x1x128xf32> to vector<8x32x128xf32>
    %76 = arith.mulf %73, %75 : vector<8x32x128xf32>
    %77 = arith.addf %72, %76 : vector<8x32x128xf32>
    %78 = vector.extract_strided_slice %67 {offsets = [0, 2, 0], sizes = [8, 32, 128], strides = [1, 1, 1]} : vector<8x34x128xf32> to vector<8x32x128xf32>
    %79 = vector.shape_cast %36 : vector<128xf32> to vector<1x1x128xf32>
    %80 = vector.broadcast %79 : vector<1x1x128xf32> to vector<8x32x128xf32>
    %81 = arith.mulf %78, %80 : vector<8x32x128xf32>
    %82 = arith.addf %77, %81 : vector<8x32x128xf32>
    %c2_i32_50 = arith.constant 2 : i32
    %83 = arith.addi %43, %c2_i32_50 : i32
    %c0_i32_51 = arith.constant 0 : i32
    %c0_i32_52 = arith.constant 0 : i32
    %c0_i32_53 = arith.constant 0 : i32
    %84 = tpu.memref_slice %arg7[%9, %c0_i32_51, %c0_i32_52, %c0_i32_53] : memref<2x18x34x128xf32, #tpu.memory_space<vmem>> -> memref<1x18x34x128xf32, #tpu.memory_space<vmem>>
    %85 = tpu.memref_squeeze %84 : memref<1x18x34x128xf32, #tpu.memory_space<vmem>> -> memref<18x34x128xf32, #tpu.memory_space<vmem>>
    %86 = arith.index_cast %83 : i32 to index
    %c0_54 = arith.constant 0 : index
    %c0_55 = arith.constant 0 : index
    %87 = vector.load %85[%86, %c0_54, %c0_55] : memref<18x34x128xf32, #tpu.memory_space<vmem>>, vector<8x34x128xf32>
    %88 = vector.extract_strided_slice %87 {offsets = [0, 0, 0], sizes = [8, 32, 128], strides = [1, 1, 1]} : vector<8x34x128xf32> to vector<8x32x128xf32>
    %89 = vector.shape_cast %38 : vector<128xf32> to vector<1x1x128xf32>
    %90 = vector.broadcast %89 : vector<1x1x128xf32> to vector<8x32x128xf32>
    %91 = arith.mulf %88, %90 : vector<8x32x128xf32>
    %92 = arith.addf %82, %91 : vector<8x32x128xf32>
    %93 = vector.extract_strided_slice %87 {offsets = [0, 1, 0], sizes = [8, 32, 128], strides = [1, 1, 1]} : vector<8x34x128xf32> to vector<8x32x128xf32>
    %94 = vector.shape_cast %40 : vector<128xf32> to vector<1x1x128xf32>
    %95 = vector.broadcast %94 : vector<1x1x128xf32> to vector<8x32x128xf32>
    %96 = arith.mulf %93, %95 : vector<8x32x128xf32>
    %97 = arith.addf %92, %96 : vector<8x32x128xf32>
    %98 = vector.extract_strided_slice %87 {offsets = [0, 2, 0], sizes = [8, 32, 128], strides = [1, 1, 1]} : vector<8x34x128xf32> to vector<8x32x128xf32>
    %99 = vector.shape_cast %42 : vector<128xf32> to vector<1x1x128xf32>
    %100 = vector.broadcast %99 : vector<1x1x128xf32> to vector<8x32x128xf32>
    %101 = arith.mulf %98, %100 : vector<8x32x128xf32>
    %102 = arith.addf %97, %101 : vector<8x32x128xf32>
    %103 = vector.shape_cast %102 : vector<8x32x128xf32> to vector<256x128xf32>
    %104 = arith.truncf %103 : vector<256x128xf32> to vector<256x128xbf16>
    %c0_56 = arith.constant 0 : index
    %c0_57 = arith.constant 0 : index
    %105 = vector.load %arg4[%c0_56, %c0_57] : memref<128x128xbf16, #tpu.memory_space<vmem>>, vector<128x128xbf16>
    %cst = arith.constant dense<0.000000e+00> : vector<256x128xf32>
    %106 = tpu.matmul %104, %105, %cst {dimension_numbers = #tpu.dot_dimension_numbers<[1], [0], [0], [1], [0, 0, 1, 1], [], []>} : vector<256x128xbf16>, vector<128x128xbf16>, vector<256x128xf32> -> vector<256x128xf32>
    %c0_58 = arith.constant 0 : index
    %c0_59 = arith.constant 0 : index
    %107 = vector.load %arg5[%c0_58, %c0_59] : memref<1x128xf32, #tpu.memory_space<vmem>>, vector<1x128xf32>
    %108 = vector.broadcast %107 : vector<1x128xf32> to vector<256x128xf32>
    %109 = arith.addf %106, %108 : vector<256x128xf32>
    %cst_60 = arith.constant 0.000000e+00 : f32
    %110 = vector.broadcast %cst_60 : f32 to vector<256x128xf32>
    %111 = arith.maximumf %109, %110 : vector<256x128xf32>
    %112 = vector.shape_cast %111 : vector<256x128xf32> to vector<8x32x128xf32>
    %c0_61 = arith.constant 0 : index
    %113 = arith.index_cast %43 : i32 to index
    %c0_62 = arith.constant 0 : index
    %c0_63 = arith.constant 0 : index
    %114 = vector.load %arg6[%c0_61, %113, %c0_62, %c0_63] : memref<1x16x32x128xf32, #tpu.memory_space<vmem>>, vector<1x8x32x128xf32>
    %115 = vector.shape_cast %114 : vector<1x8x32x128xf32> to vector<8x32x128xf32>
    %116 = vector.shape_cast %112 : vector<8x32x128xf32> to vector<1x8x32x128xf32>
    tpu.vector_store %arg6[%c0_61, %113, %c0_62, %c0_63], %116 {strides = array<i32>} : memref<1x16x32x128xf32, #tpu.memory_space<vmem>>, vector<1x8x32x128xf32>,
    %c1_i32_64 = arith.constant 1 : i32
    %c8_i32_65 = arith.constant 8 : i32
    %117 = arith.muli %c1_i32_64, %c8_i32_65 : i32
    %c0_i32_66 = arith.constant 0 : i32
    %118 = arith.addi %117, %c0_i32_66 : i32
    %c0_i32_67 = arith.constant 0 : i32
    %c0_i32_68 = arith.constant 0 : i32
    %c0_i32_69 = arith.constant 0 : i32
    %119 = tpu.memref_slice %arg7[%9, %c0_i32_67, %c0_i32_68, %c0_i32_69] : memref<2x18x34x128xf32, #tpu.memory_space<vmem>> -> memref<1x18x34x128xf32, #tpu.memory_space<vmem>>
    %120 = tpu.memref_squeeze %119 : memref<1x18x34x128xf32, #tpu.memory_space<vmem>> -> memref<18x34x128xf32, #tpu.memory_space<vmem>>
    %121 = arith.index_cast %118 : i32 to index
    %c0_70 = arith.constant 0 : index
    %c0_71 = arith.constant 0 : index
    %122 = vector.load %120[%121, %c0_70, %c0_71] : memref<18x34x128xf32, #tpu.memory_space<vmem>>, vector<8x34x128xf32>
    %123 = vector.extract_strided_slice %122 {offsets = [0, 0, 0], sizes = [8, 32, 128], strides = [1, 1, 1]} : vector<8x34x128xf32> to vector<8x32x128xf32>
    %124 = vector.shape_cast %26 : vector<128xf32> to vector<1x1x128xf32>
    %125 = vector.broadcast %124 : vector<1x1x128xf32> to vector<8x32x128xf32>
    %126 = arith.mulf %123, %125 : vector<8x32x128xf32>
    %127 = vector.extract_strided_slice %122 {offsets = [0, 1, 0], sizes = [8, 32, 128], strides = [1, 1, 1]} : vector<8x34x128xf32> to vector<8x32x128xf32>
    %128 = vector.shape_cast %28 : vector<128xf32> to vector<1x1x128xf32>
    %129 = vector.broadcast %128 : vector<1x1x128xf32> to vector<8x32x128xf32>
    %130 = arith.mulf %127, %129 : vector<8x32x128xf32>
    %131 = arith.addf %126, %130 : vector<8x32x128xf32>
    %132 = vector.extract_strided_slice %122 {offsets = [0, 2, 0], sizes = [8, 32, 128], strides = [1, 1, 1]} : vector<8x34x128xf32> to vector<8x32x128xf32>
    %133 = vector.shape_cast %30 : vector<128xf32> to vector<1x1x128xf32>
    %134 = vector.broadcast %133 : vector<1x1x128xf32> to vector<8x32x128xf32>
    %135 = arith.mulf %132, %134 : vector<8x32x128xf32>
    %136 = arith.addf %131, %135 : vector<8x32x128xf32>
    %c1_i32_72 = arith.constant 1 : i32
    %137 = arith.addi %117, %c1_i32_72 : i32
    %c0_i32_73 = arith.constant 0 : i32
    %c0_i32_74 = arith.constant 0 : i32
    %c0_i32_75 = arith.constant 0 : i32
    %138 = tpu.memref_slice %arg7[%9, %c0_i32_73, %c0_i32_74, %c0_i32_75] : memref<2x18x34x128xf32, #tpu.memory_space<vmem>> -> memref<1x18x34x128xf32, #tpu.memory_space<vmem>>
    %139 = tpu.memref_squeeze %138 : memref<1x18x34x128xf32, #tpu.memory_space<vmem>> -> memref<18x34x128xf32, #tpu.memory_space<vmem>>
    %140 = arith.index_cast %137 : i32 to index
    %c0_76 = arith.constant 0 : index
    %c0_77 = arith.constant 0 : index
    %141 = vector.load %139[%140, %c0_76, %c0_77] : memref<18x34x128xf32, #tpu.memory_space<vmem>>, vector<8x34x128xf32>
    %142 = vector.extract_strided_slice %141 {offsets = [0, 0, 0], sizes = [8, 32, 128], strides = [1, 1, 1]} : vector<8x34x128xf32> to vector<8x32x128xf32>
    %143 = vector.shape_cast %32 : vector<128xf32> to vector<1x1x128xf32>
    %144 = vector.broadcast %143 : vector<1x1x128xf32> to vector<8x32x128xf32>
    %145 = arith.mulf %142, %144 : vector<8x32x128xf32>
    %146 = arith.addf %136, %145 : vector<8x32x128xf32>
    %147 = vector.extract_strided_slice %141 {offsets = [0, 1, 0], sizes = [8, 32, 128], strides = [1, 1, 1]} : vector<8x34x128xf32> to vector<8x32x128xf32>
    %148 = vector.shape_cast %34 : vector<128xf32> to vector<1x1x128xf32>
    %149 = vector.broadcast %148 : vector<1x1x128xf32> to vector<8x32x128xf32>
    %150 = arith.mulf %147, %149 : vector<8x32x128xf32>
    %151 = arith.addf %146, %150 : vector<8x32x128xf32>
    %152 = vector.extract_strided_slice %141 {offsets = [0, 2, 0], sizes = [8, 32, 128], strides = [1, 1, 1]} : vector<8x34x128xf32> to vector<8x32x128xf32>
    %153 = vector.shape_cast %36 : vector<128xf32> to vector<1x1x128xf32>
    %154 = vector.broadcast %153 : vector<1x1x128xf32> to vector<8x32x128xf32>
    %155 = arith.mulf %152, %154 : vector<8x32x128xf32>
    %156 = arith.addf %151, %155 : vector<8x32x128xf32>
    %c2_i32_78 = arith.constant 2 : i32
    %157 = arith.addi %117, %c2_i32_78 : i32
    %c0_i32_79 = arith.constant 0 : i32
    %c0_i32_80 = arith.constant 0 : i32
    %c0_i32_81 = arith.constant 0 : i32
    %158 = tpu.memref_slice %arg7[%9, %c0_i32_79, %c0_i32_80, %c0_i32_81] : memref<2x18x34x128xf32, #tpu.memory_space<vmem>> -> memref<1x18x34x128xf32, #tpu.memory_space<vmem>>
    %159 = tpu.memref_squeeze %158 : memref<1x18x34x128xf32, #tpu.memory_space<vmem>> -> memref<18x34x128xf32, #tpu.memory_space<vmem>>
    %160 = arith.index_cast %157 : i32 to index
    %c0_82 = arith.constant 0 : index
    %c0_83 = arith.constant 0 : index
    %161 = vector.load %159[%160, %c0_82, %c0_83] : memref<18x34x128xf32, #tpu.memory_space<vmem>>, vector<8x34x128xf32>
    %162 = vector.extract_strided_slice %161 {offsets = [0, 0, 0], sizes = [8, 32, 128], strides = [1, 1, 1]} : vector<8x34x128xf32> to vector<8x32x128xf32>
    %163 = vector.shape_cast %38 : vector<128xf32> to vector<1x1x128xf32>
    %164 = vector.broadcast %163 : vector<1x1x128xf32> to vector<8x32x128xf32>
    %165 = arith.mulf %162, %164 : vector<8x32x128xf32>
    %166 = arith.addf %156, %165 : vector<8x32x128xf32>
    %167 = vector.extract_strided_slice %161 {offsets = [0, 1, 0], sizes = [8, 32, 128], strides = [1, 1, 1]} : vector<8x34x128xf32> to vector<8x32x128xf32>
    %168 = vector.shape_cast %40 : vector<128xf32> to vector<1x1x128xf32>
    %169 = vector.broadcast %168 : vector<1x1x128xf32> to vector<8x32x128xf32>
    %170 = arith.mulf %167, %169 : vector<8x32x128xf32>
    %171 = arith.addf %166, %170 : vector<8x32x128xf32>
    %172 = vector.extract_strided_slice %161 {offsets = [0, 2, 0], sizes = [8, 32, 128], strides = [1, 1, 1]} : vector<8x34x128xf32> to vector<8x32x128xf32>
    %173 = vector.shape_cast %42 : vector<128xf32> to vector<1x1x128xf32>
    %174 = vector.broadcast %173 : vector<1x1x128xf32> to vector<8x32x128xf32>
    %175 = arith.mulf %172, %174 : vector<8x32x128xf32>
    %176 = arith.addf %171, %175 : vector<8x32x128xf32>
    %177 = vector.shape_cast %176 : vector<8x32x128xf32> to vector<256x128xf32>
    %178 = arith.truncf %177 : vector<256x128xf32> to vector<256x128xbf16>
    %c0_84 = arith.constant 0 : index
    %c0_85 = arith.constant 0 : index
    %179 = vector.load %arg4[%c0_84, %c0_85] : memref<128x128xbf16, #tpu.memory_space<vmem>>, vector<128x128xbf16>
    %cst_86 = arith.constant dense<0.000000e+00> : vector<256x128xf32>
    %180 = tpu.matmul %178, %179, %cst_86 {dimension_numbers = #tpu.dot_dimension_numbers<[1], [0], [0], [1], [0, 0, 1, 1], [], []>} : vector<256x128xbf16>, vector<128x128xbf16>, vector<256x128xf32> -> vector<256x128xf32>
    %c0_87 = arith.constant 0 : index
    %c0_88 = arith.constant 0 : index
    %181 = vector.load %arg5[%c0_87, %c0_88] : memref<1x128xf32, #tpu.memory_space<vmem>>, vector<1x128xf32>
    %182 = vector.broadcast %181 : vector<1x128xf32> to vector<256x128xf32>
    %183 = arith.addf %180, %182 : vector<256x128xf32>
    %cst_89 = arith.constant 0.000000e+00 : f32
    %184 = vector.broadcast %cst_89 : f32 to vector<256x128xf32>
    %185 = arith.maximumf %183, %184 : vector<256x128xf32>
    %186 = vector.shape_cast %185 : vector<256x128xf32> to vector<8x32x128xf32>
    %c0_90 = arith.constant 0 : index
    %187 = arith.index_cast %117 : i32 to index
    %c0_91 = arith.constant 0 : index
    %c0_92 = arith.constant 0 : index
    %188 = vector.load %arg6[%c0_90, %187, %c0_91, %c0_92] : memref<1x16x32x128xf32, #tpu.memory_space<vmem>>, vector<1x8x32x128xf32>
    %189 = vector.shape_cast %188 : vector<1x8x32x128xf32> to vector<8x32x128xf32>
    %190 = vector.shape_cast %186 : vector<8x32x128xf32> to vector<1x8x32x128xf32>
    tpu.vector_store %arg6[%c0_90, %187, %c0_91, %c0_92], %190 {strides = array<i32>} : memref<1x16x32x128xf32, #tpu.memory_space<vmem>>, vector<1x8x32x128xf32>,
    %c2_i32_93 = arith.constant 2 : i32
    return
  }
  func.func @transform_1(%arg0: i32, %arg1: i32) -> (i32, i32, i32) {
    %c0_i32 = arith.constant 0 : i32
    %c0_i32_0 = arith.constant 0 : i32
    %c0_i32_1 = arith.constant 0 : i32
    %c0_i32_2 = arith.constant 0 : i32
    return %c0_i32, %c0_i32_0, %c0_i32_1 : i32, i32, i32
  }
  func.func @transform_2(%arg0: i32, %arg1: i32) -> (i32, i32) {
    %c0_i32 = arith.constant 0 : i32
    %c0_i32_0 = arith.constant 0 : i32
    %c0_i32_1 = arith.constant 0 : i32
    return %c0_i32, %c0_i32_0 : i32, i32
  }
  func.func @transform_3(%arg0: i32, %arg1: i32) -> (i32, i32) {
    %c0_i32 = arith.constant 0 : i32
    %c0_i32_0 = arith.constant 0 : i32
    %c0_i32_1 = arith.constant 0 : i32
    return %c0_i32, %c0_i32_0 : i32, i32
  }
  func.func @transform_4(%arg0: i32, %arg1: i32) -> (i32, i32, i32, i32) {
    %c0_i32 = arith.constant 0 : i32
    %c0_i32_0 = arith.constant 0 : i32
    %c0_i32_1 = arith.constant 0 : i32
    return %arg0, %arg1, %c0_i32, %c0_i32_0 : i32, i32, i32, i32
  }
}

</mosaic_0001>

<llo_original>
// kernel: separable_conv2d.1
$region0: #{separable_conv2d.1}
  #allocation0 [shape = 'u32[]', space=smem, size = 0x4, offset = 0x4, fixed_abs, tag = 'smem constant byte address 0x4 - core index']
  #allocation1 [shape = 'u32[144,128]{1,0:T(1,128)}', space=vmem, size = 0x12000, scoped, tag = 'internal scratch']
  #allocation2 [shape = 'f32[2,18,34,128]{3,2,1,0:T(8,128)}', space=vmem, size = 0xb4000, scoped, tag = 'scratch operand']
  #allocation3 [shape = 's32[2]{0}', space=sflag, size = 0x8, scoped, tag = 'scratch operand']
  #allocation4 [shape = 's32[]', space=sflag, size = 0x4, offset = 0, fixed_abs, tag = 'sflag constant byte address 0x0 - dummy sync flag']
  #allocation5 [shape = 's32[]', space=sflag, size = 0x4, offset = 0, fixed_abs, tag = 'sflag constant byte address 0x0 - dummy sync flag']
  %s0 = inlined_call_operand.vmem [shape: f32[2,34,34,128], index: 0, kind: input, shape index: {}]
  %s1 = inlined_call_operand.vmem [shape: f32[3,3,128], index: 1, kind: input, shape index: {}]
  %s2 = inlined_call_operand.vmem [shape: bf16[128,128], index: 2, kind: input, shape index: {}]
  %s3 = inlined_call_operand.vmem [shape: f32[1,128], index: 3, kind: input, shape index: {}]
  %s4 = inlined_call_operand.vmem [shape: f32[2,32,32,128], index: 4, kind: output, shape index: {}]
  %s5 = sld [smem:[#allocation0]]
  $region127: #{separable_conv2d.1} parent=0
    _
  %s7 = ssub.s32 1, %s5
  %s8 = scalar_select 0, %s7, %s5
  loop: start=0, step=1, limit=6
  $region2: #{separable_conv2d.1} parent=0 // loop_pre_header
    _
  $region3: #{separable_conv2d.1} parent=0 // loop_header
    %s10 = sphi 0, %s14
    %p11 = scmp.ge.s32.totalorder %s10, 6
    %s17 = sphi 0, %s29
    %s18 = sphi 0, %s25
    %s19 = sphi 0, %s17
    %s20 = sphi 0, %s18
    %s21 = sphi 0, %s19
    %s22 = sphi 0, %s20
    %s30 = sphi 0, %s30
    %s32 = sphi 0, %s30
    %s33 = sphi 0, %s32
    %s47 = sphi 0, %s33
    %s51 = sphi 0, %s51
    %s53 = sphi 0, %s51
    %s54 = sphi 0, %s53
    %s68 = sphi 0, %s54
    %s72 = sphi 0, %s72
    %s74 = sphi 0, %s72
    %s75 = sphi 0, %s74
    %s89 = sphi 0, %s75
    %s97 = sphi 0, %s99
    %s100 = sphi 0, %s97
    %s101 = sphi 0, %s100
    %s117 = sphi 0, %s101
  $region4: #{separable_conv2d.1} parent=0 // loop_header_branch
    %13 = sbr.rel (%p11) target = $region8
  $region5: #{separable_conv2d.1} parent=0 // loop_body
    %s15 = ssub.s32 %s10, 1
    %s16 = ssub.s32 %s10, 2
    %s23 = sadd.s32 1, %s18
    %p24 = scmp.ge.s32.totalorder %s23, 2
    %s25 = scalar_select %p24, 0, %s23
    %s26 = sadd.s32 1, %s17
    %s27 = scalar_select %p24, %s26, %s17
    %p28 = scmp.ge.s32.totalorder %s27, 2
    %s29 = scalar_select %p28, 0, %s27
    %s31 = sadd.s32 %s30, 1
    %p34 = scmp.eq.s32.totalorder %s10, 3
    %p35 = scmp.ne.s32.totalorder %s30, %s32
    %p36 = scmp.eq.s32.totalorder %s10, 0
    %p37 = por %p35, %p36
    %p38 = scmp.ne.s32.totalorder %s30, %s32
    %p39 = scmp.eq.s32.totalorder %s15, 3
    %p40 = por %p38, %p39
    %p41 = scmp.ne.s32.totalorder %s32, %s33
    %p42 = scmp.eq.s32.totalorder %s15, 0
    %p43 = por %p41, %p42
    %p44 = scmp.ne.s32.totalorder %s32, %s33
    %p45 = scmp.eq.s32.totalorder %s16, 3
    %p46 = por %p44, %p45
    %p48 = scmp.ne.s32.totalorder %s33, %s47
    %p49 = scmp.eq.s32.totalorder %s16, 0
    %p50 = por %p48, %p49
    %s52 = sadd.s32 %s51, 1
    %p55 = scmp.eq.s32.totalorder %s10, 3
    %p56 = scmp.ne.s32.totalorder %s51, %s53
    %p57 = scmp.eq.s32.totalorder %s10, 0
    %p58 = por %p56, %p57
    %p59 = scmp.ne.s32.totalorder %s51, %s53
    %p60 = scmp.eq.s32.totalorder %s15, 3
    %p61 = por %p59, %p60
    %p62 = scmp.ne.s32.totalorder %s53, %s54
    %p63 = scmp.eq.s32.totalorder %s15, 0
    %p64 = por %p62, %p63
    %p65 = scmp.ne.s32.totalorder %s53, %s54
    %p66 = scmp.eq.s32.totalorder %s16, 3
    %p67 = por %p65, %p66
    %p69 = scmp.ne.s32.totalorder %s54, %s68
    %p70 = scmp.eq.s32.totalorder %s16, 0
    %p71 = por %p69, %p70
    %s73 = sadd.s32 %s72, 1
    %p76 = scmp.eq.s32.totalorder %s10, 3
    %p77 = scmp.ne.s32.totalorder %s72, %s74
    %p78 = scmp.eq.s32.totalorder %s10, 0
    %p79 = por %p77, %p78
    %p80 = scmp.ne.s32.totalorder %s72, %s74
    %p81 = scmp.eq.s32.totalorder %s15, 3
    %p82 = por %p80, %p81
    %p83 = scmp.ne.s32.totalorder %s74, %s75
    %p84 = scmp.eq.s32.totalorder %s15, 0
    %p85 = por %p83, %p84
    %p86 = scmp.ne.s32.totalorder %s74, %s75
    %p87 = scmp.eq.s32.totalorder %s16, 3
    %p88 = por %p86, %p87
    %p90 = scmp.ne.s32.totalorder %s75, %s89
    %p91 = scmp.eq.s32.totalorder %s16, 0
    %p92 = por %p90, %p91
    %s93 = ssub.s32 %s17, %s29
    %s94 = ssub.s32 %s18, %s25
    %s95 = sor.u32 %s93, %s94
    %p96 = scmp.eq.s32.totalorder %s95, 0
    %s98 = sadd.s32 %s97, 1
    %s99 = scalar_select %p96, %s97, %s98
    %p102 = pneg %p96
    %p103 = scmp.eq.s32.totalorder %s10, 3
    %p104 = por %p102, %p103
    %p105 = scmp.ne.s32.totalorder %s97, %s100
    %p106 = scmp.eq.s32.totalorder %s10, 0
    %p107 = por %p105, %p106
    %p108 = scmp.ne.s32.totalorder %s97, %s100
    %p109 = scmp.eq.s32.totalorder %s15, 3
    %p110 = por %p108, %p109
    %p111 = scmp.ne.s32.totalorder %s100, %s101
    %p112 = scmp.eq.s32.totalorder %s15, 0
    %p113 = por %p111, %p112
    %p114 = scmp.ne.s32.totalorder %s100, %s101
    %p115 = scmp.eq.s32.totalorder %s16, 3
    %p116 = por %p114, %p115
    %p118 = scmp.ne.s32.totalorder %s101, %s117
    %p119 = scmp.eq.s32.totalorder %s16, 0
    %p120 = por %p118, %p119
    %p121 = scmp.le.s32.totalorder 1, %s10
    %p122 = scmp.lt.s32.totalorder %s10, 5
    %p123 = pnand %p121, %p122
    %p124 = pneg %p123
    // Predicated region
    $region9: #{separable_conv2d.1} parent=5 // pred_check
      _
    $region10: #{separable_conv2d.1} parent=5 // pred_check_branch
      %126 = sbr.rel (%p123) target = $region12
    $region11: #{separable_conv2d.1} parent=5 // pred_region
      %s127 = ssub.s32 %s10, 1
      // Predicated region
      $region13: #{separable_conv2d.1} parent=11 // pred_check
        %p128 = pneg %p43
      $region14: #{separable_conv2d.1} parent=11 // pred_check_branch
        %130 = sbr.rel (%p128) target = $region16
      $region15: #{separable_conv2d.1} parent=11 // pred_region
        _
      $region16: #{separable_conv2d.1} parent=11 // pred_fallthru
        _
      // Predicated region
      $region17: #{separable_conv2d.1} parent=11 // pred_check
        %p131 = pneg %p64
      $region18: #{separable_conv2d.1} parent=11 // pred_check_branch
        %133 = sbr.rel (%p131) target = $region20
      $region19: #{separable_conv2d.1} parent=11 // pred_region
        _
      $region20: #{separable_conv2d.1} parent=11 // pred_fallthru
        _
      // Predicated region
      $region21: #{separable_conv2d.1} parent=11 // pred_check
        %p134 = pneg %p85
      $region22: #{separable_conv2d.1} parent=11 // pred_check_branch
        %136 = sbr.rel (%p134) target = $region24
      $region23: #{separable_conv2d.1} parent=11 // pred_region
        _
      $region24: #{separable_conv2d.1} parent=11 // pred_fallthru
        _
    $region12: #{separable_conv2d.1} parent=5 // pred_fallthru
      _
    %p137 = scmp.lt.s32.totalorder %s10, 4
    // Predicated region
    $region25: #{separable_conv2d.1} parent=5 // pred_check
      %p138 = pneg %p137
    $region26: #{separable_conv2d.1} parent=5 // pred_check_branch
      %140 = sbr.rel (%p138) target = $region28
    $region27: #{separable_conv2d.1} parent=5 // pred_region
      _
    $region28: #{separable_conv2d.1} parent=5 // pred_fallthru
      _
    %p141 = scmp.le.s32.totalorder 1, %s10
    %p142 = scmp.lt.s32.totalorder %s10, 5
    %p143 = pnand %p141, %p142
    %p144 = pneg %p143
    // Predicated region
    $region29: #{separable_conv2d.1} parent=5 // pred_check
      _
    $region30: #{separable_conv2d.1} parent=5 // pred_check_branch
      %146 = sbr.rel (%p143) target = $region32
    $region31: #{separable_conv2d.1} parent=5 // pred_region
      %s147 = ssub.s32 %s10, 1
      %p148 = pneg %p43
      %p149 = pneg %p40
      %p150 = pneg %p64
      %p151 = pneg %p61
      %p152 = pneg %p85
      %p153 = pneg %p82
      %p154 = pneg %p113
      %p155 = pneg %p110
      %s156 = smul.u32 16, %s20
      %p157 = scmp.lt.s32.totalorder %s19, 1
      %s158 = scalar_select %p157, %s19, 1
      %p159 = scmp.lt.s32.totalorder %s156, 31
      %s160 = scalar_select %p159, %s156, 31
      %s161 = smul.addr %s160, 4
      %s162 = smul.addr %s158, 128
      %s163 = sadd.s32 %s161, %s162
      %s164 = smul.addr %s163, 8
      %s165 = scalar_lea.vmem %s4, %s164
      %s166 = smul.u32 16, %s20
      %p167 = scmp.lt.s32.totalorder %s19, 1
      %s168 = scalar_select %p167, %s19, 1
      %p169 = scmp.lt.s32.totalorder %s166, 31
      %s170 = scalar_select %p169, %s166, 31
      %s171 = smul.addr %s170, 4
      %s172 = smul.addr %s168, 128
      %s173 = sadd.s32 %s171, %s172
      %s174 = smul.addr %s173, 8
      %s175 = scalar_lea.vmem %s4, %s174
      %s176 = smul.u32 16, %s20
      %p178 = scmp.lt.s32.totalorder %s20, 0
      %s179 = ssub.s32 0, %s20
      %s180 = scalar_select %p178, %s179, %s20
      %s181 = sand.u32 %s180, 1
      %s182 = ssub.s32 0, %s181
      %s183 = scalar_select %p178, %s182, %s181
      %p184 = scmp.ne.s32.totalorder %s183, 0
      %p185 = scmp.lt.s32.totalorder %s183, 0
      %p186 = pnand %p185, %p184
      %p187 = pneg %p186
      %s188 = sadd.s32 %s183, 2
      %s189 = scalar_select %p187, %s188, %s183
      %p190 = scmp.eq.s32.totalorder %s20, 0
      // Predicated region
      $region33: #{separable_conv2d.1} parent=31 // pred_check
        %p191 = pneg %p190
      $region34: #{separable_conv2d.1} parent=31 // pred_check_branch
        %193 = sbr.rel (%p191) target = $region36
      $region35: #{separable_conv2d.1} parent=31 // pred_region
        %s194 = smul.u32 %s20, 16
        %s195 = smul.u32 %s194, 40
        %s196 = smul.u32 %s19, 1360
        %s197 = sadd.s32 %s195, %s196
        %s198 = scalar_lea.vmem %s0, %s197
        %s199 = smul.u32 %s189, 720
        %s200 = scalar_lea.vmem [#allocation2], %s199
        %s201 = scalar_lea.sflag [#allocation3], %s189
        %p203 = scmp.lt.u32.totalorder 34, 8
        %p204 = pneg %p203
        // Predicated region
        $region37: #{separable_conv2d.1} parent=35 // pred_check
          _
        $region38: #{separable_conv2d.1} parent=35 // pred_check_branch
          %206 = sbr.rel (%p203) target = $region40
        $region39: #{separable_conv2d.1} parent=35 // pred_region
          %s255 = sand.u32 34, 7
          %p256 = scmp.eq.s32.totalorder %s255, 0
          %p257 = pneg %p256
          // Predicated region
          $region52: #{separable_conv2d.1} parent=39 // pred_check
            _
          $region53: #{separable_conv2d.1} parent=39 // pred_check_branch
            %259 = sbr.rel (%p256) target = $region55
          $region54: #{separable_conv2d.1} parent=39 // pred_region
            %s260 = sand.u32 34, 7
            %s261 = ssub.s32 34, %s260
            %s262 = scalar_lea.vmem %s198, %s261
            %s263 = ssub.s32 34, %s260
            %s264 = scalar_lea.vmem %s200, %s263 [#allocation2]
            loop: start=0, step=1, limit=1
            $region56: #{separable_conv2d.1} parent=54 // loop_pre_header
              _
            $region57: #{separable_conv2d.1} parent=54 // loop_header
              %s266 = sphi 0, %s270
              %p267 = scmp.ge.s32.totalorder %s266, 1
              %s271 = sphi %s198, %s198
              %s272 = sphi %s200, %s200
            $region58: #{separable_conv2d.1} parent=54 // loop_header_branch
              %269 = sbr.rel (%p267) target = $region62
            $region59: #{separable_conv2d.1} parent=54 // loop_body
              %v273 = vld [vmem:[%s271] sm:$0xff]
              %274 = vst [vmem:[%s272] sm:$0xff] %v273
              %v275 = vld [vmem:[%s271 + $0x8] sm:$0xff]
              %276 = vst [vmem:[%s272 + $0x8] sm:$0xff] %v275
              %v277 = vld [vmem:[%s271 + $0x10] sm:$0xff]
              %278 = vst [vmem:[%s272 + $0x10] sm:$0xff] %v277
              %v279 = vld [vmem:[%s271 + $0x18] sm:$0xff]
              %280 = vst [vmem:[%s272 + $0x18] sm:$0xff] %v279
              %v281 = vld [vmem:[%s271 + $0x28] sm:$0xff]
              %282 = vst [vmem:[%s272 + $0x28] sm:$0xff] %v281
              %v283 = vld [vmem:[%s271 + $0x30] sm:$0xff]
              %284 = vst [vmem:[%s272 + $0x30] sm:$0xff] %v283
              %v285 = vld [vmem:[%s271 + $0x38] sm:$0xff]
              %286 = vst [vmem:[%s272 + $0x38] sm:$0xff] %v285
              %v287 = vld [vmem:[%s271 + $0x40] sm:$0xff]
              %288 = vst [vmem:[%s272 + $0x40] sm:$0xff] %v287
              %v289 = vld [vmem:[%s271 + $0x50] sm:$0xff]
              %290 = vst [vmem:[%s272 + $0x50] sm:$0xff] %v289
              %v291 = vld [vmem:[%s271 + $0x58] sm:$0xff]
              %292 = vst [vmem:[%s272 + $0x58] sm:$0xff] %v291
              %v293 = vld [vmem:[%s271 + $0x60] sm:$0xff]
              %294 = vst [vmem:[%s272 + $0x60] sm:$0xff] %v293
              %v295 = vld [vmem:[%s271 + $0x68] sm:$0xff]
              %296 = vst [vmem:[%s272 + $0x68] sm:$0xff] %v295
              %v297 = vld [vmem:[%s271 + $0x78] sm:$0xff]
              %298 = vst [vmem:[%s272 + $0x78] sm:$0xff] %v297
              %v299 = vld [vmem:[%s271 + $0x80] sm:$0xff]
              %300 = vst [vmem:[%s272 + $0x80] sm:$0xff] %v299
              %v301 = vld [vmem:[%s271 + $0x88] sm:$0xff]
              %302 = vst [vmem:[%s272 + $0x88] sm:$0xff] %v301
              %v303 = vld [vmem:[%s271 + $0x90] sm:$0xff]
              %304 = vst [vmem:[%s272 + $0x90] sm:$0xff] %v303
              %v305 = vld [vmem:[%s271 + $0xa0] sm:$0xff]
              %306 = vst [vmem:[%s272 + $0xa0] sm:$0xff] %v305
              %v307 = vld [vmem:[%s271 + $0xa8] sm:$0xff]
              %308 = vst [vmem:[%s272 + $0xa8] sm:$0xff] %v307
              %v309 = vld [vmem:[%s271 + $0xb0] sm:$0xff]
              %310 = vst [vmem:[%s272 + $0xb0] sm:$0xff] %v309
              %v311 = vld [vmem:[%s271 + $0xb8] sm:$0xff]
              %312 = vst [vmem:[%s272 + $0xb8] sm:$0xff] %v311
              %v313 = vld [vmem:[%s271 + $0xc8] sm:$0xff]
              %314 = vst [vmem:[%s272 + $0xc8] sm:$0xff] %v313
              %v315 = vld [vmem:[%s271 + $0xd0] sm:$0xff]
              %316 = vst [vmem:[%s272 + $0xd0] sm:$0xff] %v315
              %v317 = vld [vmem:[%s271 + $0xd8] sm:$0xff]
              %318 = vst [vmem:[%s272 + $0xd8] sm:$0xff] %v317
              %v319 = vld [vmem:[%s271 + $0xe0] sm:$0xff]
              %320 = vst [vmem:[%s272 + $0xe0] sm:$0xff] %v319
              %v321 = vld [vmem:[%s271 + $0xf0] sm:$0xff]
              %322 = vst [vmem:[%s272 + $0xf0] sm:$0xff] %v321
              %v323 = vld [vmem:[%s271 + $0xf8] sm:$0xff]
              %324 = vst [vmem:[%s272 + $0xf8] sm:$0xff] %v323
              %v325 = vld [vmem:[%s271 + $0x100] sm:$0xff]
              %326 = vst [vmem:[%s272 + $0x100] sm:$0xff] %v325
              %v327 = vld [vmem:[%s271 + $0x108] sm:$0xff]
              %328 = vst [vmem:[%s272 + $0x108] sm:$0xff] %v327
              %v329 = vld [vmem:[%s271 + $0x118] sm:$0xff]
              %330 = vst [vmem:[%s272 + $0x118] sm:$0xff] %v329
              %v331 = vld [vmem:[%s271 + $0x120] sm:$0xff]
              %332 = vst [vmem:[%s272 + $0x120] sm:$0xff] %v331
              %v333 = vld [vmem:[%s271 + $0x128] sm:$0xff]
              %334 = vst [vmem:[%s272 + $0x128] sm:$0xff] %v333
              %v335 = vld [vmem:[%s271 + $0x130] sm:$0xff]
              %336 = vst [vmem:[%s272 + $0x130] sm:$0xff] %v335
              %v337 = vld [vmem:[%s271 + $0x140] sm:$0xff]
              %338 = vst [vmem:[%s272 + $0x140] sm:$0xff] %v337
              %v339 = vld [vmem:[%s271 + $0x148] sm:$0xff]
              %340 = vst [vmem:[%s272 + $0x148] sm:$0xff] %v339
              %v341 = vld [vmem:[%s271 + $0x150] sm:$0xff]
              %342 = vst [vmem:[%s272 + $0x150] sm:$0xff] %v341
              %v343 = vld [vmem:[%s271 + $0x158] sm:$0xff]
              %344 = vst [vmem:[%s272 + $0x158] sm:$0xff] %v343
              %v345 = vld [vmem:[%s271 + $0x168] sm:$0xff]
              %346 = vst [vmem:[%s272 + $0x168] sm:$0xff] %v345
              %v347 = vld [vmem:[%s271 + $0x170] sm:$0xff]
              %348 = vst [vmem:[%s272 + $0x170] sm:$0xff] %v347
              %v349 = vld [vmem:[%s271 + $0x178] sm:$0xff]
              %350 = vst [vmem:[%s272 + $0x178] sm:$0xff] %v349
              %v351 = vld [vmem:[%s271 + $0x180] sm:$0xff]
              %352 = vst [vmem:[%s272 + $0x180] sm:$0xff] %v351
              %v353 = vld [vmem:[%s271 + $0x190] sm:$0xff]
              %354 = vst [vmem:[%s272 + $0x190] sm:$0xff] %v353
              %v355 = vld [vmem:[%s271 + $0x198] sm:$0xff]
              %356 = vst [vmem:[%s272 + $0x198] sm:$0xff] %v355
              %v357 = vld [vmem:[%s271 + $0x1a0] sm:$0xff]
              %358 = vst [vmem:[%s272 + $0x1a0] sm:$0xff] %v357
              %v359 = vld [vmem:[%s271 + $0x1a8] sm:$0xff]
              %360 = vst [vmem:[%s272 + $0x1a8] sm:$0xff] %v359
              %v361 = vld [vmem:[%s271 + $0x1b8] sm:$0xff]
              %362 = vst [vmem:[%s272 + $0x1b8] sm:$0xff] %v361
              %v363 = vld [vmem:[%s271 + $0x1c0] sm:$0xff]
              %364 = vst [vmem:[%s272 + $0x1c0] sm:$0xff] %v363
              %v365 = vld [vmem:[%s271 + $0x1c8] sm:$0xff]
              %366 = vst [vmem:[%s272 + $0x1c8] sm:$0xff] %v365
              %v367 = vld [vmem:[%s271 + $0x1d0] sm:$0xff]
              %368 = vst [vmem:[%s272 + $0x1d0] sm:$0xff] %v367
              %v369 = vld [vmem:[%s271 + $0x1e0] sm:$0xff]
              %370 = vst [vmem:[%s272 + $0x1e0] sm:$0xff] %v369
              %v371 = vld [vmem:[%s271 + $0x1e8] sm:$0xff]
              %372 = vst [vmem:[%s272 + $0x1e8] sm:$0xff] %v371
              %v373 = vld [vmem:[%s271 + $0x1f0] sm:$0xff]
              %374 = vst [vmem:[%s272 + $0x1f0] sm:$0xff] %v373
              %v375 = vld [vmem:[%s271 + $0x1f8] sm:$0xff]
              %376 = vst [vmem:[%s272 + $0x1f8] sm:$0xff] %v375
              %v377 = vld [vmem:[%s271 + $0x208] sm:$0xff]
              %378 = vst [vmem:[%s272 + $0x208] sm:$0xff] %v377
              %v379 = vld [vmem:[%s271 + $0x210] sm:$0xff]
              %380 = vst [vmem:[%s272 + $0x210] sm:$0xff] %v379
              %v381 = vld [vmem:[%s271 + $0x218] sm:$0xff]
              %382 = vst [vmem:[%s272 + $0x218] sm:$0xff] %v381
              %v383 = vld [vmem:[%s271 + $0x220] sm:$0xff]
              %384 = vst [vmem:[%s272 + $0x220] sm:$0xff] %v383
              %v385 = vld [vmem:[%s271 + $0x230] sm:$0xff]
              %386 = vst [vmem:[%s272 + $0x230] sm:$0xff] %v385
              %v387 = vld [vmem:[%s271 + $0x238] sm:$0xff]
              %388 = vst [vmem:[%s272 + $0x238] sm:$0xff] %v387
              %v389 = vld [vmem:[%s271 + $0x240] sm:$0xff]
              %390 = vst [vmem:[%s272 + $0x240] sm:$0xff] %v389
              %v391 = vld [vmem:[%s271 + $0x248] sm:$0xff]
              %392 = vst [vmem:[%s272 + $0x248] sm:$0xff] %v391
              %v393 = vld [vmem:[%s271 + $0x258] sm:$0xff]
              %394 = vst [vmem:[%s272 + $0x258] sm:$0xff] %v393
              %v395 = vld [vmem:[%s271 + $0x260] sm:$0xff]
              %396 = vst [vmem:[%s272 + $0x260] sm:$0xff] %v395
              %v397 = vld [vmem:[%s271 + $0x268] sm:$0xff]
              %398 = vst [vmem:[%s272 + $0x268] sm:$0xff] %v397
              %v399 = vld [vmem:[%s271 + $0x270] sm:$0xff]
              %400 = vst [vmem:[%s272 + $0x270] sm:$0xff] %v399
              %v401 = vld [vmem:[%s271 + $0x280] sm:$0xff]
              %402 = vst [vmem:[%s272 + $0x280] sm:$0xff] %v401
              %v403 = vld [vmem:[%s271 + $0x288] sm:$0xff]
              %404 = vst [vmem:[%s272 + $0x288] sm:$0xff] %v403
              %v405 = vld [vmem:[%s271 + $0x290] sm:$0xff]
              %406 = vst [vmem:[%s272 + $0x290] sm:$0xff] %v405
              %v407 = vld [vmem:[%s271 + $0x298] sm:$0xff]
              %408 = vst [vmem:[%s272 + $0x298] sm:$0xff] %v407
              %v409 = vld [vmem:[%s271 + $0x2a8] sm:$0xff]
              %410 = vst [vmem:[%s272 + $0x2a8] sm:$0xff] %v409
              %v411 = vld [vmem:[%s271 + $0x2b0] sm:$0xff]
              %412 = vst [vmem:[%s272 + $0x2b0] sm:$0xff] %v411
              %v413 = vld [vmem:[%s271 + $0x2b8] sm:$0xff]
              %414 = vst [vmem:[%s272 + $0x2b8] sm:$0xff] %v413
              %v415 = vld [vmem:[%s271 + $0x2c0] sm:$0xff]
              %416 = vst [vmem:[%s272 + $0x2c0] sm:$0xff] %v415
            $region60: #{separable_conv2d.1} parent=54 // loop_footer
              %s270 = sadd.s32 1, %s266
            $region61: #{separable_conv2d.1} parent=54 // loop_footer_branch
              %265 = sbr.rel target = $region57
            $region62: #{separable_conv2d.1} parent=54 // loop_exit
              _
            %s417 = sshllo.u32 0, %s260
            loop: start=0, step=1, limit=1
            $region63: #{separable_conv2d.1} parent=54 // loop_pre_header
              _
            $region64: #{separable_conv2d.1} parent=54 // loop_header
              %s419 = sphi 0, %s423
              %p420 = scmp.ge.s32.totalorder %s419, 1
              %s424 = sphi %s262, %s262
              %s425 = sphi %s264, %s264
            $region65: #{separable_conv2d.1} parent=54 // loop_header_branch
              %422 = sbr.rel (%p420) target = $region69
            $region66: #{separable_conv2d.1} parent=54 // loop_body
              %v426 = vld [vmem:[%s424] sm:%s417]
              %427 = vst [vmem:[%s425] sm:%s417] %v426
              %v428 = vld [vmem:[%s424 + $0x28] sm:%s417]
              %429 = vst [vmem:[%s425 + $0x28] sm:%s417] %v428
              %v430 = vld [vmem:[%s424 + $0x50] sm:%s417]
              %431 = vst [vmem:[%s425 + $0x50] sm:%s417] %v430
              %v432 = vld [vmem:[%s424 + $0x78] sm:%s417]
              %433 = vst [vmem:[%s425 + $0x78] sm:%s417] %v432
              %v434 = vld [vmem:[%s424 + $0xa0] sm:%s417]
              %435 = vst [vmem:[%s425 + $0xa0] sm:%s417] %v434
              %v436 = vld [vmem:[%s424 + $0xc8] sm:%s417]
              %437 = vst [vmem:[%s425 + $0xc8] sm:%s417] %v436
              %v438 = vld [vmem:[%s424 + $0xf0] sm:%s417]
              %439 = vst [vmem:[%s425 + $0xf0] sm:%s417] %v438
              %v440 = vld [vmem:[%s424 + $0x118] sm:%s417]
              %441 = vst [vmem:[%s425 + $0x118] sm:%s417] %v440
              %v442 = vld [vmem:[%s424 + $0x140] sm:%s417]
              %443 = vst [vmem:[%s425 + $0x140] sm:%s417] %v442
              %v444 = vld [vmem:[%s424 + $0x168] sm:%s417]
              %445 = vst [vmem:[%s425 + $0x168] sm:%s417] %v444
              %v446 = vld [vmem:[%s424 + $0x190] sm:%s417]
              %447 = vst [vmem:[%s425 + $0x190] sm:%s417] %v446
              %v448 = vld [vmem:[%s424 + $0x1b8] sm:%s417]
              %449 = vst [vmem:[%s425 + $0x1b8] sm:%s417] %v448
              %v450 = vld [vmem:[%s424 + $0x1e0] sm:%s417]
              %451 = vst [vmem:[%s425 + $0x1e0] sm:%s417] %v450
              %v452 = vld [vmem:[%s424 + $0x208] sm:%s417]
              %453 = vst [vmem:[%s425 + $0x208] sm:%s417] %v452
              %v454 = vld [vmem:[%s424 + $0x230] sm:%s417]
              %455 = vst [vmem:[%s425 + $0x230] sm:%s417] %v454
              %v456 = vld [vmem:[%s424 + $0x258] sm:%s417]
              %457 = vst [vmem:[%s425 + $0x258] sm:%s417] %v456
              %v458 = vld [vmem:[%s424 + $0x280] sm:%s417]
              %459 = vst [vmem:[%s425 + $0x280] sm:%s417] %v458
              %v460 = vld [vmem:[%s424 + $0x2a8] sm:%s417]
              %461 = vst [vmem:[%s425 + $0x2a8] sm:%s417] %v460
            $region67: #{separable_conv2d.1} parent=54 // loop_footer
              %s423 = sadd.s32 1, %s419
            $region68: #{separable_conv2d.1} parent=54 // loop_footer_branch
              %418 = sbr.rel target = $region64
            $region69: #{separable_conv2d.1} parent=54 // loop_exit
              _
          $region55: #{separable_conv2d.1} parent=39 // pred_fallthru
            _
        $region40: #{separable_conv2d.1} parent=35 // pred_fallthru
          _
        // Predicated region
        $region41: #{separable_conv2d.1} parent=35 // pred_check
          %p207 = pneg %p203
        $region42: #{separable_conv2d.1} parent=35 // pred_check_branch
          %209 = sbr.rel (%p207) target = $region44
        $region43: #{separable_conv2d.1} parent=35 // pred_region
          %s210 = sshllo.u32 0, 34
          loop: start=0, step=1, limit=1
          $region45: #{separable_conv2d.1} parent=43 // loop_pre_header
            _
          $region46: #{separable_conv2d.1} parent=43 // loop_header
            %s212 = sphi 0, %s216
            %p213 = scmp.ge.s32.totalorder %s212, 1
            %s217 = sphi %s198, %s198
            %s218 = sphi %s200, %s200
          $region47: #{separable_conv2d.1} parent=43 // loop_header_branch
            %215 = sbr.rel (%p213) target = $region51
          $region48: #{separable_conv2d.1} parent=43 // loop_body
            %v219 = vld [vmem:[%s217] sm:%s210]
            %220 = vst [vmem:[%s218] sm:%s210] %v219
            %v221 = vld [vmem:[%s217 + $0x28] sm:%s210]
            %222 = vst [vmem:[%s218 + $0x28] sm:%s210] %v221
            %v223 = vld [vmem:[%s217 + $0x50] sm:%s210]
            %224 = vst [vmem:[%s218 + $0x50] sm:%s210] %v223
            %v225 = vld [vmem:[%s217 + $0x78] sm:%s210]
            %226 = vst [vmem:[%s218 + $0x78] sm:%s210] %v225
            %v227 = vld [vmem:[%s217 + $0xa0] sm:%s210]
            %228 = vst [vmem:[%s218 + $0xa0] sm:%s210] %v227
            %v229 = vld [vmem:[%s217 + $0xc8] sm:%s210]
            %230 = vst [vmem:[%s218 + $0xc8] sm:%s210] %v229
            %v231 = vld [vmem:[%s217 + $0xf0] sm:%s210]
            %232 = vst [vmem:[%s218 + $0xf0] sm:%s210] %v231
            %v233 = vld [vmem:[%s217 + $0x118] sm:%s210]
            %234 = vst [vmem:[%s218 + $0x118] sm:%s210] %v233
            %v235 = vld [vmem:[%s217 + $0x140] sm:%s210]
            %236 = vst [vmem:[%s218 + $0x140] sm:%s210] %v235
            %v237 = vld [vmem:[%s217 + $0x168] sm:%s210]
            %238 = vst [vmem:[%s218 + $0x168] sm:%s210] %v237
            %v239 = vld [vmem:[%s217 + $0x190] sm:%s210]
            %240 = vst [vmem:[%s218 + $0x190] sm:%s210] %v239
            %v241 = vld [vmem:[%s217 + $0x1b8] sm:%s210]
            %242 = vst [vmem:[%s218 + $0x1b8] sm:%s210] %v241
            %v243 = vld [vmem:[%s217 + $0x1e0] sm:%s210]
            %244 = vst [vmem:[%s218 + $0x1e0] sm:%s210] %v243
            %v245 = vld [vmem:[%s217 + $0x208] sm:%s210]
            %246 = vst [vmem:[%s218 + $0x208] sm:%s210] %v245
            %v247 = vld [vmem:[%s217 + $0x230] sm:%s210]
            %248 = vst [vmem:[%s218 + $0x230] sm:%s210] %v247
            %v249 = vld [vmem:[%s217 + $0x258] sm:%s210]
            %250 = vst [vmem:[%s218 + $0x258] sm:%s210] %v249
            %v251 = vld [vmem:[%s217 + $0x280] sm:%s210]
            %252 = vst [vmem:[%s218 + $0x280] sm:%s210] %v251
            %v253 = vld [vmem:[%s217 + $0x2a8] sm:%s210]
            %254 = vst [vmem:[%s218 + $0x2a8] sm:%s210] %v253
          $region49: #{separable_conv2d.1} parent=43 // loop_footer
            %s216 = sadd.s32 1, %s212
          $region50: #{separable_conv2d.1} parent=43 // loop_footer_branch
            %211 = sbr.rel target = $region46
          $region51: #{separable_conv2d.1} parent=43 // loop_exit
            _
        $region44: #{separable_conv2d.1} parent=35 // pred_fallthru
          _
        // Predicated region
        $region70: #{separable_conv2d.1} parent=35 // pred_check
          _
        $region71: #{separable_conv2d.1} parent=35 // pred_check_branch
          %464 = sbr.rel (0) target = $region73
        $region72: #{separable_conv2d.1} parent=35 // pred_region
          %465 = vsyncadd %s201, 9792
        $region73: #{separable_conv2d.1} parent=35 // pred_fallthru
          _
      $region36: #{separable_conv2d.1} parent=31 // pred_fallthru
        _
      %s466 = sadd.s32 %s20, 1
      %p467 = scmp.lt.s32.totalorder %s466, 2
      // Predicated region
      $region74: #{separable_conv2d.1} parent=31 // pred_check
        %p468 = pneg %p467
      $region75: #{separable_conv2d.1} parent=31 // pred_check_branch
        %470 = sbr.rel (%p468) target = $region77
      $region76: #{separable_conv2d.1} parent=31 // pred_region
        %s471 = ssub.s32 1, %s189
        %s472 = smul.u32 %s466, 16
        %s473 = smul.u32 %s472, 40
        %s474 = smul.u32 %s19, 1360
        %s475 = sadd.s32 %s473, %s474
        %s476 = scalar_lea.vmem %s0, %s475
        %s477 = smul.u32 %s471, 720
        %s478 = scalar_lea.vmem [#allocation2], %s477
        %s479 = scalar_lea.sflag [#allocation3], %s471
        %p481 = scmp.lt.u32.totalorder 34, 8
        %p482 = pneg %p481
        // Predicated region
        $region78: #{separable_conv2d.1} parent=76 // pred_check
          _
        $region79: #{separable_conv2d.1} parent=76 // pred_check_branch
          %484 = sbr.rel (%p481) target = $region81
        $region80: #{separable_conv2d.1} parent=76 // pred_region
          %s533 = sand.u32 34, 7
          %p534 = scmp.eq.s32.totalorder %s533, 0
          %p535 = pneg %p534
          // Predicated region
          $region93: #{separable_conv2d.1} parent=80 // pred_check
            _
          $region94: #{separable_conv2d.1} parent=80 // pred_check_branch
            %537 = sbr.rel (%p534) target = $region96
          $region95: #{separable_conv2d.1} parent=80 // pred_region
            %s538 = sand.u32 34, 7
            %s539 = ssub.s32 34, %s538
            %s540 = scalar_lea.vmem %s476, %s539
            %s541 = ssub.s32 34, %s538
            %s542 = scalar_lea.vmem %s478, %s541 [#allocation2]
            loop: start=0, step=1, limit=1
            $region97: #{separable_conv2d.1} parent=95 // loop_pre_header
              _
            $region98: #{separable_conv2d.1} parent=95 // loop_header
              %s544 = sphi 0, %s548
              %p545 = scmp.ge.s32.totalorder %s544, 1
              %s549 = sphi %s476, %s476
              %s550 = sphi %s478, %s478
            $region99: #{separable_conv2d.1} parent=95 // loop_header_branch
              %547 = sbr.rel (%p545) target = $region103
            $region100: #{separable_conv2d.1} parent=95 // loop_body
              %v551 = vld [vmem:[%s549] sm:$0xff]
              %552 = vst [vmem:[%s550] sm:$0xff] %v551
              %v553 = vld [vmem:[%s549 + $0x8] sm:$0xff]
              %554 = vst [vmem:[%s550 + $0x8] sm:$0xff] %v553
              %v555 = vld [vmem:[%s549 + $0x10] sm:$0xff]
              %556 = vst [vmem:[%s550 + $0x10] sm:$0xff] %v555
              %v557 = vld [vmem:[%s549 + $0x18] sm:$0xff]
              %558 = vst [vmem:[%s550 + $0x18] sm:$0xff] %v557
              %v559 = vld [vmem:[%s549 + $0x28] sm:$0xff]
              %560 = vst [vmem:[%s550 + $0x28] sm:$0xff] %v559
              %v561 = vld [vmem:[%s549 + $0x30] sm:$0xff]
              %562 = vst [vmem:[%s550 + $0x30] sm:$0xff] %v561
              %v563 = vld [vmem:[%s549 + $0x38] sm:$0xff]
              %564 = vst [vmem:[%s550 + $0x38] sm:$0xff] %v563
              %v565 = vld [vmem:[%s549 + $0x40] sm:$0xff]
              %566 = vst [vmem:[%s550 + $0x40] sm:$0xff] %v565
              %v567 = vld [vmem:[%s549 + $0x50] sm:$0xff]
              %568 = vst [vmem:[%s550 + $0x50] sm:$0xff] %v567
              %v569 = vld [vmem:[%s549 + $0x58] sm:$0xff]
              %570 = vst [vmem:[%s550 + $0x58] sm:$0xff] %v569
              %v571 = vld [vmem:[%s549 + $0x60] sm:$0xff]
              %572 = vst [vmem:[%s550 + $0x60] sm:$0xff] %v571
              %v573 = vld [vmem:[%s549 + $0x68] sm:$0xff]
              %574 = vst [vmem:[%s550 + $0x68] sm:$0xff] %v573
              %v575 = vld [vmem:[%s549 + $0x78] sm:$0xff]
              %576 = vst [vmem:[%s550 + $0x78] sm:$0xff] %v575
              %v577 = vld [vmem:[%s549 + $0x80] sm:$0xff]
              %578 = vst [vmem:[%s550 + $0x80] sm:$0xff] %v577
              %v579 = vld [vmem:[%s549 + $0x88] sm:$0xff]
              %580 = vst [vmem:[%s550 + $0x88] sm:$0xff] %v579
              %v581 = vld [vmem:[%s549 + $0x90] sm:$0xff]
              %582 = vst [vmem:[%s550 + $0x90] sm:$0xff] %v581
              %v583 = vld [vmem:[%s549 + $0xa0] sm:$0xff]
              %584 = vst [vmem:[%s550 + $0xa0] sm:$0xff] %v583
              %v585 = vld [vmem:[%s549 + $0xa8] sm:$0xff]
              %586 = vst [vmem:[%s550 + $0xa8] sm:$0xff] %v585
              %v587 = vld [vmem:[%s549 + $0xb0] sm:$0xff]
              %588 = vst [vmem:[%s550 + $0xb0] sm:$0xff] %v587
              %v589 = vld [vmem:[%s549 + $0xb8] sm:$0xff]
              %590 = vst [vmem:[%s550 + $0xb8] sm:$0xff] %v589
              %v591 = vld [vmem:[%s549 + $0xc8] sm:$0xff]
              %592 = vst [vmem:[%s550 + $0xc8] sm:$0xff] %v591
              %v593 = vld [vmem:[%s549 + $0xd0] sm:$0xff]
              %594 = vst [vmem:[%s550 + $0xd0] sm:$0xff] %v593
              %v595 = vld [vmem:[%s549 + $0xd8] sm:$0xff]
              %596 = vst [vmem:[%s550 + $0xd8] sm:$0xff] %v595
              %v597 = vld [vmem:[%s549 + $0xe0] sm:$0xff]
              %598 = vst [vmem:[%s550 + $0xe0] sm:$0xff] %v597
              %v599 = vld [vmem:[%s549 + $0xf0] sm:$0xff]
              %600 = vst [vmem:[%s550 + $0xf0] sm:$0xff] %v599
              %v601 = vld [vmem:[%s549 + $0xf8] sm:$0xff]
              %602 = vst [vmem:[%s550 + $0xf8] sm:$0xff] %v601
              %v603 = vld [vmem:[%s549 + $0x100] sm:$0xff]
              %604 = vst [vmem:[%s550 + $0x100] sm:$0xff] %v603
              %v605 = vld [vmem:[%s549 + $0x108] sm:$0xff]
              %606 = vst [vmem:[%s550 + $0x108] sm:$0xff] %v605
              %v607 = vld [vmem:[%s549 + $0x118] sm:$0xff]
              %608 = vst [vmem:[%s550 + $0x118] sm:$0xff] %v607
              %v609 = vld [vmem:[%s549 + $0x120] sm:$0xff]
              %610 = vst [vmem:[%s550 + $0x120] sm:$0xff] %v609
              %v611 = vld [vmem:[%s549 + $0x128] sm:$0xff]
              %612 = vst [vmem:[%s550 + $0x128] sm:$0xff] %v611
              %v613 = vld [vmem:[%s549 + $0x130] sm:$0xff]
              %614 = vst [vmem:[%s550 + $0x130] sm:$0xff] %v613
              %v615 = vld [vmem:[%s549 + $0x140] sm:$0xff]
              %616 = vst [vmem:[%s550 + $0x140] sm:$0xff] %v615
              %v617 = vld [vmem:[%s549 + $0x148] sm:$0xff]
              %618 = vst [vmem:[%s550 + $0x148] sm:$0xff] %v617
              %v619 = vld [vmem:[%s549 + $0x150] sm:$0xff]
              %620 = vst [vmem:[%s550 + $0x150] sm:$0xff] %v619
              %v621 = vld [vmem:[%s549 + $0x158] sm:$0xff]
              %622 = vst [vmem:[%s550 + $0x158] sm:$0xff] %v621
              %v623 = vld [vmem:[%s549 + $0x168] sm:$0xff]
              %624 = vst [vmem:[%s550 + $0x168] sm:$0xff] %v623
              %v625 = vld [vmem:[%s549 + $0x170] sm:$0xff]
              %626 = vst [vmem:[%s550 + $0x170] sm:$0xff] %v625
              %v627 = vld [vmem:[%s549 + $0x178] sm:$0xff]
              %628 = vst [vmem:[%s550 + $0x178] sm:$0xff] %v627
              %v629 = vld [vmem:[%s549 + $0x180] sm:$0xff]
              %630 = vst [vmem:[%s550 + $0x180] sm:$0xff] %v629
              %v631 = vld [vmem:[%s549 + $0x190] sm:$0xff]
              %632 = vst [vmem:[%s550 + $0x190] sm:$0xff] %v631
              %v633 = vld [vmem:[%s549 + $0x198] sm:$0xff]
              %634 = vst [vmem:[%s550 + $0x198] sm:$0xff] %v633
              %v635 = vld [vmem:[%s549 + $0x1a0] sm:$0xff]
              %636 = vst [vmem:[%s550 + $0x1a0] sm:$0xff] %v635
              %v637 = vld [vmem:[%s549 + $0x1a8] sm:$0xff]
              %638 = vst [vmem:[%s550 + $0x1a8] sm:$0xff] %v637
              %v639 = vld [vmem:[%s549 + $0x1b8] sm:$0xff]
              %640 = vst [vmem:[%s550 + $0x1b8] sm:$0xff] %v639
              %v641 = vld [vmem:[%s549 + $0x1c0] sm:$0xff]
              %642 = vst [vmem:[%s550 + $0x1c0] sm:$0xff] %v641
              %v643 = vld [vmem:[%s549 + $0x1c8] sm:$0xff]
              %644 = vst [vmem:[%s550 + $0x1c8] sm:$0xff] %v643
              %v645 = vld [vmem:[%s549 + $0x1d0] sm:$0xff]
              %646 = vst [vmem:[%s550 + $0x1d0] sm:$0xff] %v645
              %v647 = vld [vmem:[%s549 + $0x1e0] sm:$0xff]
              %648 = vst [vmem:[%s550 + $0x1e0] sm:$0xff] %v647
              %v649 = vld [vmem:[%s549 + $0x1e8] sm:$0xff]
              %650 = vst [vmem:[%s550 + $0x1e8] sm:$0xff] %v649
              %v651 = vld [vmem:[%s549 + $0x1f0] sm:$0xff]
              %652 = vst [vmem:[%s550 + $0x1f0] sm:$0xff] %v651
              %v653 = vld [vmem:[%s549 + $0x1f8] sm:$0xff]
              %654 = vst [vmem:[%s550 + $0x1f8] sm:$0xff] %v653
              %v655 = vld [vmem:[%s549 + $0x208] sm:$0xff]
              %656 = vst [vmem:[%s550 + $0x208] sm:$0xff] %v655
              %v657 = vld [vmem:[%s549 + $0x210] sm:$0xff]
              %658 = vst [vmem:[%s550 + $0x210] sm:$0xff] %v657
              %v659 = vld [vmem:[%s549 + $0x218] sm:$0xff]
              %660 = vst [vmem:[%s550 + $0x218] sm:$0xff] %v659
              %v661 = vld [vmem:[%s549 + $0x220] sm:$0xff]
              %662 = vst [vmem:[%s550 + $0x220] sm:$0xff] %v661
              %v663 = vld [vmem:[%s549 + $0x230] sm:$0xff]
              %664 = vst [vmem:[%s550 + $0x230] sm:$0xff] %v663
              %v665 = vld [vmem:[%s549 + $0x238] sm:$0xff]
              %666 = vst [vmem:[%s550 + $0x238] sm:$0xff] %v665
              %v667 = vld [vmem:[%s549 + $0x240] sm:$0xff]
              %668 = vst [vmem:[%s550 + $0x240] sm:$0xff] %v667
              %v669 = vld [vmem:[%s549 + $0x248] sm:$0xff]
              %670 = vst [vmem:[%s550 + $0x248] sm:$0xff] %v669
              %v671 = vld [vmem:[%s549 + $0x258] sm:$0xff]
              %672 = vst [vmem:[%s550 + $0x258] sm:$0xff] %v671
              %v673 = vld [vmem:[%s549 + $0x260] sm:$0xff]
              %674 = vst [vmem:[%s550 + $0x260] sm:$0xff] %v673
              %v675 = vld [vmem:[%s549 + $0x268] sm:$0xff]
              %676 = vst [vmem:[%s550 + $0x268] sm:$0xff] %v675
              %v677 = vld [vmem:[%s549 + $0x270] sm:$0xff]
              %678 = vst [vmem:[%s550 + $0x270] sm:$0xff] %v677
              %v679 = vld [vmem:[%s549 + $0x280] sm:$0xff]
              %680 = vst [vmem:[%s550 + $0x280] sm:$0xff] %v679
              %v681 = vld [vmem:[%s549 + $0x288] sm:$0xff]
              %682 = vst [vmem:[%s550 + $0x288] sm:$0xff] %v681
              %v683 = vld [vmem:[%s549 + $0x290] sm:$0xff]
              %684 = vst [vmem:[%s550 + $0x290] sm:$0xff] %v683
              %v685 = vld [vmem:[%s549 + $0x298] sm:$0xff]
              %686 = vst [vmem:[%s550 + $0x298] sm:$0xff] %v685
              %v687 = vld [vmem:[%s549 + $0x2a8] sm:$0xff]
              %688 = vst [vmem:[%s550 + $0x2a8] sm:$0xff] %v687
              %v689 = vld [vmem:[%s549 + $0x2b0] sm:$0xff]
              %690 = vst [vmem:[%s550 + $0x2b0] sm:$0xff] %v689
              %v691 = vld [vmem:[%s549 + $0x2b8] sm:$0xff]
              %692 = vst [vmem:[%s550 + $0x2b8] sm:$0xff] %v691
              %v693 = vld [vmem:[%s549 + $0x2c0] sm:$0xff]
              %694 = vst [vmem:[%s550 + $0x2c0] sm:$0xff] %v693
            $region101: #{separable_conv2d.1} parent=95 // loop_footer
              %s548 = sadd.s32 1, %s544
            $region102: #{separable_conv2d.1} parent=95 // loop_footer_branch
              %543 = sbr.rel target = $region98
            $region103: #{separable_conv2d.1} parent=95 // loop_exit
              _
            %s695 = sshllo.u32 0, %s538
            loop: start=0, step=1, limit=1
            $region104: #{separable_conv2d.1} parent=95 // loop_pre_header
              _
            $region105: #{separable_conv2d.1} parent=95 // loop_header
              %s697 = sphi 0, %s701
              %p698 = scmp.ge.s32.totalorder %s697, 1
              %s702 = sphi %s540, %s540
              %s703 = sphi %s542, %s542
            $region106: #{separable_conv2d.1} parent=95 // loop_header_branch
              %700 = sbr.rel (%p698) target = $region110
            $region107: #{separable_conv2d.1} parent=95 // loop_body
              %v704 = vld [vmem:[%s702] sm:%s695]
              %705 = vst [vmem:[%s703] sm:%s695] %v704
              %v706 = vld [vmem:[%s702 + $0x28] sm:%s695]
              %707 = vst [vmem:[%s703 + $0x28] sm:%s695] %v706
              %v708 = vld [vmem:[%s702 + $0x50] sm:%s695]
              %709 = vst [vmem:[%s703 + $0x50] sm:%s695] %v708
              %v710 = vld [vmem:[%s702 + $0x78] sm:%s695]
              %711 = vst [vmem:[%s703 + $0x78] sm:%s695] %v710
              %v712 = vld [vmem:[%s702 + $0xa0] sm:%s695]
              %713 = vst [vmem:[%s703 + $0xa0] sm:%s695] %v712
              %v714 = vld [vmem:[%s702 + $0xc8] sm:%s695]
              %715 = vst [vmem:[%s703 + $0xc8] sm:%s695] %v714
              %v716 = vld [vmem:[%s702 + $0xf0] sm:%s695]
              %717 = vst [vmem:[%s703 + $0xf0] sm:%s695] %v716
              %v718 = vld [vmem:[%s702 + $0x118] sm:%s695]
              %719 = vst [vmem:[%s703 + $0x118] sm:%s695] %v718
              %v720 = vld [vmem:[%s702 + $0x140] sm:%s695]
              %721 = vst [vmem:[%s703 + $0x140] sm:%s695] %v720
              %v722 = vld [vmem:[%s702 + $0x168] sm:%s695]
              %723 = vst [vmem:[%s703 + $0x168] sm:%s695] %v722
              %v724 = vld [vmem:[%s702 + $0x190] sm:%s695]
              %725 = vst [vmem:[%s703 + $0x190] sm:%s695] %v724
              %v726 = vld [vmem:[%s702 + $0x1b8] sm:%s695]
              %727 = vst [vmem:[%s703 + $0x1b8] sm:%s695] %v726
              %v728 = vld [vmem:[%s702 + $0x1e0] sm:%s695]
              %729 = vst [vmem:[%s703 + $0x1e0] sm:%s695] %v728
              %v730 = vld [vmem:[%s702 + $0x208] sm:%s695]
              %731 = vst [vmem:[%s703 + $0x208] sm:%s695] %v730
              %v732 = vld [vmem:[%s702 + $0x230] sm:%s695]
              %733 = vst [vmem:[%s703 + $0x230] sm:%s695] %v732
              %v734 = vld [vmem:[%s702 + $0x258] sm:%s695]
              %735 = vst [vmem:[%s703 + $0x258] sm:%s695] %v734
              %v736 = vld [vmem:[%s702 + $0x280] sm:%s695]
              %737 = vst [vmem:[%s703 + $0x280] sm:%s695] %v736
              %v738 = vld [vmem:[%s702 + $0x2a8] sm:%s695]
              %739 = vst [vmem:[%s703 + $0x2a8] sm:%s695] %v738
            $region108: #{separable_conv2d.1} parent=95 // loop_footer
              %s701 = sadd.s32 1, %s697
            $region109: #{separable_conv2d.1} parent=95 // loop_footer_branch
              %696 = sbr.rel target = $region105
            $region110: #{separable_conv2d.1} parent=95 // loop_exit
              _
          $region96: #{separable_conv2d.1} parent=80 // pred_fallthru
            _
        $region81: #{separable_conv2d.1} parent=76 // pred_fallthru
          _
        // Predicated region
        $region82: #{separable_conv2d.1} parent=76 // pred_check
          %p485 = pneg %p481
        $region83: #{separable_conv2d.1} parent=76 // pred_check_branch
          %487 = sbr.rel (%p485) target = $region85
        $region84: #{separable_conv2d.1} parent=76 // pred_region
          %s488 = sshllo.u32 0, 34
          loop: start=0, step=1, limit=1
          $region86: #{separable_conv2d.1} parent=84 // loop_pre_header
            _
          $region87: #{separable_conv2d.1} parent=84 // loop_header
            %s490 = sphi 0, %s494
            %p491 = scmp.ge.s32.totalorder %s490, 1
            %s495 = sphi %s476, %s476
            %s496 = sphi %s478, %s478
          $region88: #{separable_conv2d.1} parent=84 // loop_header_branch
            %493 = sbr.rel (%p491) target = $region92
          $region89: #{separable_conv2d.1} parent=84 // loop_body
            %v497 = vld [vmem:[%s495] sm:%s488]
            %498 = vst [vmem:[%s496] sm:%s488] %v497
            %v499 = vld [vmem:[%s495 + $0x28] sm:%s488]
            %500 = vst [vmem:[%s496 + $0x28] sm:%s488] %v499
            %v501 = vld [vmem:[%s495 + $0x50] sm:%s488]
            %502 = vst [vmem:[%s496 + $0x50] sm:%s488] %v501
            %v503 = vld [vmem:[%s495 + $0x78] sm:%s488]
            %504 = vst [vmem:[%s496 + $0x78] sm:%s488] %v503
            %v505 = vld [vmem:[%s495 + $0xa0] sm:%s488]
            %506 = vst [vmem:[%s496 + $0xa0] sm:%s488] %v505
            %v507 = vld [vmem:[%s495 + $0xc8] sm:%s488]
            %508 = vst [vmem:[%s496 + $0xc8] sm:%s488] %v507
            %v509 = vld [vmem:[%s495 + $0xf0] sm:%s488]
            %510 = vst [vmem:[%s496 + $0xf0] sm:%s488] %v509
            %v511 = vld [vmem:[%s495 + $0x118] sm:%s488]
            %512 = vst [vmem:[%s496 + $0x118] sm:%s488] %v511
            %v513 = vld [vmem:[%s495 + $0x140] sm:%s488]
            %514 = vst [vmem:[%s496 + $0x140] sm:%s488] %v513
            %v515 = vld [vmem:[%s495 + $0x168] sm:%s488]
            %516 = vst [vmem:[%s496 + $0x168] sm:%s488] %v515
            %v517 = vld [vmem:[%s495 + $0x190] sm:%s488]
            %518 = vst [vmem:[%s496 + $0x190] sm:%s488] %v517
            %v519 = vld [vmem:[%s495 + $0x1b8] sm:%s488]
            %520 = vst [vmem:[%s496 + $0x1b8] sm:%s488] %v519
            %v521 = vld [vmem:[%s495 + $0x1e0] sm:%s488]
            %522 = vst [vmem:[%s496 + $0x1e0] sm:%s488] %v521
            %v523 = vld [vmem:[%s495 + $0x208] sm:%s488]
            %524 = vst [vmem:[%s496 + $0x208] sm:%s488] %v523
            %v525 = vld [vmem:[%s495 + $0x230] sm:%s488]
            %526 = vst [vmem:[%s496 + $0x230] sm:%s488] %v525
            %v527 = vld [vmem:[%s495 + $0x258] sm:%s488]
            %528 = vst [vmem:[%s496 + $0x258] sm:%s488] %v527
            %v529 = vld [vmem:[%s495 + $0x280] sm:%s488]
            %530 = vst [vmem:[%s496 + $0x280] sm:%s488] %v529
            %v531 = vld [vmem:[%s495 + $0x2a8] sm:%s488]
            %532 = vst [vmem:[%s496 + $0x2a8] sm:%s488] %v531
          $region90: #{separable_conv2d.1} parent=84 // loop_footer
            %s494 = sadd.s32 1, %s490
          $region91: #{separable_conv2d.1} parent=84 // loop_footer_branch
            %489 = sbr.rel target = $region87
          $region92: #{separable_conv2d.1} parent=84 // loop_exit
            _
        $region85: #{separable_conv2d.1} parent=76 // pred_fallthru
          _
        // Predicated region
        $region111: #{separable_conv2d.1} parent=76 // pred_check
          _
        $region112: #{separable_conv2d.1} parent=76 // pred_check_branch
          %742 = sbr.rel (0) target = $region114
        $region113: #{separable_conv2d.1} parent=76 // pred_region
          %743 = vsyncadd %s479, 9792
        $region114: #{separable_conv2d.1} parent=76 // pred_fallthru
          _
      $region77: #{separable_conv2d.1} parent=31 // pred_fallthru
        _
      %s744 = smul.u32 %s20, 16
      %s745 = smul.u32 %s189, 720
      %s746 = scalar_lea.vmem [#allocation2], %s745
      %s747 = scalar_lea.sflag [#allocation3], %s189
      %s748 = smul.u32 18, 34
      %s749 = smul.u32 %s748, 1
      %s750 = sshll.u32 %s749, 4
      %751 = dma.done %s747, %s750
      %v752 = vld [vmem:[%s1] sm:$0x1]
      %v753 = vld [vmem:[%s1 + $0x1] sm:$0x1]
      %v754 = vld [vmem:[%s1 + $0x2] sm:$0x1]
      %s755 = scalar_lea.vmem %s1, 4
      %v756 = vld [vmem:[%s755] sm:$0x1]
      %v757 = vld [vmem:[%s755 + $0x1] sm:$0x1]
      %v758 = vld [vmem:[%s755 + $0x2] sm:$0x1]
      %s759 = scalar_lea.vmem %s1, 8
      %v760 = vld [vmem:[%s759] sm:$0x1]
      %v761 = vld [vmem:[%s759 + $0x1] sm:$0x1]
      %v762 = vld [vmem:[%s759 + $0x2] sm:$0x1]
      %v763 = vld [vmem:[%s746] sm:$0xff]
      %v764 = vld [vmem:[%s746 + $0x8] sm:$0xff]
      %v765 = vld [vmem:[%s746 + $0x10] sm:$0xff]
      %v766 = vld [vmem:[%s746 + $0x18] sm:$0xff]
      %v767 = vld [vmem:[%s746 + $0x20] sm:$0x3]
      %v768 = vld [vmem:[%s746 + $0x28] sm:$0xff]
      %v769 = vld [vmem:[%s746 + $0x30] sm:$0xff]
      %v770 = vld [vmem:[%s746 + $0x38] sm:$0xff]
      %v771 = vld [vmem:[%s746 + $0x40] sm:$0xff]
      %v772 = vld [vmem:[%s746 + $0x48] sm:$0x3]
      %v773 = vld [vmem:[%s746 + $0x50] sm:$0xff]
      %v774 = vld [vmem:[%s746 + $0x58] sm:$0xff]
      %v775 = vld [vmem:[%s746 + $0x60] sm:$0xff]
      %v776 = vld [vmem:[%s746 + $0x68] sm:$0xff]
      %v777 = vld [vmem:[%s746 + $0x70] sm:$0x3]
      %v778 = vld [vmem:[%s746 + $0x78] sm:$0xff]
      %v779 = vld [vmem:[%s746 + $0x80] sm:$0xff]
      %v780 = vld [vmem:[%s746 + $0x88] sm:$0xff]
      %v781 = vld [vmem:[%s746 + $0x90] sm:$0xff]
      %v782 = vld [vmem:[%s746 + $0x98] sm:$0x3]
      %v783 = vld [vmem:[%s746 + $0xa0] sm:$0xff]
      %v784 = vld [vmem:[%s746 + $0xa8] sm:$0xff]
      %v785 = vld [vmem:[%s746 + $0xb0] sm:$0xff]
      %v786 = vld [vmem:[%s746 + $0xb8] sm:$0xff]
      %v787 = vld [vmem:[%s746 + $0xc0] sm:$0x3]
      %v788 = vld [vmem:[%s746 + $0xc8] sm:$0xff]
      %v789 = vld [vmem:[%s746 + $0xd0] sm:$0xff]
      %v790 = vld [vmem:[%s746 + $0xd8] sm:$0xff]
      %v791 = vld [vmem:[%s746 + $0xe0] sm:$0xff]
      %v792 = vld [vmem:[%s746 + $0xe8] sm:$0x3]
      %v793 = vld [vmem:[%s746 + $0xf0] sm:$0xff]
      %v794 = vld [vmem:[%s746 + $0xf8] sm:$0xff]
      %v795 = vld [vmem:[%s746 + $0x100] sm:$0xff]
      %v796 = vld [vmem:[%s746 + $0x108] sm:$0xff]
      %v797 = vld [vmem:[%s746 + $0x110] sm:$0x3]
      %v798 = vld [vmem:[%s746 + $0x118] sm:$0xff]
      %v799 = vld [vmem:[%s746 + $0x120] sm:$0xff]
      %v800 = vld [vmem:[%s746 + $0x128] sm:$0xff]
      %v801 = vld [vmem:[%s746 + $0x130] sm:$0xff]
      %v802 = vld [vmem:[%s746 + $0x138] sm:$0x3]
      %v803 = vlaneseq
      %v804 = vshrl.u32 %v803, 7
      %v805 = vsub.s32 0, %v804
      %v806 = vrot.slane %v752, %v805
      %v807 = vmul.f32 %v763, %v806
      %v808 = vmul.f32 %v764, %v806
      %v809 = vmul.f32 %v765, %v806
      %v810 = vmul.f32 %v766, %v806
      %v811 = vmul.f32 %v768, %v806
      %v812 = vmul.f32 %v769, %v806
      %v813 = vmul.f32 %v770, %v806
      %v814 = vmul.f32 %v771, %v806
      %v815 = vmul.f32 %v773, %v806
      %v816 = vmul.f32 %v774, %v806
      %v817 = vmul.f32 %v775, %v806
      %v818 = vmul.f32 %v776, %v806
      %v819 = vmul.f32 %v778, %v806
      %v820 = vmul.f32 %v779, %v806
      %v821 = vmul.f32 %v780, %v806
      %v822 = vmul.f32 %v781, %v806
      %v823 = vmul.f32 %v783, %v806
      %v824 = vmul.f32 %v784, %v806
      %v825 = vmul.f32 %v785, %v806
      %v826 = vmul.f32 %v786, %v806
      %v827 = vmul.f32 %v788, %v806
      %v828 = vmul.f32 %v789, %v806
      %v829 = vmul.f32 %v790, %v806
      %v830 = vmul.f32 %v791, %v806
      %v831 = vmul.f32 %v793, %v806
      %v832 = vmul.f32 %v794, %v806
      %v833 = vmul.f32 %v795, %v806
      %v834 = vmul.f32 %v796, %v806
      %v835 = vmul.f32 %v798, %v806
      %v836 = vmul.f32 %v799, %v806
      %v837 = vmul.f32 %v800, %v806
      %v838 = vmul.f32 %v801, %v806
      %v839 = vlaneseq
      %v840 = vshrl.u32 %v839, 7
      %v841 = vsub.s32 0, %v840
      %v842 = vrot.slane %v753, %v841
      %v843 = vmul.f32 %v763, %v842
      %v844 = vmul.f32 %v764, %v842
      %v845 = vmul.f32 %v765, %v842
      %v846 = vmul.f32 %v766, %v842
      %v847 = vmul.f32 %v767, %v842
      %v848 = vmul.f32 %v768, %v842
      %v849 = vmul.f32 %v769, %v842
      %v850 = vmul.f32 %v770, %v842
      %v851 = vmul.f32 %v771, %v842
      %v852 = vmul.f32 %v772, %v842
      %v853 = vmul.f32 %v773, %v842
      %v854 = vmul.f32 %v774, %v842
      %v855 = vmul.f32 %v775, %v842
      %v856 = vmul.f32 %v776, %v842
      %v857 = vmul.f32 %v777, %v842
      %v858 = vmul.f32 %v778, %v842
      %v859 = vmul.f32 %v779, %v842
      %v860 = vmul.f32 %v780, %v842
      %v861 = vmul.f32 %v781, %v842
      %v862 = vmul.f32 %v782, %v842
      %v863 = vmul.f32 %v783, %v842
      %v864 = vmul.f32 %v784, %v842
      %v865 = vmul.f32 %v785, %v842
      %v866 = vmul.f32 %v786, %v842
      %v867 = vmul.f32 %v787, %v842
      %v868 = vmul.f32 %v788, %v842
      %v869 = vmul.f32 %v789, %v842
      %v870 = vmul.f32 %v790, %v842
      %v871 = vmul.f32 %v791, %v842
      %v872 = vmul.f32 %v792, %v842
      %v873 = vmul.f32 %v793, %v842
      %v874 = vmul.f32 %v794, %v842
      %v875 = vmul.f32 %v795, %v842
      %v876 = vmul.f32 %v796, %v842
      %v877 = vmul.f32 %v797, %v842
      %v878 = vmul.f32 %v798, %v842
      %v879 = vmul.f32 %v799, %v842
      %v880 = vmul.f32 %v800, %v842
      %v881 = vmul.f32 %v801, %v842
      %v882 = vmul.f32 %v802, %v842
      %vm923 = vcmask 1046528
      %v924 = vrot.slane %v843, 1
      %v925 = vrot.slane %v844, 1
      %v926 = vsel %vm923, %v924, %v925
      %v927 = vrot.slane %v845, 1
      %v928 = vsel %vm923, %v925, %v927
      %v929 = vrot.slane %v846, 1
      %v930 = vsel %vm923, %v927, %v929
      %v931 = vrot.slane %v847, 1
      %v932 = vsel %vm923, %v929, %v931
      %v933 = vrot.slane %v848, 1
      %v934 = vrot.slane %v849, 1
      %v935 = vsel %vm923, %v933, %v934
      %v936 = vrot.slane %v850, 1
      %v937 = vsel %vm923, %v934, %v936
      %v938 = vrot.slane %v851, 1
      %v939 = vsel %vm923, %v936, %v938
      %v940 = vrot.slane %v852, 1
      %v941 = vsel %vm923, %v938, %v940
      %v942 = vrot.slane %v853, 1
      %v943 = vrot.slane %v854, 1
      %v944 = vsel %vm923, %v942, %v943
      %v945 = vrot.slane %v855, 1
      %v946 = vsel %vm923, %v943, %v945
      %v947 = vrot.slane %v856, 1
      %v948 = vsel %vm923, %v945, %v947
      %v949 = vrot.slane %v857, 1
      %v950 = vsel %vm923, %v947, %v949
      %v951 = vrot.slane %v858, 1
      %v952 = vrot.slane %v859, 1
      %v953 = vsel %vm923, %v951, %v952
      %v954 = vrot.slane %v860, 1
      %v955 = vsel %vm923, %v952, %v954
      %v956 = vrot.slane %v861, 1
      %v957 = vsel %vm923, %v954, %v956
      %v958 = vrot.slane %v862, 1
      %v959 = vsel %vm923, %v956, %v958
      %v960 = vrot.slane %v863, 1
      %v961 = vrot.slane %v864, 1
      %v962 = vsel %vm923, %v960, %v961
      %v963 = vrot.slane %v865, 1
      %v964 = vsel %vm923, %v961, %v963
      %v965 = vrot.slane %v866, 1
      %v966 = vsel %vm923, %v963, %v965
      %v967 = vrot.slane %v867, 1
      %v968 = vsel %vm923, %v965, %v967
      %v969 = vrot.slane %v868, 1
      %v970 = vrot.slane %v869, 1
      %v971 = vsel %vm923, %v969, %v970
      %v972 = vrot.slane %v870, 1
      %v973 = vsel %vm923, %v970, %v972
      %v974 = vrot.slane %v871, 1
      %v975 = vsel %vm923, %v972, %v974
      %v976 = vrot.slane %v872, 1
      %v977 = vsel %vm923, %v974, %v976
      %v978 = vrot.slane %v873, 1
      %v979 = vrot.slane %v874, 1
      %v980 = vsel %vm923, %v978, %v979
      %v981 = vrot.slane %v875, 1
      %v982 = vsel %vm923, %v979, %v981
      %v983 = vrot.slane %v876, 1
      %v984 = vsel %vm923, %v981, %v983
      %v985 = vrot.slane %v877, 1
      %v986 = vsel %vm923, %v983, %v985
      %v987 = vrot.slane %v878, 1
      %v988 = vrot.slane %v879, 1
      %v989 = vsel %vm923, %v987, %v988
      %v990 = vrot.slane %v880, 1
      %v991 = vsel %vm923, %v988, %v990
      %v992 = vrot.slane %v881, 1
      %v993 = vsel %vm923, %v990, %v992
      %v994 = vrot.slane %v882, 1
      %v995 = vsel %vm923, %v992, %v994
      %v1028 = vadd.f32 %v807, %v926
      %v1029 = vadd.f32 %v808, %v928
      %v1030 = vadd.f32 %v809, %v930
      %v1031 = vadd.f32 %v810, %v932
      %v1032 = vadd.f32 %v811, %v935
      %v1033 = vadd.f32 %v812, %v937
      %v1034 = vadd.f32 %v813, %v939
      %v1035 = vadd.f32 %v814, %v941
      %v1036 = vadd.f32 %v815, %v944
      %v1037 = vadd.f32 %v816, %v946
      %v1038 = vadd.f32 %v817, %v948
      %v1039 = vadd.f32 %v818, %v950
      %v1040 = vadd.f32 %v819, %v953
      %v1041 = vadd.f32 %v820, %v955
      %v1042 = vadd.f32 %v821, %v957
      %v1043 = vadd.f32 %v822, %v959
      %v1044 = vadd.f32 %v823, %v962
      %v1045 = vadd.f32 %v824, %v964
      %v1046 = vadd.f32 %v825, %v966
      %v1047 = vadd.f32 %v826, %v968
      %v1048 = vadd.f32 %v827, %v971
      %v1049 = vadd.f32 %v828, %v973
      %v1050 = vadd.f32 %v829, %v975
      %v1051 = vadd.f32 %v830, %v977
      %v1052 = vadd.f32 %v831, %v980
      %v1053 = vadd.f32 %v832, %v982
      %v1054 = vadd.f32 %v833, %v984
      %v1055 = vadd.f32 %v834, %v986
      %v1056 = vadd.f32 %v835, %v989
      %v1057 = vadd.f32 %v836, %v991
      %v1058 = vadd.f32 %v837, %v993
      %v1059 = vadd.f32 %v838, %v995
      %v1060 = vlaneseq
      %v1061 = vshrl.u32 %v1060, 7
      %v1062 = vsub.s32 0, %v1061
      %v1063 = vrot.slane %v754, %v1062
      %v1064 = vmul.f32 %v763, %v1063
      %v1065 = vmul.f32 %v764, %v1063
      %v1066 = vmul.f32 %v765, %v1063
      %v1067 = vmul.f32 %v766, %v1063
      %v1068 = vmul.f32 %v767, %v1063
      %v1069 = vmul.f32 %v768, %v1063
      %v1070 = vmul.f32 %v769, %v1063
      %v1071 = vmul.f32 %v770, %v1063
      %v1072 = vmul.f32 %v771, %v1063
      %v1073 = vmul.f32 %v772, %v1063
      %v1074 = vmul.f32 %v773, %v1063
      %v1075 = vmul.f32 %v774, %v1063
      %v1076 = vmul.f32 %v775, %v1063
      %v1077 = vmul.f32 %v776, %v1063
      %v1078 = vmul.f32 %v777, %v1063
      %v1079 = vmul.f32 %v778, %v1063
      %v1080 = vmul.f32 %v779, %v1063
      %v1081 = vmul.f32 %v780, %v1063
      %v1082 = vmul.f32 %v781, %v1063
      %v1083 = vmul.f32 %v782, %v1063
      %v1084 = vmul.f32 %v783, %v1063
      %v1085 = vmul.f32 %v784, %v1063
      %v1086 = vmul.f32 %v785, %v1063
      %v1087 = vmul.f32 %v786, %v1063
      %v1088 = vmul.f32 %v787, %v1063
      %v1089 = vmul.f32 %v788, %v1063
      %v1090 = vmul.f32 %v789, %v1063
      %v1091 = vmul.f32 %v790, %v1063
      %v1092 = vmul.f32 %v791, %v1063
      %v1093 = vmul.f32 %v792, %v1063
      %v1094 = vmul.f32 %v793, %v1063
      %v1095 = vmul.f32 %v794, %v1063
      %v1096 = vmul.f32 %v795, %v1063
      %v1097 = vmul.f32 %v796, %v1063
      %v1098 = vmul.f32 %v797, %v1063
      %v1099 = vmul.f32 %v798, %v1063
      %v1100 = vmul.f32 %v799, %v1063
      %v1101 = vmul.f32 %v800, %v1063
      %v1102 = vmul.f32 %v801, %v1063
      %v1103 = vmul.f32 %v802, %v1063
      %vm1144 = vcmask 1045504
      %v1145 = vrot.slane %v1064, 2
      %v1146 = vrot.slane %v1065, 2
      %v1147 = vsel %vm1144, %v1145, %v1146
      %v1148 = vrot.slane %v1066, 2
      %v1149 = vsel %vm1144, %v1146, %v1148
      %v1150 = vrot.slane %v1067, 2
      %v1151 = vsel %vm1144, %v1148, %v1150
      %v1152 = vrot.slane %v1068, 2
      %v1153 = vsel %vm1144, %v1150, %v1152
      %v1154 = vrot.slane %v1069, 2
      %v1155 = vrot.slane %v1070, 2
      %v1156 = vsel %vm1144, %v1154, %v1155
      %v1157 = vrot.slane %v1071, 2
      %v1158 = vsel %vm1144, %v1155, %v1157
      %v1159 = vrot.slane %v1072, 2
      %v1160 = vsel %vm1144, %v1157, %v1159
      %v1161 = vrot.slane %v1073, 2
      %v1162 = vsel %vm1144, %v1159, %v1161
      %v1163 = vrot.slane %v1074, 2
      %v1164 = vrot.slane %v1075, 2
      %v1165 = vsel %vm1144, %v1163, %v1164
      %v1166 = vrot.slane %v1076, 2
      %v1167 = vsel %vm1144, %v1164, %v1166
      %v1168 = vrot.slane %v1077, 2
      %v1169 = vsel %vm1144, %v1166, %v1168
      %v1170 = vrot.slane %v1078, 2
      %v1171 = vsel %vm1144, %v1168, %v1170
      %v1172 = vrot.slane %v1079, 2
      %v1173 = vrot.slane %v1080, 2
      %v1174 = vsel %vm1144, %v1172, %v1173
      %v1175 = vrot.slane %v1081, 2
      %v1176 = vsel %vm1144, %v1173, %v1175
      %v1177 = vrot.slane %v1082, 2
      %v1178 = vsel %vm1144, %v1175, %v1177
      %v1179 = vrot.slane %v1083, 2
      %v1180 = vsel %vm1144, %v1177, %v1179
      %v1181 = vrot.slane %v1084, 2
      %v1182 = vrot.slane %v1085, 2
      %v1183 = vsel %vm1144, %v1181, %v1182
      %v1184 = vrot.slane %v1086, 2
      %v1185 = vsel %vm1144, %v1182, %v1184
      %v1186 = vrot.slane %v1087, 2
      %v1187 = vsel %vm1144, %v1184, %v1186
      %v1188 = vrot.slane %v1088, 2
      %v1189 = vsel %vm1144, %v1186, %v1188
      %v1190 = vrot.slane %v1089, 2
      %v1191 = vrot.slane %v1090, 2
      %v1192 = vsel %vm1144, %v1190, %v1191
      %v1193 = vrot.slane %v1091, 2
      %v1194 = vsel %vm1144, %v1191, %v1193
      %v1195 = vrot.slane %v1092, 2
      %v1196 = vsel %vm1144, %v1193, %v1195
      %v1197 = vrot.slane %v1093, 2
      %v1198 = vsel %vm1144, %v1195, %v1197
      %v1199 = vrot.slane %v1094, 2
      %v1200 = vrot.slane %v1095, 2
      %v1201 = vsel %vm1144, %v1199, %v1200
      %v1202 = vrot.slane %v1096, 2
      %v1203 = vsel %vm1144, %v1200, %v1202
      %v1204 = vrot.slane %v1097, 2
      %v1205 = vsel %vm1144, %v1202, %v1204
      %v1206 = vrot.slane %v1098, 2
      %v1207 = vsel %vm1144, %v1204, %v1206
      %v1208 = vrot.slane %v1099, 2
      %v1209 = vrot.slane %v1100, 2
      %v1210 = vsel %vm1144, %v1208, %v1209
      %v1211 = vrot.slane %v1101, 2
      %v1212 = vsel %vm1144, %v1209, %v1211
      %v1213 = vrot.slane %v1102, 2
      %v1214 = vsel %vm1144, %v1211, %v1213
      %v1215 = vrot.slane %v1103, 2
      %v1216 = vsel %vm1144, %v1213, %v1215
      %v1249 = vadd.f32 %v1028, %v1147
      %v1250 = vadd.f32 %v1029, %v1149
      %v1251 = vadd.f32 %v1030, %v1151
      %v1252 = vadd.f32 %v1031, %v1153
      %v1253 = vadd.f32 %v1032, %v1156
      %v1254 = vadd.f32 %v1033, %v1158
      %v1255 = vadd.f32 %v1034, %v1160
      %v1256 = vadd.f32 %v1035, %v1162
      %v1257 = vadd.f32 %v1036, %v1165
      %v1258 = vadd.f32 %v1037, %v1167
      %v1259 = vadd.f32 %v1038, %v1169
      %v1260 = vadd.f32 %v1039, %v1171
      %v1261 = vadd.f32 %v1040, %v1174
      %v1262 = vadd.f32 %v1041, %v1176
      %v1263 = vadd.f32 %v1042, %v1178
      %v1264 = vadd.f32 %v1043, %v1180
      %v1265 = vadd.f32 %v1044, %v1183
      %v1266 = vadd.f32 %v1045, %v1185
      %v1267 = vadd.f32 %v1046, %v1187
      %v1268 = vadd.f32 %v1047, %v1189
      %v1269 = vadd.f32 %v1048, %v1192
      %v1270 = vadd.f32 %v1049, %v1194
      %v1271 = vadd.f32 %v1050, %v1196
      %v1272 = vadd.f32 %v1051, %v1198
      %v1273 = vadd.f32 %v1052, %v1201
      %v1274 = vadd.f32 %v1053, %v1203
      %v1275 = vadd.f32 %v1054, %v1205
      %v1276 = vadd.f32 %v1055, %v1207
      %v1277 = vadd.f32 %v1056, %v1210
      %v1278 = vadd.f32 %v1057, %v1212
      %v1279 = vadd.f32 %v1058, %v1214
      %v1280 = vadd.f32 %v1059, %v1216
      %s1281 = scalar_lea.vmem %s746, 40 [#allocation2]
      %v1282 = vld [vmem:[%s1281] sm:$0xff]
      %v1283 = vld [vmem:[%s1281 + $0x8] sm:$0xff]
      %v1284 = vld [vmem:[%s1281 + $0x10] sm:$0xff]
      %v1285 = vld [vmem:[%s1281 + $0x18] sm:$0xff]
      %v1286 = vld [vmem:[%s1281 + $0x20] sm:$0x3]
      %v1287 = vld [vmem:[%s1281 + $0x28] sm:$0xff]
      %v1288 = vld [vmem:[%s1281 + $0x30] sm:$0xff]
      %v1289 = vld [vmem:[%s1281 + $0x38] sm:$0xff]
      %v1290 = vld [vmem:[%s1281 + $0x40] sm:$0xff]
      %v1291 = vld [vmem:[%s1281 + $0x48] sm:$0x3]
      %v1292 = vld [vmem:[%s1281 + $0x50] sm:$0xff]
      %v1293 = vld [vmem:[%s1281 + $0x58] sm:$0xff]
      %v1294 = vld [vmem:[%s1281 + $0x60] sm:$0xff]
      %v1295 = vld [vmem:[%s1281 + $0x68] sm:$0xff]
      %v1296 = vld [vmem:[%s1281 + $0x70] sm:$0x3]
      %v1297 = vld [vmem:[%s1281 + $0x78] sm:$0xff]
      %v1298 = vld [vmem:[%s1281 + $0x80] sm:$0xff]
      %v1299 = vld [vmem:[%s1281 + $0x88] sm:$0xff]
      %v1300 = vld [vmem:[%s1281 + $0x90] sm:$0xff]
      %v1301 = vld [vmem:[%s1281 + $0x98] sm:$0x3]
      %v1302 = vld [vmem:[%s1281 + $0xa0] sm:$0xff]
      %v1303 = vld [vmem:[%s1281 + $0xa8] sm:$0xff]
      %v1304 = vld [vmem:[%s1281 + $0xb0] sm:$0xff]
      %v1305 = vld [vmem:[%s1281 + $0xb8] sm:$0xff]
      %v1306 = vld [vmem:[%s1281 + $0xc0] sm:$0x3]
      %v1307 = vld [vmem:[%s1281 + $0xc8] sm:$0xff]
      %v1308 = vld [vmem:[%s1281 + $0xd0] sm:$0xff]
      %v1309 = vld [vmem:[%s1281 + $0xd8] sm:$0xff]
      %v1310 = vld [vmem:[%s1281 + $0xe0] sm:$0xff]
      %v1311 = vld [vmem:[%s1281 + $0xe8] sm:$0x3]
      %v1312 = vld [vmem:[%s1281 + $0xf0] sm:$0xff]
      %v1313 = vld [vmem:[%s1281 + $0xf8] sm:$0xff]
      %v1314 = vld [vmem:[%s1281 + $0x100] sm:$0xff]
      %v1315 = vld [vmem:[%s1281 + $0x108] sm:$0xff]
      %v1316 = vld [vmem:[%s1281 + $0x110] sm:$0x3]
      %v1317 = vld [vmem:[%s1281 + $0x118] sm:$0xff]
      %v1318 = vld [vmem:[%s1281 + $0x120] sm:$0xff]
      %v1319 = vld [vmem:[%s1281 + $0x128] sm:$0xff]
      %v1320 = vld [vmem:[%s1281 + $0x130] sm:$0xff]
      %v1321 = vld [vmem:[%s1281 + $0x138] sm:$0x3]
      %v1322 = vlaneseq
      %v1323 = vshrl.u32 %v1322, 7
      %v1324 = vsub.s32 0, %v1323
      %v1325 = vrot.slane %v756, %v1324
      %v1326 = vmul.f32 %v1282, %v1325
      %v1327 = vmul.f32 %v1283, %v1325
      %v1328 = vmul.f32 %v1284, %v1325
      %v1329 = vmul.f32 %v1285, %v1325
      %v1330 = vmul.f32 %v1287, %v1325
      %v1331 = vmul.f32 %v1288, %v1325
      %v1332 = vmul.f32 %v1289, %v1325
      %v1333 = vmul.f32 %v1290, %v1325
      %v1334 = vmul.f32 %v1292, %v1325
      %v1335 = vmul.f32 %v1293, %v1325
      %v1336 = vmul.f32 %v1294, %v1325
      %v1337 = vmul.f32 %v1295, %v1325
      %v1338 = vmul.f32 %v1297, %v1325
      %v1339 = vmul.f32 %v1298, %v1325
      %v1340 = vmul.f32 %v1299, %v1325
      %v1341 = vmul.f32 %v1300, %v1325
      %v1342 = vmul.f32 %v1302, %v1325
      %v1343 = vmul.f32 %v1303, %v1325
      %v1344 = vmul.f32 %v1304, %v1325
      %v1345 = vmul.f32 %v1305, %v1325
      %v1346 = vmul.f32 %v1307, %v1325
      %v1347 = vmul.f32 %v1308, %v1325
      %v1348 = vmul.f32 %v1309, %v1325
      %v1349 = vmul.f32 %v1310, %v1325
      %v1350 = vmul.f32 %v1312, %v1325
      %v1351 = vmul.f32 %v1313, %v1325
      %v1352 = vmul.f32 %v1314, %v1325
      %v1353 = vmul.f32 %v1315, %v1325
      %v1354 = vmul.f32 %v1317, %v1325
      %v1355 = vmul.f32 %v1318, %v1325
      %v1356 = vmul.f32 %v1319, %v1325
      %v1357 = vmul.f32 %v1320, %v1325
      %v1358 = vadd.f32 %v1249, %v1326
      %v1359 = vadd.f32 %v1250, %v1327
      %v1360 = vadd.f32 %v1251, %v1328
      %v1361 = vadd.f32 %v1252, %v1329
      %v1362 = vadd.f32 %v1253, %v1330
      %v1363 = vadd.f32 %v1254, %v1331
      %v1364 = vadd.f32 %v1255, %v1332
      %v1365 = vadd.f32 %v1256, %v1333
      %v1366 = vadd.f32 %v1257, %v1334
      %v1367 = vadd.f32 %v1258, %v1335
      %v1368 = vadd.f32 %v1259, %v1336
      %v1369 = vadd.f32 %v1260, %v1337
      %v1370 = vadd.f32 %v1261, %v1338
      %v1371 = vadd.f32 %v1262, %v1339
      %v1372 = vadd.f32 %v1263, %v1340
      %v1373 = vadd.f32 %v1264, %v1341
      %v1374 = vadd.f32 %v1265, %v1342
      %v1375 = vadd.f32 %v1266, %v1343
      %v1376 = vadd.f32 %v1267, %v1344
      %v1377 = vadd.f32 %v1268, %v1345
      %v1378 = vadd.f32 %v1269, %v1346
      %v1379 = vadd.f32 %v1270, %v1347
      %v1380 = vadd.f32 %v1271, %v1348
      %v1381 = vadd.f32 %v1272, %v1349
      %v1382 = vadd.f32 %v1273, %v1350
      %v1383 = vadd.f32 %v1274, %v1351
      %v1384 = vadd.f32 %v1275, %v1352
      %v1385 = vadd.f32 %v1276, %v1353
      %v1386 = vadd.f32 %v1277, %v1354
      %v1387 = vadd.f32 %v1278, %v1355
      %v1388 = vadd.f32 %v1279, %v1356
      %v1389 = vadd.f32 %v1280, %v1357
      %v1390 = vlaneseq
      %v1391 = vshrl.u32 %v1390, 7
      %v1392 = vsub.s32 0, %v1391
      %v1393 = vrot.slane %v757, %v1392
      %v1394 = vmul.f32 %v1282, %v1393
      %v1395 = vmul.f32 %v1283, %v1393
      %v1396 = vmul.f32 %v1284, %v1393
      %v1397 = vmul.f32 %v1285, %v1393
      %v1398 = vmul.f32 %v1286, %v1393
      %v1399 = vmul.f32 %v1287, %v1393
      %v1400 = vmul.f32 %v1288, %v1393
      %v1401 = vmul.f32 %v1289, %v1393
      %v1402 = vmul.f32 %v1290, %v1393
      %v1403 = vmul.f32 %v1291, %v1393
      %v1404 = vmul.f32 %v1292, %v1393
      %v1405 = vmul.f32 %v1293, %v1393
      %v1406 = vmul.f32 %v1294, %v1393
      %v1407 = vmul.f32 %v1295, %v1393
      %v1408 = vmul.f32 %v1296, %v1393
      %v1409 = vmul.f32 %v1297, %v1393
      %v1410 = vmul.f32 %v1298, %v1393
      %v1411 = vmul.f32 %v1299, %v1393
      %v1412 = vmul.f32 %v1300, %v1393
      %v1413 = vmul.f32 %v1301, %v1393
      %v1414 = vmul.f32 %v1302, %v1393
      %v1415 = vmul.f32 %v1303, %v1393
      %v1416 = vmul.f32 %v1304, %v1393
      %v1417 = vmul.f32 %v1305, %v1393
      %v1418 = vmul.f32 %v1306, %v1393
      %v1419 = vmul.f32 %v1307, %v1393
      %v1420 = vmul.f32 %v1308, %v1393
      %v1421 = vmul.f32 %v1309, %v1393
      %v1422 = vmul.f32 %v1310, %v1393
      %v1423 = vmul.f32 %v1311, %v1393
      %v1424 = vmul.f32 %v1312, %v1393
      %v1425 = vmul.f32 %v1313, %v1393
      %v1426 = vmul.f32 %v1314, %v1393
      %v1427 = vmul.f32 %v1315, %v1393
      %v1428 = vmul.f32 %v1316, %v1393
      %v1429 = vmul.f32 %v1317, %v1393
      %v1430 = vmul.f32 %v1318, %v1393
      %v1431 = vmul.f32 %v1319, %v1393
      %v1432 = vmul.f32 %v1320, %v1393
      %v1433 = vmul.f32 %v1321, %v1393
      %v1474 = vrot.slane %v1394, 1
      %v1475 = vrot.slane %v1395, 1
      %v1476 = vsel %vm923, %v1474, %v1475
      %v1477 = vrot.slane %v1396, 1
      %v1478 = vsel %vm923, %v1475, %v1477
      %v1479 = vrot.slane %v1397, 1
      %v1480 = vsel %vm923, %v1477, %v1479
      %v1481 = vrot.slane %v1398, 1
      %v1482 = vsel %vm923, %v1479, %v1481
      %v1483 = vrot.slane %v1399, 1
      %v1484 = vrot.slane %v1400, 1
      %v1485 = vsel %vm923, %v1483, %v1484
      %v1486 = vrot.slane %v1401, 1
      %v1487 = vsel %vm923, %v1484, %v1486
      %v1488 = vrot.slane %v1402, 1
      %v1489 = vsel %vm923, %v1486, %v1488
      %v1490 = vrot.slane %v1403, 1
      %v1491 = vsel %vm923, %v1488, %v1490
      %v1492 = vrot.slane %v1404, 1
      %v1493 = vrot.slane %v1405, 1
      %v1494 = vsel %vm923, %v1492, %v1493
      %v1495 = vrot.slane %v1406, 1
      %v1496 = vsel %vm923, %v1493, %v1495
      %v1497 = vrot.slane %v1407, 1
      %v1498 = vsel %vm923, %v1495, %v1497
      %v1499 = vrot.slane %v1408, 1
      %v1500 = vsel %vm923, %v1497, %v1499
      %v1501 = vrot.slane %v1409, 1
      %v1502 = vrot.slane %v1410, 1
      %v1503 = vsel %vm923, %v1501, %v1502
      %v1504 = vrot.slane %v1411, 1
      %v1505 = vsel %vm923, %v1502, %v1504
      %v1506 = vrot.slane %v1412, 1
      %v1507 = vsel %vm923, %v1504, %v1506
      %v1508 = vrot.slane %v1413, 1
      %v1509 = vsel %vm923, %v1506, %v1508
      %v1510 = vrot.slane %v1414, 1
      %v1511 = vrot.slane %v1415, 1
      %v1512 = vsel %vm923, %v1510, %v1511
      %v1513 = vrot.slane %v1416, 1
      %v1514 = vsel %vm923, %v1511, %v1513
      %v1515 = vrot.slane %v1417, 1
      %v1516 = vsel %vm923, %v1513, %v1515
      %v1517 = vrot.slane %v1418, 1
      %v1518 = vsel %vm923, %v1515, %v1517
      %v1519 = vrot.slane %v1419, 1
      %v1520 = vrot.slane %v1420, 1
      %v1521 = vsel %vm923, %v1519, %v1520
      %v1522 = vrot.slane %v1421, 1
      %v1523 = vsel %vm923, %v1520, %v1522
      %v1524 = vrot.slane %v1422, 1
      %v1525 = vsel %vm923, %v1522, %v1524
      %v1526 = vrot.slane %v1423, 1
      %v1527 = vsel %vm923, %v1524, %v1526
      %v1528 = vrot.slane %v1424, 1
      %v1529 = vrot.slane %v1425, 1
      %v1530 = vsel %vm923, %v1528, %v1529
      %v1531 = vrot.slane %v1426, 1
      %v1532 = vsel %vm923, %v1529, %v1531
      %v1533 = vrot.slane %v1427, 1
      %v1534 = vsel %vm923, %v1531, %v1533
      %v1535 = vrot.slane %v1428, 1
      %v1536 = vsel %vm923, %v1533, %v1535
      %v1537 = vrot.slane %v1429, 1
      %v1538 = vrot.slane %v1430, 1
      %v1539 = vsel %vm923, %v1537, %v1538
      %v1540 = vrot.slane %v1431, 1
      %v1541 = vsel %vm923, %v1538, %v1540
      %v1542 = vrot.slane %v1432, 1
      %v1543 = vsel %vm923, %v1540, %v1542
      %v1544 = vrot.slane %v1433, 1
      %v1545 = vsel %vm923, %v1542, %v1544
      %v1578 = vadd.f32 %v1358, %v1476
      %v1579 = vadd.f32 %v1359, %v1478
      %v1580 = vadd.f32 %v1360, %v1480
      %v1581 = vadd.f32 %v1361, %v1482
      %v1582 = vadd.f32 %v1362, %v1485
      %v1583 = vadd.f32 %v1363, %v1487
      %v1584 = vadd.f32 %v1364, %v1489
      %v1585 = vadd.f32 %v1365, %v1491
      %v1586 = vadd.f32 %v1366, %v1494
      %v1587 = vadd.f32 %v1367, %v1496
      %v1588 = vadd.f32 %v1368, %v1498
      %v1589 = vadd.f32 %v1369, %v1500
      %v1590 = vadd.f32 %v1370, %v1503
      %v1591 = vadd.f32 %v1371, %v1505
      %v1592 = vadd.f32 %v1372, %v1507
      %v1593 = vadd.f32 %v1373, %v1509
      %v1594 = vadd.f32 %v1374, %v1512
      %v1595 = vadd.f32 %v1375, %v1514
      %v1596 = vadd.f32 %v1376, %v1516
      %v1597 = vadd.f32 %v1377, %v1518
      %v1598 = vadd.f32 %v1378, %v1521
      %v1599 = vadd.f32 %v1379, %v1523
      %v1600 = vadd.f32 %v1380, %v1525
      %v1601 = vadd.f32 %v1381, %v1527
      %v1602 = vadd.f32 %v1382, %v1530
      %v1603 = vadd.f32 %v1383, %v1532
      %v1604 = vadd.f32 %v1384, %v1534
      %v1605 = vadd.f32 %v1385, %v1536
      %v1606 = vadd.f32 %v1386, %v1539
      %v1607 = vadd.f32 %v1387, %v1541
      %v1608 = vadd.f32 %v1388, %v1543
      %v1609 = vadd.f32 %v1389, %v1545
      %v1610 = vlaneseq
      %v1611 = vshrl.u32 %v1610, 7
      %v1612 = vsub.s32 0, %v1611
      %v1613 = vrot.slane %v758, %v1612
      %v1614 = vmul.f32 %v1282, %v1613
      %v1615 = vmul.f32 %v1283, %v1613
      %v1616 = vmul.f32 %v1284, %v1613
      %v1617 = vmul.f32 %v1285, %v1613
      %v1618 = vmul.f32 %v1286, %v1613
      %v1619 = vmul.f32 %v1287, %v1613
      %v1620 = vmul.f32 %v1288, %v1613
      %v1621 = vmul.f32 %v1289, %v1613
      %v1622 = vmul.f32 %v1290, %v1613
      %v1623 = vmul.f32 %v1291, %v1613
      %v1624 = vmul.f32 %v1292, %v1613
      %v1625 = vmul.f32 %v1293, %v1613
      %v1626 = vmul.f32 %v1294, %v1613
      %v1627 = vmul.f32 %v1295, %v1613
      %v1628 = vmul.f32 %v1296, %v1613
      %v1629 = vmul.f32 %v1297, %v1613
      %v1630 = vmul.f32 %v1298, %v1613
      %v1631 = vmul.f32 %v1299, %v1613
      %v1632 = vmul.f32 %v1300, %v1613
      %v1633 = vmul.f32 %v1301, %v1613
      %v1634 = vmul.f32 %v1302, %v1613
      %v1635 = vmul.f32 %v1303, %v1613
      %v1636 = vmul.f32 %v1304, %v1613
      %v1637 = vmul.f32 %v1305, %v1613
      %v1638 = vmul.f32 %v1306, %v1613
      %v1639 = vmul.f32 %v1307, %v1613
      %v1640 = vmul.f32 %v1308, %v1613
      %v1641 = vmul.f32 %v1309, %v1613
      %v1642 = vmul.f32 %v1310, %v1613
      %v1643 = vmul.f32 %v1311, %v1613
      %v1644 = vmul.f32 %v1312, %v1613
      %v1645 = vmul.f32 %v1313, %v1613
      %v1646 = vmul.f32 %v1314, %v1613
      %v1647 = vmul.f32 %v1315, %v1613
      %v1648 = vmul.f32 %v1316, %v1613
      %v1649 = vmul.f32 %v1317, %v1613
      %v1650 = vmul.f32 %v1318, %v1613
      %v1651 = vmul.f32 %v1319, %v1613
      %v1652 = vmul.f32 %v1320, %v1613
      %v1653 = vmul.f32 %v1321, %v1613
      %v1694 = vrot.slane %v1614, 2
      %v1695 = vrot.slane %v1615, 2
      %v1696 = vsel %vm1144, %v1694, %v1695
      %v1697 = vrot.slane %v1616, 2
      %v1698 = vsel %vm1144, %v1695, %v1697
      %v1699 = vrot.slane %v1617, 2
      %v1700 = vsel %vm1144, %v1697, %v1699
      %v1701 = vrot.slane %v1618, 2
      %v1702 = vsel %vm1144, %v1699, %v1701
      %v1703 = vrot.slane %v1619, 2
      %v1704 = vrot.slane %v1620, 2
      %v1705 = vsel %vm1144, %v1703, %v1704
      %v1706 = vrot.slane %v1621, 2
      %v1707 = vsel %vm1144, %v1704, %v1706
      %v1708 = vrot.slane %v1622, 2
      %v1709 = vsel %vm1144, %v1706, %v1708
      %v1710 = vrot.slane %v1623, 2
      %v1711 = vsel %vm1144, %v1708, %v1710
      %v1712 = vrot.slane %v1624, 2
      %v1713 = vrot.slane %v1625, 2
      %v1714 = vsel %vm1144, %v1712, %v1713
      %v1715 = vrot.slane %v1626, 2
      %v1716 = vsel %vm1144, %v1713, %v1715
      %v1717 = vrot.slane %v1627, 2
      %v1718 = vsel %vm1144, %v1715, %v1717
      %v1719 = vrot.slane %v1628, 2
      %v1720 = vsel %vm1144, %v1717, %v1719
      %v1721 = vrot.slane %v1629, 2
      %v1722 = vrot.slane %v1630, 2
      %v1723 = vsel %vm1144, %v1721, %v1722
      %v1724 = vrot.slane %v1631, 2
      %v1725 = vsel %vm1144, %v1722, %v1724
      %v1726 = vrot.slane %v1632, 2
      %v1727 = vsel %vm1144, %v1724, %v1726
      %v1728 = vrot.slane %v1633, 2
      %v1729 = vsel %vm1144, %v1726, %v1728
      %v1730 = vrot.slane %v1634, 2
      %v1731 = vrot.slane %v1635, 2
      %v1732 = vsel %vm1144, %v1730, %v1731
      %v1733 = vrot.slane %v1636, 2
      %v1734 = vsel %vm1144, %v1731, %v1733
      %v1735 = vrot.slane %v1637, 2
      %v1736 = vsel %vm1144, %v1733, %v1735
      %v1737 = vrot.slane %v1638, 2
      %v1738 = vsel %vm1144, %v1735, %v1737
      %v1739 = vrot.slane %v1639, 2
      %v1740 = vrot.slane %v1640, 2
      %v1741 = vsel %vm1144, %v1739, %v1740
      %v1742 = vrot.slane %v1641, 2
      %v1743 = vsel %vm1144, %v1740, %v1742
      %v1744 = vrot.slane %v1642, 2
      %v1745 = vsel %vm1144, %v1742, %v1744
      %v1746 = vrot.slane %v1643, 2
      %v1747 = vsel %vm1144, %v1744, %v1746
      %v1748 = vrot.slane %v1644, 2
      %v1749 = vrot.slane %v1645, 2
      %v1750 = vsel %vm1144, %v1748, %v1749
      %v1751 = vrot.slane %v1646, 2
      %v1752 = vsel %vm1144, %v1749, %v1751
      %v1753 = vrot.slane %v1647, 2
      %v1754 = vsel %vm1144, %v1751, %v1753
      %v1755 = vrot.slane %v1648, 2
      %v1756 = vsel %vm1144, %v1753, %v1755
      %v1757 = vrot.slane %v1649, 2
      %v1758 = vrot.slane %v1650, 2
      %v1759 = vsel %vm1144, %v1757, %v1758
      %v1760 = vrot.slane %v1651, 2
      %v1761 = vsel %vm1144, %v1758, %v1760
      %v1762 = vrot.slane %v1652, 2
      %v1763 = vsel %vm1144, %v1760, %v1762
      %v1764 = vrot.slane %v1653, 2
      %v1765 = vsel %vm1144, %v1762, %v1764
      %v1798 = vadd.f32 %v1578, %v1696
      %v1799 = vadd.f32 %v1579, %v1698
      %v1800 = vadd.f32 %v1580, %v1700
      %v1801 = vadd.f32 %v1581, %v1702
      %v1802 = vadd.f32 %v1582, %v1705
      %v1803 = vadd.f32 %v1583, %v1707
      %v1804 = vadd.f32 %v1584, %v1709
      %v1805 = vadd.f32 %v1585, %v1711
      %v1806 = vadd.f32 %v1586, %v1714
      %v1807 = vadd.f32 %v1587, %v1716
      %v1808 = vadd.f32 %v1588, %v1718
      %v1809 = vadd.f32 %v1589, %v1720
      %v1810 = vadd.f32 %v1590, %v1723
      %v1811 = vadd.f32 %v1591, %v1725
      %v1812 = vadd.f32 %v1592, %v1727
      %v1813 = vadd.f32 %v1593, %v1729
      %v1814 = vadd.f32 %v1594, %v1732
      %v1815 = vadd.f32 %v1595, %v1734
      %v1816 = vadd.f32 %v1596, %v1736
      %v1817 = vadd.f32 %v1597, %v1738
      %v1818 = vadd.f32 %v1598, %v1741
      %v1819 = vadd.f32 %v1599, %v1743
      %v1820 = vadd.f32 %v1600, %v1745
      %v1821 = vadd.f32 %v1601, %v1747
      %v1822 = vadd.f32 %v1602, %v1750
      %v1823 = vadd.f32 %v1603, %v1752
      %v1824 = vadd.f32 %v1604, %v1754
      %v1825 = vadd.f32 %v1605, %v1756
      %v1826 = vadd.f32 %v1606, %v1759
      %v1827 = vadd.f32 %v1607, %v1761
      %v1828 = vadd.f32 %v1608, %v1763
      %v1829 = vadd.f32 %v1609, %v1765
      %s1830 = scalar_lea.vmem %s746, 80 [#allocation2]
      %v1831 = vld [vmem:[%s1830] sm:$0xff]
      %v1832 = vld [vmem:[%s1830 + $0x8] sm:$0xff]
      %v1833 = vld [vmem:[%s1830 + $0x10] sm:$0xff]
      %v1834 = vld [vmem:[%s1830 + $0x18] sm:$0xff]
      %v1835 = vld [vmem:[%s1830 + $0x20] sm:$0x3]
      %v1836 = vld [vmem:[%s1830 + $0x28] sm:$0xff]
      %v1837 = vld [vmem:[%s1830 + $0x30] sm:$0xff]
      %v1838 = vld [vmem:[%s1830 + $0x38] sm:$0xff]
      %v1839 = vld [vmem:[%s1830 + $0x40] sm:$0xff]
      %v1840 = vld [vmem:[%s1830 + $0x48] sm:$0x3]
      %v1841 = vld [vmem:[%s1830 + $0x50] sm:$0xff]
      %v1842 = vld [vmem:[%s1830 + $0x58] sm:$0xff]
      %v1843 = vld [vmem:[%s1830 + $0x60] sm:$0xff]
      %v1844 = vld [vmem:[%s1830 + $0x68] sm:$0xff]
      %v1845 = vld [vmem:[%s1830 + $0x70] sm:$0x3]
      %v1846 = vld [vmem:[%s1830 + $0x78] sm:$0xff]
      %v1847 = vld [vmem:[%s1830 + $0x80] sm:$0xff]
      %v1848 = vld [vmem:[%s1830 + $0x88] sm:$0xff]
      %v1849 = vld [vmem:[%s1830 + $0x90] sm:$0xff]
      %v1850 = vld [vmem:[%s1830 + $0x98] sm:$0x3]
      %v1851 = vld [vmem:[%s1830 + $0xa0] sm:$0xff]
      %v1852 = vld [vmem:[%s1830 + $0xa8] sm:$0xff]
      %v1853 = vld [vmem:[%s1830 + $0xb0] sm:$0xff]
      %v1854 = vld [vmem:[%s1830 + $0xb8] sm:$0xff]
      %v1855 = vld [vmem:[%s1830 + $0xc0] sm:$0x3]
      %v1856 = vld [vmem:[%s1830 + $0xc8] sm:$0xff]
      %v1857 = vld [vmem:[%s1830 + $0xd0] sm:$0xff]
      %v1858 = vld [vmem:[%s1830 + $0xd8] sm:$0xff]
      %v1859 = vld [vmem:[%s1830 + $0xe0] sm:$0xff]
      %v1860 = vld [vmem:[%s1830 + $0xe8] sm:$0x3]
      %v1861 = vld [vmem:[%s1830 + $0xf0] sm:$0xff]
      %v1862 = vld [vmem:[%s1830 + $0xf8] sm:$0xff]
      %v1863 = vld [vmem:[%s1830 + $0x100] sm:$0xff]
      %v1864 = vld [vmem:[%s1830 + $0x108] sm:$0xff]
      %v1865 = vld [vmem:[%s1830 + $0x110] sm:$0x3]
      %v1866 = vld [vmem:[%s1830 + $0x118] sm:$0xff]
      %v1867 = vld [vmem:[%s1830 + $0x120] sm:$0xff]
      %v1868 = vld [vmem:[%s1830 + $0x128] sm:$0xff]
      %v1869 = vld [vmem:[%s1830 + $0x130] sm:$0xff]
      %v1870 = vld [vmem:[%s1830 + $0x138] sm:$0x3]
      %v1871 = vlaneseq
      %v1872 = vshrl.u32 %v1871, 7
      %v1873 = vsub.s32 0, %v1872
      %v1874 = vrot.slane %v760, %v1873
      %v1875 = vmul.f32 %v1831, %v1874
      %v1876 = vmul.f32 %v1832, %v1874
      %v1877 = vmul.f32 %v1833, %v1874
      %v1878 = vmul.f32 %v1834, %v1874
      %v1879 = vmul.f32 %v1836, %v1874
      %v1880 = vmul.f32 %v1837, %v1874
      %v1881 = vmul.f32 %v1838, %v1874
      %v1882 = vmul.f32 %v1839, %v1874
      %v1883 = vmul.f32 %v1841, %v1874
      %v1884 = vmul.f32 %v1842, %v1874
      %v1885 = vmul.f32 %v1843, %v1874
      %v1886 = vmul.f32 %v1844, %v1874
      %v1887 = vmul.f32 %v1846, %v1874
      %v1888 = vmul.f32 %v1847, %v1874
      %v1889 = vmul.f32 %v1848, %v1874
      %v1890 = vmul.f32 %v1849, %v1874
      %v1891 = vmul.f32 %v1851, %v1874
      %v1892 = vmul.f32 %v1852, %v1874
      %v1893 = vmul.f32 %v1853, %v1874
      %v1894 = vmul.f32 %v1854, %v1874
      %v1895 = vmul.f32 %v1856, %v1874
      %v1896 = vmul.f32 %v1857, %v1874
      %v1897 = vmul.f32 %v1858, %v1874
      %v1898 = vmul.f32 %v1859, %v1874
      %v1899 = vmul.f32 %v1861, %v1874
      %v1900 = vmul.f32 %v1862, %v1874
      %v1901 = vmul.f32 %v1863, %v1874
      %v1902 = vmul.f32 %v1864, %v1874
      %v1903 = vmul.f32 %v1866, %v1874
      %v1904 = vmul.f32 %v1867, %v1874
      %v1905 = vmul.f32 %v1868, %v1874
      %v1906 = vmul.f32 %v1869, %v1874
      %v1907 = vadd.f32 %v1798, %v1875
      %v1908 = vadd.f32 %v1799, %v1876
      %v1909 = vadd.f32 %v1800, %v1877
      %v1910 = vadd.f32 %v1801, %v1878
      %v1911 = vadd.f32 %v1802, %v1879
      %v1912 = vadd.f32 %v1803, %v1880
      %v1913 = vadd.f32 %v1804, %v1881
      %v1914 = vadd.f32 %v1805, %v1882
      %v1915 = vadd.f32 %v1806, %v1883
      %v1916 = vadd.f32 %v1807, %v1884
      %v1917 = vadd.f32 %v1808, %v1885
      %v1918 = vadd.f32 %v1809, %v1886
      %v1919 = vadd.f32 %v1810, %v1887
      %v1920 = vadd.f32 %v1811, %v1888
      %v1921 = vadd.f32 %v1812, %v1889
      %v1922 = vadd.f32 %v1813, %v1890
      %v1923 = vadd.f32 %v1814, %v1891
      %v1924 = vadd.f32 %v1815, %v1892
      %v1925 = vadd.f32 %v1816, %v1893
      %v1926 = vadd.f32 %v1817, %v1894
      %v1927 = vadd.f32 %v1818, %v1895
      %v1928 = vadd.f32 %v1819, %v1896
      %v1929 = vadd.f32 %v1820, %v1897
      %v1930 = vadd.f32 %v1821, %v1898
      %v1931 = vadd.f32 %v1822, %v1899
      %v1932 = vadd.f32 %v1823, %v1900
      %v1933 = vadd.f32 %v1824, %v1901
      %v1934 = vadd.f32 %v1825, %v1902
      %v1935 = vadd.f32 %v1826, %v1903
      %v1936 = vadd.f32 %v1827, %v1904
      %v1937 = vadd.f32 %v1828, %v1905
      %v1938 = vadd.f32 %v1829, %v1906
      %v1939 = vlaneseq
      %v1940 = vshrl.u32 %v1939, 7
      %v1941 = vsub.s32 0, %v1940
      %v1942 = vrot.slane %v761, %v1941
      %v1943 = vmul.f32 %v1831, %v1942
      %v1944 = vmul.f32 %v1832, %v1942
      %v1945 = vmul.f32 %v1833, %v1942
      %v1946 = vmul.f32 %v1834, %v1942
      %v1947 = vmul.f32 %v1835, %v1942
      %v1948 = vmul.f32 %v1836, %v1942
      %v1949 = vmul.f32 %v1837, %v1942
      %v1950 = vmul.f32 %v1838, %v1942
      %v1951 = vmul.f32 %v1839, %v1942
      %v1952 = vmul.f32 %v1840, %v1942
      %v1953 = vmul.f32 %v1841, %v1942
      %v1954 = vmul.f32 %v1842, %v1942
      %v1955 = vmul.f32 %v1843, %v1942
      %v1956 = vmul.f32 %v1844, %v1942
      %v1957 = vmul.f32 %v1845, %v1942
      %v1958 = vmul.f32 %v1846, %v1942
      %v1959 = vmul.f32 %v1847, %v1942
      %v1960 = vmul.f32 %v1848, %v1942
      %v1961 = vmul.f32 %v1849, %v1942
      %v1962 = vmul.f32 %v1850, %v1942
      %v1963 = vmul.f32 %v1851, %v1942
      %v1964 = vmul.f32 %v1852, %v1942
      %v1965 = vmul.f32 %v1853, %v1942
      %v1966 = vmul.f32 %v1854, %v1942
      %v1967 = vmul.f32 %v1855, %v1942
      %v1968 = vmul.f32 %v1856, %v1942
      %v1969 = vmul.f32 %v1857, %v1942
      %v1970 = vmul.f32 %v1858, %v1942
      %v1971 = vmul.f32 %v1859, %v1942
      %v1972 = vmul.f32 %v1860, %v1942
      %v1973 = vmul.f32 %v1861, %v1942
      %v1974 = vmul.f32 %v1862, %v1942
      %v1975 = vmul.f32 %v1863, %v1942
      %v1976 = vmul.f32 %v1864, %v1942
      %v1977 = vmul.f32 %v1865, %v1942
      %v1978 = vmul.f32 %v1866, %v1942
      %v1979 = vmul.f32 %v1867, %v1942
      %v1980 = vmul.f32 %v1868, %v1942
      %v1981 = vmul.f32 %v1869, %v1942
      %v1982 = vmul.f32 %v1870, %v1942
      %v2023 = vrot.slane %v1943, 1
      %v2024 = vrot.slane %v1944, 1
      %v2025 = vsel %vm923, %v2023, %v2024
      %v2026 = vrot.slane %v1945, 1
      %v2027 = vsel %vm923, %v2024, %v2026
      %v2028 = vrot.slane %v1946, 1
      %v2029 = vsel %vm923, %v2026, %v2028
      %v2030 = vrot.slane %v1947, 1
      %v2031 = vsel %vm923, %v2028, %v2030
      %v2032 = vrot.slane %v1948, 1
      %v2033 = vrot.slane %v1949, 1
      %v2034 = vsel %vm923, %v2032, %v2033
      %v2035 = vrot.slane %v1950, 1
      %v2036 = vsel %vm923, %v2033, %v2035
      %v2037 = vrot.slane %v1951, 1
      %v2038 = vsel %vm923, %v2035, %v2037
      %v2039 = vrot.slane %v1952, 1
      %v2040 = vsel %vm923, %v2037, %v2039
      %v2041 = vrot.slane %v1953, 1
      %v2042 = vrot.slane %v1954, 1
      %v2043 = vsel %vm923, %v2041, %v2042
      %v2044 = vrot.slane %v1955, 1
      %v2045 = vsel %vm923, %v2042, %v2044
      %v2046 = vrot.slane %v1956, 1
      %v2047 = vsel %vm923, %v2044, %v2046
      %v2048 = vrot.slane %v1957, 1
      %v2049 = vsel %vm923, %v2046, %v2048
      %v2050 = vrot.slane %v1958, 1
      %v2051 = vrot.slane %v1959, 1
      %v2052 = vsel %vm923, %v2050, %v2051
      %v2053 = vrot.slane %v1960, 1
      %v2054 = vsel %vm923, %v2051, %v2053
      %v2055 = vrot.slane %v1961, 1
      %v2056 = vsel %vm923, %v2053, %v2055
      %v2057 = vrot.slane %v1962, 1
      %v2058 = vsel %vm923, %v2055, %v2057
      %v2059 = vrot.slane %v1963, 1
      %v2060 = vrot.slane %v1964, 1
      %v2061 = vsel %vm923, %v2059, %v2060
      %v2062 = vrot.slane %v1965, 1
      %v2063 = vsel %vm923, %v2060, %v2062
      %v2064 = vrot.slane %v1966, 1
      %v2065 = vsel %vm923, %v2062, %v2064
      %v2066 = vrot.slane %v1967, 1
      %v2067 = vsel %vm923, %v2064, %v2066
      %v2068 = vrot.slane %v1968, 1
      %v2069 = vrot.slane %v1969, 1
      %v2070 = vsel %vm923, %v2068, %v2069
      %v2071 = vrot.slane %v1970, 1
      %v2072 = vsel %vm923, %v2069, %v2071
      %v2073 = vrot.slane %v1971, 1
      %v2074 = vsel %vm923, %v2071, %v2073
      %v2075 = vrot.slane %v1972, 1
      %v2076 = vsel %vm923, %v2073, %v2075
      %v2077 = vrot.slane %v1973, 1
      %v2078 = vrot.slane %v1974, 1
      %v2079 = vsel %vm923, %v2077, %v2078
      %v2080 = vrot.slane %v1975, 1
      %v2081 = vsel %vm923, %v2078, %v2080
      %v2082 = vrot.slane %v1976, 1
      %v2083 = vsel %vm923, %v2080, %v2082
      %v2084 = vrot.slane %v1977, 1
      %v2085 = vsel %vm923, %v2082, %v2084
      %v2086 = vrot.slane %v1978, 1
      %v2087 = vrot.slane %v1979, 1
      %v2088 = vsel %vm923, %v2086, %v2087
      %v2089 = vrot.slane %v1980, 1
      %v2090 = vsel %vm923, %v2087, %v2089
      %v2091 = vrot.slane %v1981, 1
      %v2092 = vsel %vm923, %v2089, %v2091
      %v2093 = vrot.slane %v1982, 1
      %v2094 = vsel %vm923, %v2091, %v2093
      %v2127 = vadd.f32 %v1907, %v2025
      %v2128 = vadd.f32 %v1908, %v2027
      %v2129 = vadd.f32 %v1909, %v2029
      %v2130 = vadd.f32 %v1910, %v2031
      %v2131 = vadd.f32 %v1911, %v2034
      %v2132 = vadd.f32 %v1912, %v2036
      %v2133 = vadd.f32 %v1913, %v2038
      %v2134 = vadd.f32 %v1914, %v2040
      %v2135 = vadd.f32 %v1915, %v2043
      %v2136 = vadd.f32 %v1916, %v2045
      %v2137 = vadd.f32 %v1917, %v2047
      %v2138 = vadd.f32 %v1918, %v2049
      %v2139 = vadd.f32 %v1919, %v2052
      %v2140 = vadd.f32 %v1920, %v2054
      %v2141 = vadd.f32 %v1921, %v2056
      %v2142 = vadd.f32 %v1922, %v2058
      %v2143 = vadd.f32 %v1923, %v2061
      %v2144 = vadd.f32 %v1924, %v2063
      %v2145 = vadd.f32 %v1925, %v2065
      %v2146 = vadd.f32 %v1926, %v2067
      %v2147 = vadd.f32 %v1927, %v2070
      %v2148 = vadd.f32 %v1928, %v2072
      %v2149 = vadd.f32 %v1929, %v2074
      %v2150 = vadd.f32 %v1930, %v2076
      %v2151 = vadd.f32 %v1931, %v2079
      %v2152 = vadd.f32 %v1932, %v2081
      %v2153 = vadd.f32 %v1933, %v2083
      %v2154 = vadd.f32 %v1934, %v2085
      %v2155 = vadd.f32 %v1935, %v2088
      %v2156 = vadd.f32 %v1936, %v2090
      %v2157 = vadd.f32 %v1937, %v2092
      %v2158 = vadd.f32 %v1938, %v2094
      %v2159 = vlaneseq
      %v2160 = vshrl.u32 %v2159, 7
      %v2161 = vsub.s32 0, %v2160
      %v2162 = vrot.slane %v762, %v2161
      %v2163 = vmul.f32 %v1831, %v2162
      %v2164 = vmul.f32 %v1832, %v2162
      %v2165 = vmul.f32 %v1833, %v2162
      %v2166 = vmul.f32 %v1834, %v2162
      %v2167 = vmul.f32 %v1835, %v2162
      %v2168 = vmul.f32 %v1836, %v2162
      %v2169 = vmul.f32 %v1837, %v2162
      %v2170 = vmul.f32 %v1838, %v2162
      %v2171 = vmul.f32 %v1839, %v2162
      %v2172 = vmul.f32 %v1840, %v2162
      %v2173 = vmul.f32 %v1841, %v2162
      %v2174 = vmul.f32 %v1842, %v2162
      %v2175 = vmul.f32 %v1843, %v2162
      %v2176 = vmul.f32 %v1844, %v2162
      %v2177 = vmul.f32 %v1845, %v2162
      %v2178 = vmul.f32 %v1846, %v2162
      %v2179 = vmul.f32 %v1847, %v2162
      %v2180 = vmul.f32 %v1848, %v2162
      %v2181 = vmul.f32 %v1849, %v2162
      %v2182 = vmul.f32 %v1850, %v2162
      %v2183 = vmul.f32 %v1851, %v2162
      %v2184 = vmul.f32 %v1852, %v2162
      %v2185 = vmul.f32 %v1853, %v2162
      %v2186 = vmul.f32 %v1854, %v2162
      %v2187 = vmul.f32 %v1855, %v2162
      %v2188 = vmul.f32 %v1856, %v2162
      %v2189 = vmul.f32 %v1857, %v2162
      %v2190 = vmul.f32 %v1858, %v2162
      %v2191 = vmul.f32 %v1859, %v2162
      %v2192 = vmul.f32 %v1860, %v2162
      %v2193 = vmul.f32 %v1861, %v2162
      %v2194 = vmul.f32 %v1862, %v2162
      %v2195 = vmul.f32 %v1863, %v2162
      %v2196 = vmul.f32 %v1864, %v2162
      %v2197 = vmul.f32 %v1865, %v2162
      %v2198 = vmul.f32 %v1866, %v2162
      %v2199 = vmul.f32 %v1867, %v2162
      %v2200 = vmul.f32 %v1868, %v2162
      %v2201 = vmul.f32 %v1869, %v2162
      %v2202 = vmul.f32 %v1870, %v2162
      %v2243 = vrot.slane %v2163, 2
      %v2244 = vrot.slane %v2164, 2
      %v2245 = vsel %vm1144, %v2243, %v2244
      %v2246 = vrot.slane %v2165, 2
      %v2247 = vsel %vm1144, %v2244, %v2246
      %v2248 = vrot.slane %v2166, 2
      %v2249 = vsel %vm1144, %v2246, %v2248
      %v2250 = vrot.slane %v2167, 2
      %v2251 = vsel %vm1144, %v2248, %v2250
      %v2252 = vrot.slane %v2168, 2
      %v2253 = vrot.slane %v2169, 2
      %v2254 = vsel %vm1144, %v2252, %v2253
      %v2255 = vrot.slane %v2170, 2
      %v2256 = vsel %vm1144, %v2253, %v2255
      %v2257 = vrot.slane %v2171, 2
      %v2258 = vsel %vm1144, %v2255, %v2257
      %v2259 = vrot.slane %v2172, 2
      %v2260 = vsel %vm1144, %v2257, %v2259
      %v2261 = vrot.slane %v2173, 2
      %v2262 = vrot.slane %v2174, 2
      %v2263 = vsel %vm1144, %v2261, %v2262
      %v2264 = vrot.slane %v2175, 2
      %v2265 = vsel %vm1144, %v2262, %v2264
      %v2266 = vrot.slane %v2176, 2
      %v2267 = vsel %vm1144, %v2264, %v2266
      %v2268 = vrot.slane %v2177, 2
      %v2269 = vsel %vm1144, %v2266, %v2268
      %v2270 = vrot.slane %v2178, 2
      %v2271 = vrot.slane %v2179, 2
      %v2272 = vsel %vm1144, %v2270, %v2271
      %v2273 = vrot.slane %v2180, 2
      %v2274 = vsel %vm1144, %v2271, %v2273
      %v2275 = vrot.slane %v2181, 2
      %v2276 = vsel %vm1144, %v2273, %v2275
      %v2277 = vrot.slane %v2182, 2
      %v2278 = vsel %vm1144, %v2275, %v2277
      %v2279 = vrot.slane %v2183, 2
      %v2280 = vrot.slane %v2184, 2
      %v2281 = vsel %vm1144, %v2279, %v2280
      %v2282 = vrot.slane %v2185, 2
      %v2283 = vsel %vm1144, %v2280, %v2282
      %v2284 = vrot.slane %v2186, 2
      %v2285 = vsel %vm1144, %v2282, %v2284
      %v2286 = vrot.slane %v2187, 2
      %v2287 = vsel %vm1144, %v2284, %v2286
      %v2288 = vrot.slane %v2188, 2
      %v2289 = vrot.slane %v2189, 2
      %v2290 = vsel %vm1144, %v2288, %v2289
      %v2291 = vrot.slane %v2190, 2
      %v2292 = vsel %vm1144, %v2289, %v2291
      %v2293 = vrot.slane %v2191, 2
      %v2294 = vsel %vm1144, %v2291, %v2293
      %v2295 = vrot.slane %v2192, 2
      %v2296 = vsel %vm1144, %v2293, %v2295
      %v2297 = vrot.slane %v2193, 2
      %v2298 = vrot.slane %v2194, 2
      %v2299 = vsel %vm1144, %v2297, %v2298
      %v2300 = vrot.slane %v2195, 2
      %v2301 = vsel %vm1144, %v2298, %v2300
      %v2302 = vrot.slane %v2196, 2
      %v2303 = vsel %vm1144, %v2300, %v2302
      %v2304 = vrot.slane %v2197, 2
      %v2305 = vsel %vm1144, %v2302, %v2304
      %v2306 = vrot.slane %v2198, 2
      %v2307 = vrot.slane %v2199, 2
      %v2308 = vsel %vm1144, %v2306, %v2307
      %v2309 = vrot.slane %v2200, 2
      %v2310 = vsel %vm1144, %v2307, %v2309
      %v2311 = vrot.slane %v2201, 2
      %v2312 = vsel %vm1144, %v2309, %v2311
      %v2313 = vrot.slane %v2202, 2
      %v2314 = vsel %vm1144, %v2311, %v2313
      %v2347 = vadd.f32 %v2127, %v2245
      %v2348 = vadd.f32 %v2128, %v2247
      %v2349 = vadd.f32 %v2129, %v2249
      %v2350 = vadd.f32 %v2130, %v2251
      %v2351 = vadd.f32 %v2131, %v2254
      %v2352 = vadd.f32 %v2132, %v2256
      %v2353 = vadd.f32 %v2133, %v2258
      %v2354 = vadd.f32 %v2134, %v2260
      %v2355 = vadd.f32 %v2135, %v2263
      %v2356 = vadd.f32 %v2136, %v2265
      %v2357 = vadd.f32 %v2137, %v2267
      %v2358 = vadd.f32 %v2138, %v2269
      %v2359 = vadd.f32 %v2139, %v2272
      %v2360 = vadd.f32 %v2140, %v2274
      %v2361 = vadd.f32 %v2141, %v2276
      %v2362 = vadd.f32 %v2142, %v2278
      %v2363 = vadd.f32 %v2143, %v2281
      %v2364 = vadd.f32 %v2144, %v2283
      %v2365 = vadd.f32 %v2145, %v2285
      %v2366 = vadd.f32 %v2146, %v2287
      %v2367 = vadd.f32 %v2147, %v2290
      %v2368 = vadd.f32 %v2148, %v2292
      %v2369 = vadd.f32 %v2149, %v2294
      %v2370 = vadd.f32 %v2150, %v2296
      %v2371 = vadd.f32 %v2151, %v2299
      %v2372 = vadd.f32 %v2152, %v2301
      %v2373 = vadd.f32 %v2153, %v2303
      %v2374 = vadd.f32 %v2154, %v2305
      %v2375 = vadd.f32 %v2155, %v2308
      %v2376 = vadd.f32 %v2156, %v2310
      %v2377 = vadd.f32 %v2157, %v2312
      %v2378 = vadd.f32 %v2158, %v2314
      %v2379 = vpack.c.bf16 %v2348, %v2347
      %v2380 = vpack.c.bf16 %v2350, %v2349
      %v2381 = vpack.c.bf16 %v2352, %v2351
      %v2382 = vpack.c.bf16 %v2354, %v2353
      %v2383 = vpack.c.bf16 %v2356, %v2355
      %v2384 = vpack.c.bf16 %v2358, %v2357
      %v2385 = vpack.c.bf16 %v2360, %v2359
      %v2386 = vpack.c.bf16 %v2362, %v2361
      %v2387 = vpack.c.bf16 %v2364, %v2363
      %v2388 = vpack.c.bf16 %v2366, %v2365
      %v2389 = vpack.c.bf16 %v2368, %v2367
      %v2390 = vpack.c.bf16 %v2370, %v2369
      %v2391 = vpack.c.bf16 %v2372, %v2371
      %v2392 = vpack.c.bf16 %v2374, %v2373
      %v2393 = vpack.c.bf16 %v2376, %v2375
      %v2394 = vpack.c.bf16 %v2378, %v2377
      %v2395 = vld [vmem:[%s2] sm:$0xf]
      %v2396 = vld [vmem:[%s2 + $0x4] sm:$0xf]
      %v2397 = vld [vmem:[%s2 + $0x8] sm:$0xf]
      %v2398 = vld [vmem:[%s2 + $0xc] sm:$0xf]
      %v2399 = vld [vmem:[%s2 + $0x10] sm:$0xf]
      %v2400 = vld [vmem:[%s2 + $0x14] sm:$0xf]
      %v2401 = vld [vmem:[%s2 + $0x18] sm:$0xf]
      %v2402 = vld [vmem:[%s2 + $0x1c] sm:$0xf]
      %v2403 = vld [vmem:[%s2 + $0x20] sm:$0xf]
      %v2404 = vld [vmem:[%s2 + $0x24] sm:$0xf]
      %v2405 = vld [vmem:[%s2 + $0x28] sm:$0xf]
      %v2406 = vld [vmem:[%s2 + $0x2c] sm:$0xf]
      %v2407 = vld [vmem:[%s2 + $0x30] sm:$0xf]
      %v2408 = vld [vmem:[%s2 + $0x34] sm:$0xf]
      %v2409 = vld [vmem:[%s2 + $0x38] sm:$0xf]
      %v2410 = vld [vmem:[%s2 + $0x3c] sm:$0xf]
      %v2411 = vld [vmem:[%s3] sm:$0x1]
      %v2413 = vlaneseq
      %v2414 = vshrl.u32 %v2413, 7
      %v2415 = vsub.s32 0, %v2414
      %v2416 = vrot.slane %v2411, %v2415
      %v2434 = vunpack.c.l.b16 %v2395
      %v2435 = vunpack.c.l.b16 %v2396
      %v2436 = vunpack.c.l.b16 %v2397
      %v2437 = vunpack.c.l.b16 %v2398
      %v2438 = vunpack.c.l.b16 %v2399
      %v2439 = vunpack.c.l.b16 %v2400
      %v2440 = vunpack.c.l.b16 %v2401
      %v2441 = vunpack.c.l.b16 %v2402
      %v2442 = vunpack.c.l.b16 %v2403
      %v2443 = vunpack.c.l.b16 %v2404
      %v2444 = vunpack.c.l.b16 %v2405
      %v2445 = vunpack.c.l.b16 %v2406
      %v2446 = vunpack.c.l.b16 %v2407
      %v2447 = vunpack.c.l.b16 %v2408
      %v2448 = vunpack.c.l.b16 %v2409
      %v2449 = vunpack.c.l.b16 %v2410
      %v2450 = vpack.c.b16 %v2435, %v2434
      %v2451 = vpack.c.b16 %v2437, %v2436
      %v2452 = vpack.c.b16 %v2439, %v2438
      %v2453 = vpack.c.b16 %v2441, %v2440
      %v2454 = vpack.c.b16 %v2443, %v2442
      %v2455 = vpack.c.b16 %v2445, %v2444
      %v2456 = vpack.c.b16 %v2447, %v2446
      %v2457 = vpack.c.b16 %v2449, %v2448
      %2466 = vmatprep.subr.bf16.mxu0 0
      %2467 = vmatpush1.bf16.msra.mxu0 %v2450
      %2468 = vmatprep.subr.bf16.mxu0 0
      %2469 = vmatpush1.bf16.msra.mxu0 %v2451
      %2470 = vmatprep.subr.bf16.mxu0 0
      %2471 = vmatpush1.bf16.msra.mxu0 %v2452
      %2472 = vmatprep.subr.bf16.mxu0 0
      %2473 = vmatpush1.bf16.msra.mxu0 %v2453
      %2474 = vmatprep.subr.bf16.mxu0 0
      %2475 = vmatpush1.bf16.msra.mxu0 %v2454
      %2476 = vmatprep.subr.bf16.mxu0 0
      %2477 = vmatpush1.bf16.msra.mxu0 %v2455
      %2478 = vmatprep.subr.bf16.mxu0 0
      %2479 = vmatpush1.bf16.msra.mxu0 %v2456
      %2480 = vmatprep.subr.bf16.mxu0 0
      %2481 = vmatpush1.bf16.msra.mxu0 %v2457
      %2482 = vmatprep.subr.bf16.mxu0 0
      %2483 = vmatpush1.bf16.msra.mxu0 0
      %2484 = vmatprep.subr.bf16.mxu0 0
      %2485 = vmatpush1.bf16.msra.mxu0 0
      %2486 = vmatprep.subr.bf16.mxu0 0
      %2487 = vmatpush1.bf16.msra.mxu0 0
      %2488 = vmatprep.subr.bf16.mxu0 0
      %2489 = vmatpush1.bf16.msra.mxu0 0
      %2490 = vmatprep.subr.bf16.mxu0 0
      %2491 = vmatpush1.bf16.msra.mxu0 0
      %2492 = vmatprep.subr.bf16.mxu0 0
      %2493 = vmatpush1.bf16.msra.mxu0 0
      %2494 = vmatprep.subr.bf16.mxu0 0
      %2495 = vmatpush1.bf16.msra.mxu0 0
      %2496 = vmatprep.subr.bf16.mxu0 0
      %2497 = vmatpush1.bf16.msra.mxu0 0
      %2498 = vmatprep.mubr.bf16.mxu0 0
      %2499 = vmatmul.mubr.bf16.gmra.mrb[0].mxu0 %v2379
      %v2500 = vpop.f32.mrb[0].mxu0
      %v2501 = vadd.f32 %v2416, %v2500
      %v2502 = vpop.f32.mrb[0].mxu0
      %v2503 = vpop.f32.mrb[0].mxu0
      %v2504 = vadd.f32 %v2416, %v2503
      %v2505 = vpop.f32.mrb[0].mxu0
      %2506 = vmatprep.mubr.bf16.mxu0 0
      %2507 = vmatmul.mubr.bf16.gmra.mrb[0].mxu0 %v2380
      %v2508 = vpop.f32.mrb[0].mxu0
      %v2509 = vadd.f32 %v2416, %v2508
      %v2510 = vpop.f32.mrb[0].mxu0
      %v2511 = vpop.f32.mrb[0].mxu0
      %v2512 = vadd.f32 %v2416, %v2511
      %v2513 = vpop.f32.mrb[0].mxu0
      %2514 = vmatprep.mubr.bf16.mxu0 0
      %2515 = vmatmul.mubr.bf16.gmra.mrb[0].mxu0 %v2381
      %v2516 = vpop.f32.mrb[0].mxu0
      %v2517 = vadd.f32 %v2416, %v2516
      %v2518 = vpop.f32.mrb[0].mxu0
      %v2519 = vpop.f32.mrb[0].mxu0
      %v2520 = vadd.f32 %v2416, %v2519
      %v2521 = vpop.f32.mrb[0].mxu0
      %2522 = vmatprep.mubr.bf16.mxu0 0
      %2523 = vmatmul.mubr.bf16.gmra.mrb[0].mxu0 %v2382
      %v2524 = vpop.f32.mrb[0].mxu0
      %v2525 = vadd.f32 %v2416, %v2524
      %v2526 = vpop.f32.mrb[0].mxu0
      %v2527 = vpop.f32.mrb[0].mxu0
      %v2528 = vadd.f32 %v2416, %v2527
      %v2529 = vpop.f32.mrb[0].mxu0
      %2530 = vmatprep.mubr.bf16.mxu0 0
      %2531 = vmatmul.mubr.bf16.gmra.mrb[0].mxu0 %v2383
      %v2532 = vpop.f32.mrb[0].mxu0
      %v2533 = vadd.f32 %v2416, %v2532
      %v2534 = vpop.f32.mrb[0].mxu0
      %v2535 = vpop.f32.mrb[0].mxu0
      %v2536 = vadd.f32 %v2416, %v2535
      %v2537 = vpop.f32.mrb[0].mxu0
      %2538 = vmatprep.mubr.bf16.mxu0 0
      %2539 = vmatmul.mubr.bf16.gmra.mrb[0].mxu0 %v2384
      %v2540 = vpop.f32.mrb[0].mxu0
      %v2541 = vadd.f32 %v2416, %v2540
      %v2542 = vpop.f32.mrb[0].mxu0
      %v2543 = vpop.f32.mrb[0].mxu0
      %v2544 = vadd.f32 %v2416, %v2543
      %v2545 = vpop.f32.mrb[0].mxu0
      %2546 = vmatprep.mubr.bf16.mxu0 0
      %2547 = vmatmul.mubr.bf16.gmra.mrb[0].mxu0 %v2385
      %v2548 = vpop.f32.mrb[0].mxu0
      %v2549 = vadd.f32 %v2416, %v2548
      %v2550 = vpop.f32.mrb[0].mxu0
      %v2551 = vpop.f32.mrb[0].mxu0
      %v2552 = vadd.f32 %v2416, %v2551
      %v2553 = vpop.f32.mrb[0].mxu0
      %2554 = vmatprep.mubr.bf16.mxu0 0
      %2555 = vmatmul.mubr.bf16.gmra.mrb[0].mxu0 %v2386
      %v2556 = vpop.f32.mrb[0].mxu0
      %v2557 = vadd.f32 %v2416, %v2556
      %v2558 = vpop.f32.mrb[0].mxu0
      %v2559 = vpop.f32.mrb[0].mxu0
      %v2560 = vadd.f32 %v2416, %v2559
      %v2561 = vpop.f32.mrb[0].mxu0
      %2562 = vmatprep.mubr.bf16.mxu0 0
      %2563 = vmatmul.mubr.bf16.gmra.mrb[0].mxu0 %v2387
      %v2564 = vpop.f32.mrb[0].mxu0
      %v2565 = vadd.f32 %v2416, %v2564
      %v2566 = vpop.f32.mrb[0].mxu0
      %v2567 = vpop.f32.mrb[0].mxu0
      %v2568 = vadd.f32 %v2416, %v2567
      %v2569 = vpop.f32.mrb[0].mxu0
      %2570 = vmatprep.mubr.bf16.mxu0 0
      %2571 = vmatmul.mubr.bf16.gmra.mrb[0].mxu0 %v2388
      %v2572 = vpop.f32.mrb[0].mxu0
      %v2573 = vadd.f32 %v2416, %v2572
      %v2574 = vpop.f32.mrb[0].mxu0
      %v2575 = vpop.f32.mrb[0].mxu0
      %v2576 = vadd.f32 %v2416, %v2575
      %v2577 = vpop.f32.mrb[0].mxu0
      %2578 = vmatprep.mubr.bf16.mxu0 0
      %2579 = vmatmul.mubr.bf16.gmra.mrb[0].mxu0 %v2389
      %v2580 = vpop.f32.mrb[0].mxu0
      %v2581 = vadd.f32 %v2416, %v2580
      %v2582 = vpop.f32.mrb[0].mxu0
      %v2583 = vpop.f32.mrb[0].mxu0
      %v2584 = vadd.f32 %v2416, %v2583
      %v2585 = vpop.f32.mrb[0].mxu0
      %2586 = vmatprep.mubr.bf16.mxu0 0
      %2587 = vmatmul.mubr.bf16.gmra.mrb[0].mxu0 %v2390
      %v2588 = vpop.f32.mrb[0].mxu0
      %v2589 = vadd.f32 %v2416, %v2588
      %v2590 = vpop.f32.mrb[0].mxu0
      %v2591 = vpop.f32.mrb[0].mxu0
      %v2592 = vadd.f32 %v2416, %v2591
      %v2593 = vpop.f32.mrb[0].mxu0
      %2594 = vmatprep.mubr.bf16.mxu0 0
      %2595 = vmatmul.mubr.bf16.gmra.mrb[0].mxu0 %v2391
      %v2596 = vpop.f32.mrb[0].mxu0
      %v2597 = vadd.f32 %v2416, %v2596
      %v2598 = vpop.f32.mrb[0].mxu0
      %v2599 = vpop.f32.mrb[0].mxu0
      %v2600 = vadd.f32 %v2416, %v2599
      %v2601 = vpop.f32.mrb[0].mxu0
      %2602 = vmatprep.mubr.bf16.mxu0 0
      %2603 = vmatmul.mubr.bf16.gmra.mrb[0].mxu0 %v2392
      %v2604 = vpop.f32.mrb[0].mxu0
      %v2605 = vadd.f32 %v2416, %v2604
      %v2606 = vpop.f32.mrb[0].mxu0
      %v2607 = vpop.f32.mrb[0].mxu0
      %v2608 = vadd.f32 %v2416, %v2607
      %v2609 = vpop.f32.mrb[0].mxu0
      %2610 = vmatprep.mubr.bf16.mxu0 0
      %2611 = vmatmul.mubr.bf16.gmra.mrb[0].mxu0 %v2393
      %v2612 = vpop.f32.mrb[0].mxu0
      %v2613 = vadd.f32 %v2416, %v2612
      %v2614 = vpop.f32.mrb[0].mxu0
      %v2615 = vpop.f32.mrb[0].mxu0
      %v2616 = vadd.f32 %v2416, %v2615
      %v2617 = vpop.f32.mrb[0].mxu0
      %2618 = vmatprep.mubr.bf16.mxu0 0
      %2619 = vmatmul.mubr.bf16.gmra.mrb[0].mxu0 %v2394
      %v2620 = vpop.f32.mrb[0].mxu0
      %v2621 = vadd.f32 %v2416, %v2620
      %v2622 = vpop.f32.mrb[0].mxu0
      %v2623 = vpop.f32.mrb[0].mxu0
      %v2624 = vadd.f32 %v2416, %v2623
      %v2625 = vpop.f32.mrb[0].mxu0
      %2626 = vdwg.mxu0
      %v2627 = vmax.f32 %v2501, 0.0
      %v2628 = vmax.f32 %v2504, 0.0
      %v2629 = vmax.f32 %v2509, 0.0
      %v2630 = vmax.f32 %v2512, 0.0
      %v2631 = vmax.f32 %v2517, 0.0
      %v2632 = vmax.f32 %v2520, 0.0
      %v2633 = vmax.f32 %v2525, 0.0
      %v2634 = vmax.f32 %v2528, 0.0
      %v2635 = vmax.f32 %v2533, 0.0
      %v2636 = vmax.f32 %v2536, 0.0
      %v2637 = vmax.f32 %v2541, 0.0
      %v2638 = vmax.f32 %v2544, 0.0
      %v2639 = vmax.f32 %v2549, 0.0
      %v2640 = vmax.f32 %v2552, 0.0
      %v2641 = vmax.f32 %v2557, 0.0
      %v2642 = vmax.f32 %v2560, 0.0
      %v2643 = vmax.f32 %v2565, 0.0
      %v2644 = vmax.f32 %v2568, 0.0
      %v2645 = vmax.f32 %v2573, 0.0
      %v2646 = vmax.f32 %v2576, 0.0
      %v2647 = vmax.f32 %v2581, 0.0
      %v2648 = vmax.f32 %v2584, 0.0
      %v2649 = vmax.f32 %v2589, 0.0
      %v2650 = vmax.f32 %v2592, 0.0
      %v2651 = vmax.f32 %v2597, 0.0
      %v2652 = vmax.f32 %v2600, 0.0
      %v2653 = vmax.f32 %v2605, 0.0
      %v2654 = vmax.f32 %v2608, 0.0
      %v2655 = vmax.f32 %v2613, 0.0
      %v2656 = vmax.f32 %v2616, 0.0
      %v2657 = vmax.f32 %v2621, 0.0
      %v2658 = vmax.f32 %v2624, 0.0
      %2659 = vst [vmem:[%s175] sm:$0xff] %v2627
      %2660 = vst [vmem:[%s175 + $0x8] sm:$0xff] %v2628
      %2661 = vst [vmem:[%s175 + $0x10] sm:$0xff] %v2629
      %2662 = vst [vmem:[%s175 + $0x18] sm:$0xff] %v2630
      %2663 = vst [vmem:[%s175 + $0x20] sm:$0xff] %v2631
      %2664 = vst [vmem:[%s175 + $0x28] sm:$0xff] %v2632
      %2665 = vst [vmem:[%s175 + $0x30] sm:$0xff] %v2633
      %2666 = vst [vmem:[%s175 + $0x38] sm:$0xff] %v2634
      %2667 = vst [vmem:[%s175 + $0x40] sm:$0xff] %v2635
      %2668 = vst [vmem:[%s175 + $0x48] sm:$0xff] %v2636
      %2669 = vst [vmem:[%s175 + $0x50] sm:$0xff] %v2637
      %2670 = vst [vmem:[%s175 + $0x58] sm:$0xff] %v2638
      %2671 = vst [vmem:[%s175 + $0x60] sm:$0xff] %v2639
      %2672 = vst [vmem:[%s175 + $0x68] sm:$0xff] %v2640
      %2673 = vst [vmem:[%s175 + $0x70] sm:$0xff] %v2641
      %2674 = vst [vmem:[%s175 + $0x78] sm:$0xff] %v2642
      %2675 = vst [vmem:[%s175 + $0x80] sm:$0xff] %v2643
      %2676 = vst [vmem:[%s175 + $0x88] sm:$0xff] %v2644
      %2677 = vst [vmem:[%s175 + $0x90] sm:$0xff] %v2645
      %2678 = vst [vmem:[%s175 + $0x98] sm:$0xff] %v2646
      %2679 = vst [vmem:[%s175 + $0xa0] sm:$0xff] %v2647
      %2680 = vst [vmem:[%s175 + $0xa8] sm:$0xff] %v2648
      %2681 = vst [vmem:[%s175 + $0xb0] sm:$0xff] %v2649
      %2682 = vst [vmem:[%s175 + $0xb8] sm:$0xff] %v2650
      %2683 = vst [vmem:[%s175 + $0xc0] sm:$0xff] %v2651
      %2684 = vst [vmem:[%s175 + $0xc8] sm:$0xff] %v2652
      %2685 = vst [vmem:[%s175 + $0xd0] sm:$0xff] %v2653
      %2686 = vst [vmem:[%s175 + $0xd8] sm:$0xff] %v2654
      %2687 = vst [vmem:[%s175 + $0xe0] sm:$0xff] %v2655
      %2688 = vst [vmem:[%s175 + $0xe8] sm:$0xff] %v2656
      %2689 = vst [vmem:[%s175 + $0xf0] sm:$0xff] %v2657
      %2690 = vst [vmem:[%s175 + $0xf8] sm:$0xff] %v2658
      %s2691 = scalar_lea.vmem %s746, 320 [#allocation2]
      %v2692 = vld [vmem:[%s2691] sm:$0xff]
      %v2693 = vld [vmem:[%s2691 + $0x8] sm:$0xff]
      %v2694 = vld [vmem:[%s2691 + $0x10] sm:$0xff]
      %v2695 = vld [vmem:[%s2691 + $0x18] sm:$0xff]
      %v2696 = vld [vmem:[%s2691 + $0x20] sm:$0x3]
      %v2697 = vld [vmem:[%s2691 + $0x28] sm:$0xff]
      %v2698 = vld [vmem:[%s2691 + $0x30] sm:$0xff]
      %v2699 = vld [vmem:[%s2691 + $0x38] sm:$0xff]
      %v2700 = vld [vmem:[%s2691 + $0x40] sm:$0xff]
      %v2701 = vld [vmem:[%s2691 + $0x48] sm:$0x3]
      %v2702 = vld [vmem:[%s2691 + $0x50] sm:$0xff]
      %v2703 = vld [vmem:[%s2691 + $0x58] sm:$0xff]
      %v2704 = vld [vmem:[%s2691 + $0x60] sm:$0xff]
      %v2705 = vld [vmem:[%s2691 + $0x68] sm:$0xff]
      %v2706 = vld [vmem:[%s2691 + $0x70] sm:$0x3]
      %v2707 = vld [vmem:[%s2691 + $0x78] sm:$0xff]
      %v2708 = vld [vmem:[%s2691 + $0x80] sm:$0xff]
      %v2709 = vld [vmem:[%s2691 + $0x88] sm:$0xff]
      %v2710 = vld [vmem:[%s2691 + $0x90] sm:$0xff]
      %v2711 = vld [vmem:[%s2691 + $0x98] sm:$0x3]
      %v2712 = vld [vmem:[%s2691 + $0xa0] sm:$0xff]
      %v2713 = vld [vmem:[%s2691 + $0xa8] sm:$0xff]
      %v2714 = vld [vmem:[%s2691 + $0xb0] sm:$0xff]
      %v2715 = vld [vmem:[%s2691 + $0xb8] sm:$0xff]
      %v2716 = vld [vmem:[%s2691 + $0xc0] sm:$0x3]
      %v2717 = vld [vmem:[%s2691 + $0xc8] sm:$0xff]
      %v2718 = vld [vmem:[%s2691 + $0xd0] sm:$0xff]
      %v2719 = vld [vmem:[%s2691 + $0xd8] sm:$0xff]
      %v2720 = vld [vmem:[%s2691 + $0xe0] sm:$0xff]
      %v2721 = vld [vmem:[%s2691 + $0xe8] sm:$0x3]
      %v2722 = vld [vmem:[%s2691 + $0xf0] sm:$0xff]
      %v2723 = vld [vmem:[%s2691 + $0xf8] sm:$0xff]
      %v2724 = vld [vmem:[%s2691 + $0x100] sm:$0xff]
      %v2725 = vld [vmem:[%s2691 + $0x108] sm:$0xff]
      %v2726 = vld [vmem:[%s2691 + $0x110] sm:$0x3]
      %v2727 = vld [vmem:[%s2691 + $0x118] sm:$0xff]
      %v2728 = vld [vmem:[%s2691 + $0x120] sm:$0xff]
      %v2729 = vld [vmem:[%s2691 + $0x128] sm:$0xff]
      %v2730 = vld [vmem:[%s2691 + $0x130] sm:$0xff]
      %v2731 = vld [vmem:[%s2691 + $0x138] sm:$0x3]
      %v2732 = vmul.f32 %v2692, %v806
      %v2733 = vmul.f32 %v2693, %v806
      %v2734 = vmul.f32 %v2694, %v806
      %v2735 = vmul.f32 %v2695, %v806
      %v2736 = vmul.f32 %v2697, %v806
      %v2737 = vmul.f32 %v2698, %v806
      %v2738 = vmul.f32 %v2699, %v806
      %v2739 = vmul.f32 %v2700, %v806
      %v2740 = vmul.f32 %v2702, %v806
      %v2741 = vmul.f32 %v2703, %v806
      %v2742 = vmul.f32 %v2704, %v806
      %v2743 = vmul.f32 %v2705, %v806
      %v2744 = vmul.f32 %v2707, %v806
      %v2745 = vmul.f32 %v2708, %v806
      %v2746 = vmul.f32 %v2709, %v806
      %v2747 = vmul.f32 %v2710, %v806
      %v2748 = vmul.f32 %v2712, %v806
      %v2749 = vmul.f32 %v2713, %v806
      %v2750 = vmul.f32 %v2714, %v806
      %v2751 = vmul.f32 %v2715, %v806
      %v2752 = vmul.f32 %v2717, %v806
      %v2753 = vmul.f32 %v2718, %v806
      %v2754 = vmul.f32 %v2719, %v806
      %v2755 = vmul.f32 %v2720, %v806
      %v2756 = vmul.f32 %v2722, %v806
      %v2757 = vmul.f32 %v2723, %v806
      %v2758 = vmul.f32 %v2724, %v806
      %v2759 = vmul.f32 %v2725, %v806
      %v2760 = vmul.f32 %v2727, %v806
      %v2761 = vmul.f32 %v2728, %v806
      %v2762 = vmul.f32 %v2729, %v806
      %v2763 = vmul.f32 %v2730, %v806
      %v2764 = vmul.f32 %v2692, %v842
      %v2765 = vmul.f32 %v2693, %v842
      %v2766 = vmul.f32 %v2694, %v842
      %v2767 = vmul.f32 %v2695, %v842
      %v2768 = vmul.f32 %v2696, %v842
      %v2769 = vmul.f32 %v2697, %v842
      %v2770 = vmul.f32 %v2698, %v842
      %v2771 = vmul.f32 %v2699, %v842
      %v2772 = vmul.f32 %v2700, %v842
      %v2773 = vmul.f32 %v2701, %v842
      %v2774 = vmul.f32 %v2702, %v842
      %v2775 = vmul.f32 %v2703, %v842
      %v2776 = vmul.f32 %v2704, %v842
      %v2777 = vmul.f32 %v2705, %v842
      %v2778 = vmul.f32 %v2706, %v842
      %v2779 = vmul.f32 %v2707, %v842
      %v2780 = vmul.f32 %v2708, %v842
      %v2781 = vmul.f32 %v2709, %v842
      %v2782 = vmul.f32 %v2710, %v842
      %v2783 = vmul.f32 %v2711, %v842
      %v2784 = vmul.f32 %v2712, %v842
      %v2785 = vmul.f32 %v2713, %v842
      %v2786 = vmul.f32 %v2714, %v842
      %v2787 = vmul.f32 %v2715, %v842
      %v2788 = vmul.f32 %v2716, %v842
      %v2789 = vmul.f32 %v2717, %v842
      %v2790 = vmul.f32 %v2718, %v842
      %v2791 = vmul.f32 %v2719, %v842
      %v2792 = vmul.f32 %v2720, %v842
      %v2793 = vmul.f32 %v2721, %v842
      %v2794 = vmul.f32 %v2722, %v842
      %v2795 = vmul.f32 %v2723, %v842
      %v2796 = vmul.f32 %v2724, %v842
      %v2797 = vmul.f32 %v2725, %v842
      %v2798 = vmul.f32 %v2726, %v842
      %v2799 = vmul.f32 %v2727, %v842
      %v2800 = vmul.f32 %v2728, %v842
      %v2801 = vmul.f32 %v2729, %v842
      %v2802 = vmul.f32 %v2730, %v842
      %v2803 = vmul.f32 %v2731, %v842
      %v2844 = vrot.slane %v2764, 1
      %v2845 = vrot.slane %v2765, 1
      %v2846 = vsel %vm923, %v2844, %v2845
      %v2847 = vrot.slane %v2766, 1
      %v2848 = vsel %vm923, %v2845, %v2847
      %v2849 = vrot.slane %v2767, 1
      %v2850 = vsel %vm923, %v2847, %v2849
      %v2851 = vrot.slane %v2768, 1
      %v2852 = vsel %vm923, %v2849, %v2851
      %v2853 = vrot.slane %v2769, 1
      %v2854 = vrot.slane %v2770, 1
      %v2855 = vsel %vm923, %v2853, %v2854
      %v2856 = vrot.slane %v2771, 1
      %v2857 = vsel %vm923, %v2854, %v2856
      %v2858 = vrot.slane %v2772, 1
      %v2859 = vsel %vm923, %v2856, %v2858
      %v2860 = vrot.slane %v2773, 1
      %v2861 = vsel %vm923, %v2858, %v2860
      %v2862 = vrot.slane %v2774, 1
      %v2863 = vrot.slane %v2775, 1
      %v2864 = vsel %vm923, %v2862, %v2863
      %v2865 = vrot.slane %v2776, 1
      %v2866 = vsel %vm923, %v2863, %v2865
      %v2867 = vrot.slane %v2777, 1
      %v2868 = vsel %vm923, %v2865, %v2867
      %v2869 = vrot.slane %v2778, 1
      %v2870 = vsel %vm923, %v2867, %v2869
      %v2871 = vrot.slane %v2779, 1
      %v2872 = vrot.slane %v2780, 1
      %v2873 = vsel %vm923, %v2871, %v2872
      %v2874 = vrot.slane %v2781, 1
      %v2875 = vsel %vm923, %v2872, %v2874
      %v2876 = vrot.slane %v2782, 1
      %v2877 = vsel %vm923, %v2874, %v2876
      %v2878 = vrot.slane %v2783, 1
      %v2879 = vsel %vm923, %v2876, %v2878
      %v2880 = vrot.slane %v2784, 1
      %v2881 = vrot.slane %v2785, 1
      %v2882 = vsel %vm923, %v2880, %v2881
      %v2883 = vrot.slane %v2786, 1
      %v2884 = vsel %vm923, %v2881, %v2883
      %v2885 = vrot.slane %v2787, 1
      %v2886 = vsel %vm923, %v2883, %v2885
      %v2887 = vrot.slane %v2788, 1
      %v2888 = vsel %vm923, %v2885, %v2887
      %v2889 = vrot.slane %v2789, 1
      %v2890 = vrot.slane %v2790, 1
      %v2891 = vsel %vm923, %v2889, %v2890
      %v2892 = vrot.slane %v2791, 1
      %v2893 = vsel %vm923, %v2890, %v2892
      %v2894 = vrot.slane %v2792, 1
      %v2895 = vsel %vm923, %v2892, %v2894
      %v2896 = vrot.slane %v2793, 1
      %v2897 = vsel %vm923, %v2894, %v2896
      %v2898 = vrot.slane %v2794, 1
      %v2899 = vrot.slane %v2795, 1
      %v2900 = vsel %vm923, %v2898, %v2899
      %v2901 = vrot.slane %v2796, 1
      %v2902 = vsel %vm923, %v2899, %v2901
      %v2903 = vrot.slane %v2797, 1
      %v2904 = vsel %vm923, %v2901, %v2903
      %v2905 = vrot.slane %v2798, 1
      %v2906 = vsel %vm923, %v2903, %v2905
      %v2907 = vrot.slane %v2799, 1
      %v2908 = vrot.slane %v2800, 1
      %v2909 = vsel %vm923, %v2907, %v2908
      %v2910 = vrot.slane %v2801, 1
      %v2911 = vsel %vm923, %v2908, %v2910
      %v2912 = vrot.slane %v2802, 1
      %v2913 = vsel %vm923, %v2910, %v2912
      %v2914 = vrot.slane %v2803, 1
      %v2915 = vsel %vm923, %v2912, %v2914
      %v2948 = vadd.f32 %v2732, %v2846
      %v2949 = vadd.f32 %v2733, %v2848
      %v2950 = vadd.f32 %v2734, %v2850
      %v2951 = vadd.f32 %v2735, %v2852
      %v2952 = vadd.f32 %v2736, %v2855
      %v2953 = vadd.f32 %v2737, %v2857
      %v2954 = vadd.f32 %v2738, %v2859
      %v2955 = vadd.f32 %v2739, %v2861
      %v2956 = vadd.f32 %v2740, %v2864
      %v2957 = vadd.f32 %v2741, %v2866
      %v2958 = vadd.f32 %v2742, %v2868
      %v2959 = vadd.f32 %v2743, %v2870
      %v2960 = vadd.f32 %v2744, %v2873
      %v2961 = vadd.f32 %v2745, %v2875
      %v2962 = vadd.f32 %v2746, %v2877
      %v2963 = vadd.f32 %v2747, %v2879
      %v2964 = vadd.f32 %v2748, %v2882
      %v2965 = vadd.f32 %v2749, %v2884
      %v2966 = vadd.f32 %v2750, %v2886
      %v2967 = vadd.f32 %v2751, %v2888
      %v2968 = vadd.f32 %v2752, %v2891
      %v2969 = vadd.f32 %v2753, %v2893
      %v2970 = vadd.f32 %v2754, %v2895
      %v2971 = vadd.f32 %v2755, %v2897
      %v2972 = vadd.f32 %v2756, %v2900
      %v2973 = vadd.f32 %v2757, %v2902
      %v2974 = vadd.f32 %v2758, %v2904
      %v2975 = vadd.f32 %v2759, %v2906
      %v2976 = vadd.f32 %v2760, %v2909
      %v2977 = vadd.f32 %v2761, %v2911
      %v2978 = vadd.f32 %v2762, %v2913
      %v2979 = vadd.f32 %v2763, %v2915
      %v2980 = vmul.f32 %v2692, %v1063
      %v2981 = vmul.f32 %v2693, %v1063
      %v2982 = vmul.f32 %v2694, %v1063
      %v2983 = vmul.f32 %v2695, %v1063
      %v2984 = vmul.f32 %v2696, %v1063
      %v2985 = vmul.f32 %v2697, %v1063
      %v2986 = vmul.f32 %v2698, %v1063
      %v2987 = vmul.f32 %v2699, %v1063
      %v2988 = vmul.f32 %v2700, %v1063
      %v2989 = vmul.f32 %v2701, %v1063
      %v2990 = vmul.f32 %v2702, %v1063
      %v2991 = vmul.f32 %v2703, %v1063
      %v2992 = vmul.f32 %v2704, %v1063
      %v2993 = vmul.f32 %v2705, %v1063
      %v2994 = vmul.f32 %v2706, %v1063
      %v2995 = vmul.f32 %v2707, %v1063
      %v2996 = vmul.f32 %v2708, %v1063
      %v2997 = vmul.f32 %v2709, %v1063
      %v2998 = vmul.f32 %v2710, %v1063
      %v2999 = vmul.f32 %v2711, %v1063
      %v3000 = vmul.f32 %v2712, %v1063
      %v3001 = vmul.f32 %v2713, %v1063
      %v3002 = vmul.f32 %v2714, %v1063
      %v3003 = vmul.f32 %v2715, %v1063
      %v3004 = vmul.f32 %v2716, %v1063
      %v3005 = vmul.f32 %v2717, %v1063
      %v3006 = vmul.f32 %v2718, %v1063
      %v3007 = vmul.f32 %v2719, %v1063
      %v3008 = vmul.f32 %v2720, %v1063
      %v3009 = vmul.f32 %v2721, %v1063
      %v3010 = vmul.f32 %v2722, %v1063
      %v3011 = vmul.f32 %v2723, %v1063
      %v3012 = vmul.f32 %v2724, %v1063
      %v3013 = vmul.f32 %v2725, %v1063
      %v3014 = vmul.f32 %v2726, %v1063
      %v3015 = vmul.f32 %v2727, %v1063
      %v3016 = vmul.f32 %v2728, %v1063
      %v3017 = vmul.f32 %v2729, %v1063
      %v3018 = vmul.f32 %v2730, %v1063
      %v3019 = vmul.f32 %v2731, %v1063
      %v3060 = vrot.slane %v2980, 2
      %v3061 = vrot.slane %v2981, 2
      %v3062 = vsel %vm1144, %v3060, %v3061
      %v3063 = vrot.slane %v2982, 2
      %v3064 = vsel %vm1144, %v3061, %v3063
      %v3065 = vrot.slane %v2983, 2
      %v3066 = vsel %vm1144, %v3063, %v3065
      %v3067 = vrot.slane %v2984, 2
      %v3068 = vsel %vm1144, %v3065, %v3067
      %v3069 = vrot.slane %v2985, 2
      %v3070 = vrot.slane %v2986, 2
      %v3071 = vsel %vm1144, %v3069, %v3070
      %v3072 = vrot.slane %v2987, 2
      %v3073 = vsel %vm1144, %v3070, %v3072
      %v3074 = vrot.slane %v2988, 2
      %v3075 = vsel %vm1144, %v3072, %v3074
      %v3076 = vrot.slane %v2989, 2
      %v3077 = vsel %vm1144, %v3074, %v3076
      %v3078 = vrot.slane %v2990, 2
      %v3079 = vrot.slane %v2991, 2
      %v3080 = vsel %vm1144, %v3078, %v3079
      %v3081 = vrot.slane %v2992, 2
      %v3082 = vsel %vm1144, %v3079, %v3081
      %v3083 = vrot.slane %v2993, 2
      %v3084 = vsel %vm1144, %v3081, %v3083
      %v3085 = vrot.slane %v2994, 2
      %v3086 = vsel %vm1144, %v3083, %v3085
      %v3087 = vrot.slane %v2995, 2
      %v3088 = vrot.slane %v2996, 2
      %v3089 = vsel %vm1144, %v3087, %v3088
      %v3090 = vrot.slane %v2997, 2
      %v3091 = vsel %vm1144, %v3088, %v3090
      %v3092 = vrot.slane %v2998, 2
      %v3093 = vsel %vm1144, %v3090, %v3092
      %v3094 = vrot.slane %v2999, 2
      %v3095 = vsel %vm1144, %v3092, %v3094
      %v3096 = vrot.slane %v3000, 2
      %v3097 = vrot.slane %v3001, 2
      %v3098 = vsel %vm1144, %v3096, %v3097
      %v3099 = vrot.slane %v3002, 2
      %v3100 = vsel %vm1144, %v3097, %v3099
      %v3101 = vrot.slane %v3003, 2
      %v3102 = vsel %vm1144, %v3099, %v3101
      %v3103 = vrot.slane %v3004, 2
      %v3104 = vsel %vm1144, %v3101, %v3103
      %v3105 = vrot.slane %v3005, 2
      %v3106 = vrot.slane %v3006, 2
      %v3107 = vsel %vm1144, %v3105, %v3106
      %v3108 = vrot.slane %v3007, 2
      %v3109 = vsel %vm1144, %v3106, %v3108
      %v3110 = vrot.slane %v3008, 2
      %v3111 = vsel %vm1144, %v3108, %v3110
      %v3112 = vrot.slane %v3009, 2
      %v3113 = vsel %vm1144, %v3110, %v3112
      %v3114 = vrot.slane %v3010, 2
      %v3115 = vrot.slane %v3011, 2
      %v3116 = vsel %vm1144, %v3114, %v3115
      %v3117 = vrot.slane %v3012, 2
      %v3118 = vsel %vm1144, %v3115, %v3117
      %v3119 = vrot.slane %v3013, 2
      %v3120 = vsel %vm1144, %v3117, %v3119
      %v3121 = vrot.slane %v3014, 2
      %v3122 = vsel %vm1144, %v3119, %v3121
      %v3123 = vrot.slane %v3015, 2
      %v3124 = vrot.slane %v3016, 2
      %v3125 = vsel %vm1144, %v3123, %v3124
      %v3126 = vrot.slane %v3017, 2
      %v3127 = vsel %vm1144, %v3124, %v3126
      %v3128 = vrot.slane %v3018, 2
      %v3129 = vsel %vm1144, %v3126, %v3128
      %v3130 = vrot.slane %v3019, 2
      %v3131 = vsel %vm1144, %v3128, %v3130
      %v3164 = vadd.f32 %v2948, %v3062
      %v3165 = vadd.f32 %v2949, %v3064
      %v3166 = vadd.f32 %v2950, %v3066
      %v3167 = vadd.f32 %v2951, %v3068
      %v3168 = vadd.f32 %v2952, %v3071
      %v3169 = vadd.f32 %v2953, %v3073
      %v3170 = vadd.f32 %v2954, %v3075
      %v3171 = vadd.f32 %v2955, %v3077
      %v3172 = vadd.f32 %v2956, %v3080
      %v3173 = vadd.f32 %v2957, %v3082
      %v3174 = vadd.f32 %v2958, %v3084
      %v3175 = vadd.f32 %v2959, %v3086
      %v3176 = vadd.f32 %v2960, %v3089
      %v3177 = vadd.f32 %v2961, %v3091
      %v3178 = vadd.f32 %v2962, %v3093
      %v3179 = vadd.f32 %v2963, %v3095
      %v3180 = vadd.f32 %v2964, %v3098
      %v3181 = vadd.f32 %v2965, %v3100
      %v3182 = vadd.f32 %v2966, %v3102
      %v3183 = vadd.f32 %v2967, %v3104
      %v3184 = vadd.f32 %v2968, %v3107
      %v3185 = vadd.f32 %v2969, %v3109
      %v3186 = vadd.f32 %v2970, %v3111
      %v3187 = vadd.f32 %v2971, %v3113
      %v3188 = vadd.f32 %v2972, %v3116
      %v3189 = vadd.f32 %v2973, %v3118
      %v3190 = vadd.f32 %v2974, %v3120
      %v3191 = vadd.f32 %v2975, %v3122
      %v3192 = vadd.f32 %v2976, %v3125
      %v3193 = vadd.f32 %v2977, %v3127
      %v3194 = vadd.f32 %v2978, %v3129
      %v3195 = vadd.f32 %v2979, %v3131
      %s3196 = scalar_lea.vmem %s746, 360 [#allocation2]
      %v3197 = vld [vmem:[%s3196] sm:$0xff]
      %v3198 = vld [vmem:[%s3196 + $0x8] sm:$0xff]
      %v3199 = vld [vmem:[%s3196 + $0x10] sm:$0xff]
      %v3200 = vld [vmem:[%s3196 + $0x18] sm:$0xff]
      %v3201 = vld [vmem:[%s3196 + $0x20] sm:$0x3]
      %v3202 = vld [vmem:[%s3196 + $0x28] sm:$0xff]
      %v3203 = vld [vmem:[%s3196 + $0x30] sm:$0xff]
      %v3204 = vld [vmem:[%s3196 + $0x38] sm:$0xff]
      %v3205 = vld [vmem:[%s3196 + $0x40] sm:$0xff]
      %v3206 = vld [vmem:[%s3196 + $0x48] sm:$0x3]
      %v3207 = vld [vmem:[%s3196 + $0x50] sm:$0xff]
      %v3208 = vld [vmem:[%s3196 + $0x58] sm:$0xff]
      %v3209 = vld [vmem:[%s3196 + $0x60] sm:$0xff]
      %v3210 = vld [vmem:[%s3196 + $0x68] sm:$0xff]
      %v3211 = vld [vmem:[%s3196 + $0x70] sm:$0x3]
      %v3212 = vld [vmem:[%s3196 + $0x78] sm:$0xff]
      %v3213 = vld [vmem:[%s3196 + $0x80] sm:$0xff]
      %v3214 = vld [vmem:[%s3196 + $0x88] sm:$0xff]
      %v3215 = vld [vmem:[%s3196 + $0x90] sm:$0xff]
      %v3216 = vld [vmem:[%s3196 + $0x98] sm:$0x3]
      %v3217 = vld [vmem:[%s3196 + $0xa0] sm:$0xff]
      %v3218 = vld [vmem:[%s3196 + $0xa8] sm:$0xff]
      %v3219 = vld [vmem:[%s3196 + $0xb0] sm:$0xff]
      %v3220 = vld [vmem:[%s3196 + $0xb8] sm:$0xff]
      %v3221 = vld [vmem:[%s3196 + $0xc0] sm:$0x3]
      %v3222 = vld [vmem:[%s3196 + $0xc8] sm:$0xff]
      %v3223 = vld [vmem:[%s3196 + $0xd0] sm:$0xff]
      %v3224 = vld [vmem:[%s3196 + $0xd8] sm:$0xff]
      %v3225 = vld [vmem:[%s3196 + $0xe0] sm:$0xff]
      %v3226 = vld [vmem:[%s3196 + $0xe8] sm:$0x3]
      %v3227 = vld [vmem:[%s3196 + $0xf0] sm:$0xff]
      %v3228 = vld [vmem:[%s3196 + $0xf8] sm:$0xff]
      %v3229 = vld [vmem:[%s3196 + $0x100] sm:$0xff]
      %v3230 = vld [vmem:[%s3196 + $0x108] sm:$0xff]
      %v3231 = vld [vmem:[%s3196 + $0x110] sm:$0x3]
      %v3232 = vld [vmem:[%s3196 + $0x118] sm:$0xff]
      %v3233 = vld [vmem:[%s3196 + $0x120] sm:$0xff]
      %v3234 = vld [vmem:[%s3196 + $0x128] sm:$0xff]
      %v3235 = vld [vmem:[%s3196 + $0x130] sm:$0xff]
      %v3236 = vld [vmem:[%s3196 + $0x138] sm:$0x3]
      %v3237 = vmul.f32 %v3197, %v1325
      %v3238 = vmul.f32 %v3198, %v1325
      %v3239 = vmul.f32 %v3199, %v1325
      %v3240 = vmul.f32 %v3200, %v1325
      %v3241 = vmul.f32 %v3202, %v1325
      %v3242 = vmul.f32 %v3203, %v1325
      %v3243 = vmul.f32 %v3204, %v1325
      %v3244 = vmul.f32 %v3205, %v1325
      %v3245 = vmul.f32 %v3207, %v1325
      %v3246 = vmul.f32 %v3208, %v1325
      %v3247 = vmul.f32 %v3209, %v1325
      %v3248 = vmul.f32 %v3210, %v1325
      %v3249 = vmul.f32 %v3212, %v1325
      %v3250 = vmul.f32 %v3213, %v1325
      %v3251 = vmul.f32 %v3214, %v1325
      %v3252 = vmul.f32 %v3215, %v1325
      %v3253 = vmul.f32 %v3217, %v1325
      %v3254 = vmul.f32 %v3218, %v1325
      %v3255 = vmul.f32 %v3219, %v1325
      %v3256 = vmul.f32 %v3220, %v1325
      %v3257 = vmul.f32 %v3222, %v1325
      %v3258 = vmul.f32 %v3223, %v1325
      %v3259 = vmul.f32 %v3224, %v1325
      %v3260 = vmul.f32 %v3225, %v1325
      %v3261 = vmul.f32 %v3227, %v1325
      %v3262 = vmul.f32 %v3228, %v1325
      %v3263 = vmul.f32 %v3229, %v1325
      %v3264 = vmul.f32 %v3230, %v1325
      %v3265 = vmul.f32 %v3232, %v1325
      %v3266 = vmul.f32 %v3233, %v1325
      %v3267 = vmul.f32 %v3234, %v1325
      %v3268 = vmul.f32 %v3235, %v1325
      %v3269 = vadd.f32 %v3164, %v3237
      %v3270 = vadd.f32 %v3165, %v3238
      %v3271 = vadd.f32 %v3166, %v3239
      %v3272 = vadd.f32 %v3167, %v3240
      %v3273 = vadd.f32 %v3168, %v3241
      %v3274 = vadd.f32 %v3169, %v3242
      %v3275 = vadd.f32 %v3170, %v3243
      %v3276 = vadd.f32 %v3171, %v3244
      %v3277 = vadd.f32 %v3172, %v3245
      %v3278 = vadd.f32 %v3173, %v3246
      %v3279 = vadd.f32 %v3174, %v3247
      %v3280 = vadd.f32 %v3175, %v3248
      %v3281 = vadd.f32 %v3176, %v3249
      %v3282 = vadd.f32 %v3177, %v3250
      %v3283 = vadd.f32 %v3178, %v3251
      %v3284 = vadd.f32 %v3179, %v3252
      %v3285 = vadd.f32 %v3180, %v3253
      %v3286 = vadd.f32 %v3181, %v3254
      %v3287 = vadd.f32 %v3182, %v3255
      %v3288 = vadd.f32 %v3183, %v3256
      %v3289 = vadd.f32 %v3184, %v3257
      %v3290 = vadd.f32 %v3185, %v3258
      %v3291 = vadd.f32 %v3186, %v3259
      %v3292 = vadd.f32 %v3187, %v3260
      %v3293 = vadd.f32 %v3188, %v3261
      %v3294 = vadd.f32 %v3189, %v3262
      %v3295 = vadd.f32 %v3190, %v3263
      %v3296 = vadd.f32 %v3191, %v3264
      %v3297 = vadd.f32 %v3192, %v3265
      %v3298 = vadd.f32 %v3193, %v3266
      %v3299 = vadd.f32 %v3194, %v3267
      %v3300 = vadd.f32 %v3195, %v3268
      %v3301 = vmul.f32 %v3197, %v1393
      %v3302 = vmul.f32 %v3198, %v1393
      %v3303 = vmul.f32 %v3199, %v1393
      %v3304 = vmul.f32 %v3200, %v1393
      %v3305 = vmul.f32 %v3201, %v1393
      %v3306 = vmul.f32 %v3202, %v1393
      %v3307 = vmul.f32 %v3203, %v1393
      %v3308 = vmul.f32 %v3204, %v1393
      %v3309 = vmul.f32 %v3205, %v1393
      %v3310 = vmul.f32 %v3206, %v1393
      %v3311 = vmul.f32 %v3207, %v1393
      %v3312 = vmul.f32 %v3208, %v1393
      %v3313 = vmul.f32 %v3209, %v1393
      %v3314 = vmul.f32 %v3210, %v1393
      %v3315 = vmul.f32 %v3211, %v1393
      %v3316 = vmul.f32 %v3212, %v1393
      %v3317 = vmul.f32 %v3213, %v1393
      %v3318 = vmul.f32 %v3214, %v1393
      %v3319 = vmul.f32 %v3215, %v1393
      %v3320 = vmul.f32 %v3216, %v1393
      %v3321 = vmul.f32 %v3217, %v1393
      %v3322 = vmul.f32 %v3218, %v1393
      %v3323 = vmul.f32 %v3219, %v1393
      %v3324 = vmul.f32 %v3220, %v1393
      %v3325 = vmul.f32 %v3221, %v1393
      %v3326 = vmul.f32 %v3222, %v1393
      %v3327 = vmul.f32 %v3223, %v1393
      %v3328 = vmul.f32 %v3224, %v1393
      %v3329 = vmul.f32 %v3225, %v1393
      %v3330 = vmul.f32 %v3226, %v1393
      %v3331 = vmul.f32 %v3227, %v1393
      %v3332 = vmul.f32 %v3228, %v1393
      %v3333 = vmul.f32 %v3229, %v1393
      %v3334 = vmul.f32 %v3230, %v1393
      %v3335 = vmul.f32 %v3231, %v1393
      %v3336 = vmul.f32 %v3232, %v1393
      %v3337 = vmul.f32 %v3233, %v1393
      %v3338 = vmul.f32 %v3234, %v1393
      %v3339 = vmul.f32 %v3235, %v1393
      %v3340 = vmul.f32 %v3236, %v1393
      %v3381 = vrot.slane %v3301, 1
      %v3382 = vrot.slane %v3302, 1
      %v3383 = vsel %vm923, %v3381, %v3382
      %v3384 = vrot.slane %v3303, 1
      %v3385 = vsel %vm923, %v3382, %v3384
      %v3386 = vrot.slane %v3304, 1
      %v3387 = vsel %vm923, %v3384, %v3386
      %v3388 = vrot.slane %v3305, 1
      %v3389 = vsel %vm923, %v3386, %v3388
      %v3390 = vrot.slane %v3306, 1
      %v3391 = vrot.slane %v3307, 1
      %v3392 = vsel %vm923, %v3390, %v3391
      %v3393 = vrot.slane %v3308, 1
      %v3394 = vsel %vm923, %v3391, %v3393
      %v3395 = vrot.slane %v3309, 1
      %v3396 = vsel %vm923, %v3393, %v3395
      %v3397 = vrot.slane %v3310, 1
      %v3398 = vsel %vm923, %v3395, %v3397
      %v3399 = vrot.slane %v3311, 1
      %v3400 = vrot.slane %v3312, 1
      %v3401 = vsel %vm923, %v3399, %v3400
      %v3402 = vrot.slane %v3313, 1
      %v3403 = vsel %vm923, %v3400, %v3402
      %v3404 = vrot.slane %v3314, 1
      %v3405 = vsel %vm923, %v3402, %v3404
      %v3406 = vrot.slane %v3315, 1
      %v3407 = vsel %vm923, %v3404, %v3406
      %v3408 = vrot.slane %v3316, 1
      %v3409 = vrot.slane %v3317, 1
      %v3410 = vsel %vm923, %v3408, %v3409
      %v3411 = vrot.slane %v3318, 1
      %v3412 = vsel %vm923, %v3409, %v3411
      %v3413 = vrot.slane %v3319, 1
      %v3414 = vsel %vm923, %v3411, %v3413
      %v3415 = vrot.slane %v3320, 1
      %v3416 = vsel %vm923, %v3413, %v3415
      %v3417 = vrot.slane %v3321, 1
      %v3418 = vrot.slane %v3322, 1
      %v3419 = vsel %vm923, %v3417, %v3418
      %v3420 = vrot.slane %v3323, 1
      %v3421 = vsel %vm923, %v3418, %v3420
      %v3422 = vrot.slane %v3324, 1
      %v3423 = vsel %vm923, %v3420, %v3422
      %v3424 = vrot.slane %v3325, 1
      %v3425 = vsel %vm923, %v3422, %v3424
      %v3426 = vrot.slane %v3326, 1
      %v3427 = vrot.slane %v3327, 1
      %v3428 = vsel %vm923, %v3426, %v3427
      %v3429 = vrot.slane %v3328, 1
      %v3430 = vsel %vm923, %v3427, %v3429
      %v3431 = vrot.slane %v3329, 1
      %v3432 = vsel %vm923, %v3429, %v3431
      %v3433 = vrot.slane %v3330, 1
      %v3434 = vsel %vm923, %v3431, %v3433
      %v3435 = vrot.slane %v3331, 1
      %v3436 = vrot.slane %v3332, 1
      %v3437 = vsel %vm923, %v3435, %v3436
      %v3438 = vrot.slane %v3333, 1
      %v3439 = vsel %vm923, %v3436, %v3438
      %v3440 = vrot.slane %v3334, 1
      %v3441 = vsel %vm923, %v3438, %v3440
      %v3442 = vrot.slane %v3335, 1
      %v3443 = vsel %vm923, %v3440, %v3442
      %v3444 = vrot.slane %v3336, 1
      %v3445 = vrot.slane %v3337, 1
      %v3446 = vsel %vm923, %v3444, %v3445
      %v3447 = vrot.slane %v3338, 1
      %v3448 = vsel %vm923, %v3445, %v3447
      %v3449 = vrot.slane %v3339, 1
      %v3450 = vsel %vm923, %v3447, %v3449
      %v3451 = vrot.slane %v3340, 1
      %v3452 = vsel %vm923, %v3449, %v3451
      %v3485 = vadd.f32 %v3269, %v3383
      %v3486 = vadd.f32 %v3270, %v3385
      %v3487 = vadd.f32 %v3271, %v3387
      %v3488 = vadd.f32 %v3272, %v3389
      %v3489 = vadd.f32 %v3273, %v3392
      %v3490 = vadd.f32 %v3274, %v3394
      %v3491 = vadd.f32 %v3275, %v3396
      %v3492 = vadd.f32 %v3276, %v3398
      %v3493 = vadd.f32 %v3277, %v3401
      %v3494 = vadd.f32 %v3278, %v3403
      %v3495 = vadd.f32 %v3279, %v3405
      %v3496 = vadd.f32 %v3280, %v3407
      %v3497 = vadd.f32 %v3281, %v3410
      %v3498 = vadd.f32 %v3282, %v3412
      %v3499 = vadd.f32 %v3283, %v3414
      %v3500 = vadd.f32 %v3284, %v3416
      %v3501 = vadd.f32 %v3285, %v3419
      %v3502 = vadd.f32 %v3286, %v3421
      %v3503 = vadd.f32 %v3287, %v3423
      %v3504 = vadd.f32 %v3288, %v3425
      %v3505 = vadd.f32 %v3289, %v3428
      %v3506 = vadd.f32 %v3290, %v3430
      %v3507 = vadd.f32 %v3291, %v3432
      %v3508 = vadd.f32 %v3292, %v3434
      %v3509 = vadd.f32 %v3293, %v3437
      %v3510 = vadd.f32 %v3294, %v3439
      %v3511 = vadd.f32 %v3295, %v3441
      %v3512 = vadd.f32 %v3296, %v3443
      %v3513 = vadd.f32 %v3297, %v3446
      %v3514 = vadd.f32 %v3298, %v3448
      %v3515 = vadd.f32 %v3299, %v3450
      %v3516 = vadd.f32 %v3300, %v3452
      %v3517 = vmul.f32 %v3197, %v1613
      %v3518 = vmul.f32 %v3198, %v1613
      %v3519 = vmul.f32 %v3199, %v1613
      %v3520 = vmul.f32 %v3200, %v1613
      %v3521 = vmul.f32 %v3201, %v1613
      %v3522 = vmul.f32 %v3202, %v1613
      %v3523 = vmul.f32 %v3203, %v1613
      %v3524 = vmul.f32 %v3204, %v1613
      %v3525 = vmul.f32 %v3205, %v1613
      %v3526 = vmul.f32 %v3206, %v1613
      %v3527 = vmul.f32 %v3207, %v1613
      %v3528 = vmul.f32 %v3208, %v1613
      %v3529 = vmul.f32 %v3209, %v1613
      %v3530 = vmul.f32 %v3210, %v1613
      %v3531 = vmul.f32 %v3211, %v1613
      %v3532 = vmul.f32 %v3212, %v1613
      %v3533 = vmul.f32 %v3213, %v1613
      %v3534 = vmul.f32 %v3214, %v1613
      %v3535 = vmul.f32 %v3215, %v1613
      %v3536 = vmul.f32 %v3216, %v1613
      %v3537 = vmul.f32 %v3217, %v1613
      %v3538 = vmul.f32 %v3218, %v1613
      %v3539 = vmul.f32 %v3219, %v1613
      %v3540 = vmul.f32 %v3220, %v1613
      %v3541 = vmul.f32 %v3221, %v1613
      %v3542 = vmul.f32 %v3222, %v1613
      %v3543 = vmul.f32 %v3223, %v1613
      %v3544 = vmul.f32 %v3224, %v1613
      %v3545 = vmul.f32 %v3225, %v1613
      %v3546 = vmul.f32 %v3226, %v1613
      %v3547 = vmul.f32 %v3227, %v1613
      %v3548 = vmul.f32 %v3228, %v1613
      %v3549 = vmul.f32 %v3229, %v1613
      %v3550 = vmul.f32 %v3230, %v1613
      %v3551 = vmul.f32 %v3231, %v1613
      %v3552 = vmul.f32 %v3232, %v1613
      %v3553 = vmul.f32 %v3233, %v1613
      %v3554 = vmul.f32 %v3234, %v1613
      %v3555 = vmul.f32 %v3235, %v1613
      %v3556 = vmul.f32 %v3236, %v1613
      %v3597 = vrot.slane %v3517, 2
      %v3598 = vrot.slane %v3518, 2
      %v3599 = vsel %vm1144, %v3597, %v3598
      %v3600 = vrot.slane %v3519, 2
      %v3601 = vsel %vm1144, %v3598, %v3600
      %v3602 = vrot.slane %v3520, 2
      %v3603 = vsel %vm1144, %v3600, %v3602
      %v3604 = vrot.slane %v3521, 2
      %v3605 = vsel %vm1144, %v3602, %v3604
      %v3606 = vrot.slane %v3522, 2
      %v3607 = vrot.slane %v3523, 2
      %v3608 = vsel %vm1144, %v3606, %v3607
      %v3609 = vrot.slane %v3524, 2
      %v3610 = vsel %vm1144, %v3607, %v3609
      %v3611 = vrot.slane %v3525, 2
      %v3612 = vsel %vm1144, %v3609, %v3611
      %v3613 = vrot.slane %v3526, 2
      %v3614 = vsel %vm1144, %v3611, %v3613
      %v3615 = vrot.slane %v3527, 2
      %v3616 = vrot.slane %v3528, 2
      %v3617 = vsel %vm1144, %v3615, %v3616
      %v3618 = vrot.slane %v3529, 2
      %v3619 = vsel %vm1144, %v3616, %v3618
      %v3620 = vrot.slane %v3530, 2
      %v3621 = vsel %vm1144, %v3618, %v3620
      %v3622 = vrot.slane %v3531, 2
      %v3623 = vsel %vm1144, %v3620, %v3622
      %v3624 = vrot.slane %v3532, 2
      %v3625 = vrot.slane %v3533, 2
      %v3626 = vsel %vm1144, %v3624, %v3625
      %v3627 = vrot.slane %v3534, 2
      %v3628 = vsel %vm1144, %v3625, %v3627
      %v3629 = vrot.slane %v3535, 2
      %v3630 = vsel %vm1144, %v3627, %v3629
      %v3631 = vrot.slane %v3536, 2
      %v3632 = vsel %vm1144, %v3629, %v3631
      %v3633 = vrot.slane %v3537, 2
      %v3634 = vrot.slane %v3538, 2
      %v3635 = vsel %vm1144, %v3633, %v3634
      %v3636 = vrot.slane %v3539, 2
      %v3637 = vsel %vm1144, %v3634, %v3636
      %v3638 = vrot.slane %v3540, 2
      %v3639 = vsel %vm1144, %v3636, %v3638
      %v3640 = vrot.slane %v3541, 2
      %v3641 = vsel %vm1144, %v3638, %v3640
      %v3642 = vrot.slane %v3542, 2
      %v3643 = vrot.slane %v3543, 2
      %v3644 = vsel %vm1144, %v3642, %v3643
      %v3645 = vrot.slane %v3544, 2
      %v3646 = vsel %vm1144, %v3643, %v3645
      %v3647 = vrot.slane %v3545, 2
      %v3648 = vsel %vm1144, %v3645, %v3647
      %v3649 = vrot.slane %v3546, 2
      %v3650 = vsel %vm1144, %v3647, %v3649
      %v3651 = vrot.slane %v3547, 2
      %v3652 = vrot.slane %v3548, 2
      %v3653 = vsel %vm1144, %v3651, %v3652
      %v3654 = vrot.slane %v3549, 2
      %v3655 = vsel %vm1144, %v3652, %v3654
      %v3656 = vrot.slane %v3550, 2
      %v3657 = vsel %vm1144, %v3654, %v3656
      %v3658 = vrot.slane %v3551, 2
      %v3659 = vsel %vm1144, %v3656, %v3658
      %v3660 = vrot.slane %v3552, 2
      %v3661 = vrot.slane %v3553, 2
      %v3662 = vsel %vm1144, %v3660, %v3661
      %v3663 = vrot.slane %v3554, 2
      %v3664 = vsel %vm1144, %v3661, %v3663
      %v3665 = vrot.slane %v3555, 2
      %v3666 = vsel %vm1144, %v3663, %v3665
      %v3667 = vrot.slane %v3556, 2
      %v3668 = vsel %vm1144, %v3665, %v3667
      %v3701 = vadd.f32 %v3485, %v3599
      %v3702 = vadd.f32 %v3486, %v3601
      %v3703 = vadd.f32 %v3487, %v3603
      %v3704 = vadd.f32 %v3488, %v3605
      %v3705 = vadd.f32 %v3489, %v3608
      %v3706 = vadd.f32 %v3490, %v3610
      %v3707 = vadd.f32 %v3491, %v3612
      %v3708 = vadd.f32 %v3492, %v3614
      %v3709 = vadd.f32 %v3493, %v3617
      %v3710 = vadd.f32 %v3494, %v3619
      %v3711 = vadd.f32 %v3495, %v3621
      %v3712 = vadd.f32 %v3496, %v3623
      %v3713 = vadd.f32 %v3497, %v3626
      %v3714 = vadd.f32 %v3498, %v3628
      %v3715 = vadd.f32 %v3499, %v3630
      %v3716 = vadd.f32 %v3500, %v3632
      %v3717 = vadd.f32 %v3501, %v3635
      %v3718 = vadd.f32 %v3502, %v3637
      %v3719 = vadd.f32 %v3503, %v3639
      %v3720 = vadd.f32 %v3504, %v3641
      %v3721 = vadd.f32 %v3505, %v3644
      %v3722 = vadd.f32 %v3506, %v3646
      %v3723 = vadd.f32 %v3507, %v3648
      %v3724 = vadd.f32 %v3508, %v3650
      %v3725 = vadd.f32 %v3509, %v3653
      %v3726 = vadd.f32 %v3510, %v3655
      %v3727 = vadd.f32 %v3511, %v3657
      %v3728 = vadd.f32 %v3512, %v3659
      %v3729 = vadd.f32 %v3513, %v3662
      %v3730 = vadd.f32 %v3514, %v3664
      %v3731 = vadd.f32 %v3515, %v3666
      %v3732 = vadd.f32 %v3516, %v3668
      %s3733 = scalar_lea.vmem %s746, 400 [#allocation2]
      %v3734 = vld [vmem:[%s3733] sm:$0xff]
      %v3735 = vld [vmem:[%s3733 + $0x8] sm:$0xff]
      %v3736 = vld [vmem:[%s3733 + $0x10] sm:$0xff]
      %v3737 = vld [vmem:[%s3733 + $0x18] sm:$0xff]
      %v3738 = vld [vmem:[%s3733 + $0x20] sm:$0x3]
      %v3739 = vld [vmem:[%s3733 + $0x28] sm:$0xff]
      %v3740 = vld [vmem:[%s3733 + $0x30] sm:$0xff]
      %v3741 = vld [vmem:[%s3733 + $0x38] sm:$0xff]
      %v3742 = vld [vmem:[%s3733 + $0x40] sm:$0xff]
      %v3743 = vld [vmem:[%s3733 + $0x48] sm:$0x3]
      %v3744 = vld [vmem:[%s3733 + $0x50] sm:$0xff]
      %v3745 = vld [vmem:[%s3733 + $0x58] sm:$0xff]
      %v3746 = vld [vmem:[%s3733 + $0x60] sm:$0xff]
      %v3747 = vld [vmem:[%s3733 + $0x68] sm:$0xff]
      %v3748 = vld [vmem:[%s3733 + $0x70] sm:$0x3]
      %v3749 = vld [vmem:[%s3733 + $0x78] sm:$0xff]
      %v3750 = vld [vmem:[%s3733 + $0x80] sm:$0xff]
      %v3751 = vld [vmem:[%s3733 + $0x88] sm:$0xff]
      %v3752 = vld [vmem:[%s3733 + $0x90] sm:$0xff]
      %v3753 = vld [vmem:[%s3733 + $0x98] sm:$0x3]
      %v3754 = vld [vmem:[%s3733 + $0xa0] sm:$0xff]
      %v3755 = vld [vmem:[%s3733 + $0xa8] sm:$0xff]
      %v3756 = vld [vmem:[%s3733 + $0xb0] sm:$0xff]
      %v3757 = vld [vmem:[%s3733 + $0xb8] sm:$0xff]
      %v3758 = vld [vmem:[%s3733 + $0xc0] sm:$0x3]
      %v3759 = vld [vmem:[%s3733 + $0xc8] sm:$0xff]
      %v3760 = vld [vmem:[%s3733 + $0xd0] sm:$0xff]
      %v3761 = vld [vmem:[%s3733 + $0xd8] sm:$0xff]
      %v3762 = vld [vmem:[%s3733 + $0xe0] sm:$0xff]
      %v3763 = vld [vmem:[%s3733 + $0xe8] sm:$0x3]
      %v3764 = vld [vmem:[%s3733 + $0xf0] sm:$0xff]
      %v3765 = vld [vmem:[%s3733 + $0xf8] sm:$0xff]
      %v3766 = vld [vmem:[%s3733 + $0x100] sm:$0xff]
      %v3767 = vld [vmem:[%s3733 + $0x108] sm:$0xff]
      %v3768 = vld [vmem:[%s3733 + $0x110] sm:$0x3]
      %v3769 = vld [vmem:[%s3733 + $0x118] sm:$0xff]
      %v3770 = vld [vmem:[%s3733 + $0x120] sm:$0xff]
      %v3771 = vld [vmem:[%s3733 + $0x128] sm:$0xff]
      %v3772 = vld [vmem:[%s3733 + $0x130] sm:$0xff]
      %v3773 = vld [vmem:[%s3733 + $0x138] sm:$0x3]
      %v3774 = vmul.f32 %v3734, %v1874
      %v3775 = vmul.f32 %v3735, %v1874
      %v3776 = vmul.f32 %v3736, %v1874
      %v3777 = vmul.f32 %v3737, %v1874
      %v3778 = vmul.f32 %v3739, %v1874
      %v3779 = vmul.f32 %v3740, %v1874
      %v3780 = vmul.f32 %v3741, %v1874
      %v3781 = vmul.f32 %v3742, %v1874
      %v3782 = vmul.f32 %v3744, %v1874
      %v3783 = vmul.f32 %v3745, %v1874
      %v3784 = vmul.f32 %v3746, %v1874
      %v3785 = vmul.f32 %v3747, %v1874
      %v3786 = vmul.f32 %v3749, %v1874
      %v3787 = vmul.f32 %v3750, %v1874
      %v3788 = vmul.f32 %v3751, %v1874
      %v3789 = vmul.f32 %v3752, %v1874
      %v3790 = vmul.f32 %v3754, %v1874
      %v3791 = vmul.f32 %v3755, %v1874
      %v3792 = vmul.f32 %v3756, %v1874
      %v3793 = vmul.f32 %v3757, %v1874
      %v3794 = vmul.f32 %v3759, %v1874
      %v3795 = vmul.f32 %v3760, %v1874
      %v3796 = vmul.f32 %v3761, %v1874
      %v3797 = vmul.f32 %v3762, %v1874
      %v3798 = vmul.f32 %v3764, %v1874
      %v3799 = vmul.f32 %v3765, %v1874
      %v3800 = vmul.f32 %v3766, %v1874
      %v3801 = vmul.f32 %v3767, %v1874
      %v3802 = vmul.f32 %v3769, %v1874
      %v3803 = vmul.f32 %v3770, %v1874
      %v3804 = vmul.f32 %v3771, %v1874
      %v3805 = vmul.f32 %v3772, %v1874
      %v3806 = vadd.f32 %v3701, %v3774
      %v3807 = vadd.f32 %v3702, %v3775
      %v3808 = vadd.f32 %v3703, %v3776
      %v3809 = vadd.f32 %v3704, %v3777
      %v3810 = vadd.f32 %v3705, %v3778
      %v3811 = vadd.f32 %v3706, %v3779
      %v3812 = vadd.f32 %v3707, %v3780
      %v3813 = vadd.f32 %v3708, %v3781
      %v3814 = vadd.f32 %v3709, %v3782
      %v3815 = vadd.f32 %v3710, %v3783
      %v3816 = vadd.f32 %v3711, %v3784
      %v3817 = vadd.f32 %v3712, %v3785
      %v3818 = vadd.f32 %v3713, %v3786
      %v3819 = vadd.f32 %v3714, %v3787
      %v3820 = vadd.f32 %v3715, %v3788
      %v3821 = vadd.f32 %v3716, %v3789
      %v3822 = vadd.f32 %v3717, %v3790
      %v3823 = vadd.f32 %v3718, %v3791
      %v3824 = vadd.f32 %v3719, %v3792
      %v3825 = vadd.f32 %v3720, %v3793
      %v3826 = vadd.f32 %v3721, %v3794
      %v3827 = vadd.f32 %v3722, %v3795
      %v3828 = vadd.f32 %v3723, %v3796
      %v3829 = vadd.f32 %v3724, %v3797
      %v3830 = vadd.f32 %v3725, %v3798
      %v3831 = vadd.f32 %v3726, %v3799
      %v3832 = vadd.f32 %v3727, %v3800
      %v3833 = vadd.f32 %v3728, %v3801
      %v3834 = vadd.f32 %v3729, %v3802
      %v3835 = vadd.f32 %v3730, %v3803
      %v3836 = vadd.f32 %v3731, %v3804
      %v3837 = vadd.f32 %v3732, %v3805
      %v3838 = vmul.f32 %v3734, %v1942
      %v3839 = vmul.f32 %v3735, %v1942
      %v3840 = vmul.f32 %v3736, %v1942
      %v3841 = vmul.f32 %v3737, %v1942
      %v3842 = vmul.f32 %v3738, %v1942
      %v3843 = vmul.f32 %v3739, %v1942
      %v3844 = vmul.f32 %v3740, %v1942
      %v3845 = vmul.f32 %v3741, %v1942
      %v3846 = vmul.f32 %v3742, %v1942
      %v3847 = vmul.f32 %v3743, %v1942
      %v3848 = vmul.f32 %v3744, %v1942
      %v3849 = vmul.f32 %v3745, %v1942
      %v3850 = vmul.f32 %v3746, %v1942
      %v3851 = vmul.f32 %v3747, %v1942
      %v3852 = vmul.f32 %v3748, %v1942
      %v3853 = vmul.f32 %v3749, %v1942
      %v3854 = vmul.f32 %v3750, %v1942
      %v3855 = vmul.f32 %v3751, %v1942
      %v3856 = vmul.f32 %v3752, %v1942
      %v3857 = vmul.f32 %v3753, %v1942
      %v3858 = vmul.f32 %v3754, %v1942
      %v3859 = vmul.f32 %v3755, %v1942
      %v3860 = vmul.f32 %v3756, %v1942
      %v3861 = vmul.f32 %v3757, %v1942
      %v3862 = vmul.f32 %v3758, %v1942
      %v3863 = vmul.f32 %v3759, %v1942
      %v3864 = vmul.f32 %v3760, %v1942
      %v3865 = vmul.f32 %v3761, %v1942
      %v3866 = vmul.f32 %v3762, %v1942
      %v3867 = vmul.f32 %v3763, %v1942
      %v3868 = vmul.f32 %v3764, %v1942
      %v3869 = vmul.f32 %v3765, %v1942
      %v3870 = vmul.f32 %v3766, %v1942
      %v3871 = vmul.f32 %v3767, %v1942
      %v3872 = vmul.f32 %v3768, %v1942
      %v3873 = vmul.f32 %v3769, %v1942
      %v3874 = vmul.f32 %v3770, %v1942
      %v3875 = vmul.f32 %v3771, %v1942
      %v3876 = vmul.f32 %v3772, %v1942
      %v3877 = vmul.f32 %v3773, %v1942
      %v3918 = vrot.slane %v3838, 1
      %v3919 = vrot.slane %v3839, 1
      %v3920 = vsel %vm923, %v3918, %v3919
      %v3921 = vrot.slane %v3840, 1
      %v3922 = vsel %vm923, %v3919, %v3921
      %v3923 = vrot.slane %v3841, 1
      %v3924 = vsel %vm923, %v3921, %v3923
      %v3925 = vrot.slane %v3842, 1
      %v3926 = vsel %vm923, %v3923, %v3925
      %v3927 = vrot.slane %v3843, 1
      %v3928 = vrot.slane %v3844, 1
      %v3929 = vsel %vm923, %v3927, %v3928
      %v3930 = vrot.slane %v3845, 1
      %v3931 = vsel %vm923, %v3928, %v3930
      %v3932 = vrot.slane %v3846, 1
      %v3933 = vsel %vm923, %v3930, %v3932
      %v3934 = vrot.slane %v3847, 1
      %v3935 = vsel %vm923, %v3932, %v3934
      %v3936 = vrot.slane %v3848, 1
      %v3937 = vrot.slane %v3849, 1
      %v3938 = vsel %vm923, %v3936, %v3937
      %v3939 = vrot.slane %v3850, 1
      %v3940 = vsel %vm923, %v3937, %v3939
      %v3941 = vrot.slane %v3851, 1
      %v3942 = vsel %vm923, %v3939, %v3941
      %v3943 = vrot.slane %v3852, 1
      %v3944 = vsel %vm923, %v3941, %v3943
      %v3945 = vrot.slane %v3853, 1
      %v3946 = vrot.slane %v3854, 1
      %v3947 = vsel %vm923, %v3945, %v3946
      %v3948 = vrot.slane %v3855, 1
      %v3949 = vsel %vm923, %v3946, %v3948
      %v3950 = vrot.slane %v3856, 1
      %v3951 = vsel %vm923, %v3948, %v3950
      %v3952 = vrot.slane %v3857, 1
      %v3953 = vsel %vm923, %v3950, %v3952
      %v3954 = vrot.slane %v3858, 1
      %v3955 = vrot.slane %v3859, 1
      %v3956 = vsel %vm923, %v3954, %v3955
      %v3957 = vrot.slane %v3860, 1
      %v3958 = vsel %vm923, %v3955, %v3957
      %v3959 = vrot.slane %v3861, 1
      %v3960 = vsel %vm923, %v3957, %v3959
      %v3961 = vrot.slane %v3862, 1
      %v3962 = vsel %vm923, %v3959, %v3961
      %v3963 = vrot.slane %v3863, 1
      %v3964 = vrot.slane %v3864, 1
      %v3965 = vsel %vm923, %v3963, %v3964
      %v3966 = vrot.slane %v3865, 1
      %v3967 = vsel %vm923, %v3964, %v3966
      %v3968 = vrot.slane %v3866, 1
      %v3969 = vsel %vm923, %v3966, %v3968
      %v3970 = vrot.slane %v3867, 1
      %v3971 = vsel %vm923, %v3968, %v3970
      %v3972 = vrot.slane %v3868, 1
      %v3973 = vrot.slane %v3869, 1
      %v3974 = vsel %vm923, %v3972, %v3973
      %v3975 = vrot.slane %v3870, 1
      %v3976 = vsel %vm923, %v3973, %v3975
      %v3977 = vrot.slane %v3871, 1
      %v3978 = vsel %vm923, %v3975, %v3977
      %v3979 = vrot.slane %v3872, 1
      %v3980 = vsel %vm923, %v3977, %v3979
      %v3981 = vrot.slane %v3873, 1
      %v3982 = vrot.slane %v3874, 1
      %v3983 = vsel %vm923, %v3981, %v3982
      %v3984 = vrot.slane %v3875, 1
      %v3985 = vsel %vm923, %v3982, %v3984
      %v3986 = vrot.slane %v3876, 1
      %v3987 = vsel %vm923, %v3984, %v3986
      %v3988 = vrot.slane %v3877, 1
      %v3989 = vsel %vm923, %v3986, %v3988
      %v4022 = vadd.f32 %v3806, %v3920
      %v4023 = vadd.f32 %v3807, %v3922
      %v4024 = vadd.f32 %v3808, %v3924
      %v4025 = vadd.f32 %v3809, %v3926
      %v4026 = vadd.f32 %v3810, %v3929
      %v4027 = vadd.f32 %v3811, %v3931
      %v4028 = vadd.f32 %v3812, %v3933
      %v4029 = vadd.f32 %v3813, %v3935
      %v4030 = vadd.f32 %v3814, %v3938
      %v4031 = vadd.f32 %v3815, %v3940
      %v4032 = vadd.f32 %v3816, %v3942
      %v4033 = vadd.f32 %v3817, %v3944
      %v4034 = vadd.f32 %v3818, %v3947
      %v4035 = vadd.f32 %v3819, %v3949
      %v4036 = vadd.f32 %v3820, %v3951
      %v4037 = vadd.f32 %v3821, %v3953
      %v4038 = vadd.f32 %v3822, %v3956
      %v4039 = vadd.f32 %v3823, %v3958
      %v4040 = vadd.f32 %v3824, %v3960
      %v4041 = vadd.f32 %v3825, %v3962
      %v4042 = vadd.f32 %v3826, %v3965
      %v4043 = vadd.f32 %v3827, %v3967
      %v4044 = vadd.f32 %v3828, %v3969
      %v4045 = vadd.f32 %v3829, %v3971
      %v4046 = vadd.f32 %v3830, %v3974
      %v4047 = vadd.f32 %v3831, %v3976
      %v4048 = vadd.f32 %v3832, %v3978
      %v4049 = vadd.f32 %v3833, %v3980
      %v4050 = vadd.f32 %v3834, %v3983
      %v4051 = vadd.f32 %v3835, %v3985
      %v4052 = vadd.f32 %v3836, %v3987
      %v4053 = vadd.f32 %v3837, %v3989
      %v4054 = vmul.f32 %v3734, %v2162
      %v4055 = vmul.f32 %v3735, %v2162
      %v4056 = vmul.f32 %v3736, %v2162
      %v4057 = vmul.f32 %v3737, %v2162
      %v4058 = vmul.f32 %v3738, %v2162
      %v4059 = vmul.f32 %v3739, %v2162
      %v4060 = vmul.f32 %v3740, %v2162
      %v4061 = vmul.f32 %v3741, %v2162
      %v4062 = vmul.f32 %v3742, %v2162
      %v4063 = vmul.f32 %v3743, %v2162
      %v4064 = vmul.f32 %v3744, %v2162
      %v4065 = vmul.f32 %v3745, %v2162
      %v4066 = vmul.f32 %v3746, %v2162
      %v4067 = vmul.f32 %v3747, %v2162
      %v4068 = vmul.f32 %v3748, %v2162
      %v4069 = vmul.f32 %v3749, %v2162
      %v4070 = vmul.f32 %v3750, %v2162
      %v4071 = vmul.f32 %v3751, %v2162
      %v4072 = vmul.f32 %v3752, %v2162
      %v4073 = vmul.f32 %v3753, %v2162
      %v4074 = vmul.f32 %v3754, %v2162
      %v4075 = vmul.f32 %v3755, %v2162
      %v4076 = vmul.f32 %v3756, %v2162
      %v4077 = vmul.f32 %v3757, %v2162
      %v4078 = vmul.f32 %v3758, %v2162
      %v4079 = vmul.f32 %v3759, %v2162
      %v4080 = vmul.f32 %v3760, %v2162
      %v4081 = vmul.f32 %v3761, %v2162
      %v4082 = vmul.f32 %v3762, %v2162
      %v4083 = vmul.f32 %v3763, %v2162
      %v4084 = vmul.f32 %v3764, %v2162
      %v4085 = vmul.f32 %v3765, %v2162
      %v4086 = vmul.f32 %v3766, %v2162
      %v4087 = vmul.f32 %v3767, %v2162
      %v4088 = vmul.f32 %v3768, %v2162
      %v4089 = vmul.f32 %v3769, %v2162
      %v4090 = vmul.f32 %v3770, %v2162
      %v4091 = vmul.f32 %v3771, %v2162
      %v4092 = vmul.f32 %v3772, %v2162
      %v4093 = vmul.f32 %v3773, %v2162
      %v4134 = vrot.slane %v4054, 2
      %v4135 = vrot.slane %v4055, 2
      %v4136 = vsel %vm1144, %v4134, %v4135
      %v4137 = vrot.slane %v4056, 2
      %v4138 = vsel %vm1144, %v4135, %v4137
      %v4139 = vrot.slane %v4057, 2
      %v4140 = vsel %vm1144, %v4137, %v4139
      %v4141 = vrot.slane %v4058, 2
      %v4142 = vsel %vm1144, %v4139, %v4141
      %v4143 = vrot.slane %v4059, 2
      %v4144 = vrot.slane %v4060, 2
      %v4145 = vsel %vm1144, %v4143, %v4144
      %v4146 = vrot.slane %v4061, 2
      %v4147 = vsel %vm1144, %v4144, %v4146
      %v4148 = vrot.slane %v4062, 2
      %v4149 = vsel %vm1144, %v4146, %v4148
      %v4150 = vrot.slane %v4063, 2
      %v4151 = vsel %vm1144, %v4148, %v4150
      %v4152 = vrot.slane %v4064, 2
      %v4153 = vrot.slane %v4065, 2
      %v4154 = vsel %vm1144, %v4152, %v4153
      %v4155 = vrot.slane %v4066, 2
      %v4156 = vsel %vm1144, %v4153, %v4155
      %v4157 = vrot.slane %v4067, 2
      %v4158 = vsel %vm1144, %v4155, %v4157
      %v4159 = vrot.slane %v4068, 2
      %v4160 = vsel %vm1144, %v4157, %v4159
      %v4161 = vrot.slane %v4069, 2
      %v4162 = vrot.slane %v4070, 2
      %v4163 = vsel %vm1144, %v4161, %v4162
      %v4164 = vrot.slane %v4071, 2
      %v4165 = vsel %vm1144, %v4162, %v4164
      %v4166 = vrot.slane %v4072, 2
      %v4167 = vsel %vm1144, %v4164, %v4166
      %v4168 = vrot.slane %v4073, 2
      %v4169 = vsel %vm1144, %v4166, %v4168
      %v4170 = vrot.slane %v4074, 2
      %v4171 = vrot.slane %v4075, 2
      %v4172 = vsel %vm1144, %v4170, %v4171
      %v4173 = vrot.slane %v4076, 2
      %v4174 = vsel %vm1144, %v4171, %v4173
      %v4175 = vrot.slane %v4077, 2
      %v4176 = vsel %vm1144, %v4173, %v4175
      %v4177 = vrot.slane %v4078, 2
      %v4178 = vsel %vm1144, %v4175, %v4177
      %v4179 = vrot.slane %v4079, 2
      %v4180 = vrot.slane %v4080, 2
      %v4181 = vsel %vm1144, %v4179, %v4180
      %v4182 = vrot.slane %v4081, 2
      %v4183 = vsel %vm1144, %v4180, %v4182
      %v4184 = vrot.slane %v4082, 2
      %v4185 = vsel %vm1144, %v4182, %v4184
      %v4186 = vrot.slane %v4083, 2
      %v4187 = vsel %vm1144, %v4184, %v4186
      %v4188 = vrot.slane %v4084, 2
      %v4189 = vrot.slane %v4085, 2
      %v4190 = vsel %vm1144, %v4188, %v4189
      %v4191 = vrot.slane %v4086, 2
      %v4192 = vsel %vm1144, %v4189, %v4191
      %v4193 = vrot.slane %v4087, 2
      %v4194 = vsel %vm1144, %v4191, %v4193
      %v4195 = vrot.slane %v4088, 2
      %v4196 = vsel %vm1144, %v4193, %v4195
      %v4197 = vrot.slane %v4089, 2
      %v4198 = vrot.slane %v4090, 2
      %v4199 = vsel %vm1144, %v4197, %v4198
      %v4200 = vrot.slane %v4091, 2
      %v4201 = vsel %vm1144, %v4198, %v4200
      %v4202 = vrot.slane %v4092, 2
      %v4203 = vsel %vm1144, %v4200, %v4202
      %v4204 = vrot.slane %v4093, 2
      %v4205 = vsel %vm1144, %v4202, %v4204
      %v4238 = vadd.f32 %v4022, %v4136
      %v4239 = vadd.f32 %v4023, %v4138
      %v4240 = vadd.f32 %v4024, %v4140
      %v4241 = vadd.f32 %v4025, %v4142
      %v4242 = vadd.f32 %v4026, %v4145
      %v4243 = vadd.f32 %v4027, %v4147
      %v4244 = vadd.f32 %v4028, %v4149
      %v4245 = vadd.f32 %v4029, %v4151
      %v4246 = vadd.f32 %v4030, %v4154
      %v4247 = vadd.f32 %v4031, %v4156
      %v4248 = vadd.f32 %v4032, %v4158
      %v4249 = vadd.f32 %v4033, %v4160
      %v4250 = vadd.f32 %v4034, %v4163
      %v4251 = vadd.f32 %v4035, %v4165
      %v4252 = vadd.f32 %v4036, %v4167
      %v4253 = vadd.f32 %v4037, %v4169
      %v4254 = vadd.f32 %v4038, %v4172
      %v4255 = vadd.f32 %v4039, %v4174
      %v4256 = vadd.f32 %v4040, %v4176
      %v4257 = vadd.f32 %v4041, %v4178
      %v4258 = vadd.f32 %v4042, %v4181
      %v4259 = vadd.f32 %v4043, %v4183
      %v4260 = vadd.f32 %v4044, %v4185
      %v4261 = vadd.f32 %v4045, %v4187
      %v4262 = vadd.f32 %v4046, %v4190
      %v4263 = vadd.f32 %v4047, %v4192
      %v4264 = vadd.f32 %v4048, %v4194
      %v4265 = vadd.f32 %v4049, %v4196
      %v4266 = vadd.f32 %v4050, %v4199
      %v4267 = vadd.f32 %v4051, %v4201
      %v4268 = vadd.f32 %v4052, %v4203
      %v4269 = vadd.f32 %v4053, %v4205
      %v4270 = vpack.c.bf16 %v4239, %v4238
      %v4271 = vpack.c.bf16 %v4241, %v4240
      %v4272 = vpack.c.bf16 %v4243, %v4242
      %v4273 = vpack.c.bf16 %v4245, %v4244
      %v4274 = vpack.c.bf16 %v4247, %v4246
      %v4275 = vpack.c.bf16 %v4249, %v4248
      %v4276 = vpack.c.bf16 %v4251, %v4250
      %v4277 = vpack.c.bf16 %v4253, %v4252
      %v4278 = vpack.c.bf16 %v4255, %v4254
      %v4279 = vpack.c.bf16 %v4257, %v4256
      %v4280 = vpack.c.bf16 %v4259, %v4258
      %v4281 = vpack.c.bf16 %v4261, %v4260
      %v4282 = vpack.c.bf16 %v4263, %v4262
      %v4283 = vpack.c.bf16 %v4265, %v4264
      %v4284 = vpack.c.bf16 %v4267, %v4266
      %v4285 = vpack.c.bf16 %v4269, %v4268
      %v4286 = vld [vmem:[%s2] sm:$0xf]
      %v4287 = vld [vmem:[%s2 + $0x4] sm:$0xf]
      %v4288 = vld [vmem:[%s2 + $0x8] sm:$0xf]
      %v4289 = vld [vmem:[%s2 + $0xc] sm:$0xf]
      %v4290 = vld [vmem:[%s2 + $0x10] sm:$0xf]
      %v4291 = vld [vmem:[%s2 + $0x14] sm:$0xf]
      %v4292 = vld [vmem:[%s2 + $0x18] sm:$0xf]
      %v4293 = vld [vmem:[%s2 + $0x1c] sm:$0xf]
      %v4294 = vld [vmem:[%s2 + $0x20] sm:$0xf]
      %v4295 = vld [vmem:[%s2 + $0x24] sm:$0xf]
      %v4296 = vld [vmem:[%s2 + $0x28] sm:$0xf]
      %v4297 = vld [vmem:[%s2 + $0x2c] sm:$0xf]
      %v4298 = vld [vmem:[%s2 + $0x30] sm:$0xf]
      %v4299 = vld [vmem:[%s2 + $0x34] sm:$0xf]
      %v4300 = vld [vmem:[%s2 + $0x38] sm:$0xf]
      %v4301 = vld [vmem:[%s2 + $0x3c] sm:$0xf]
      %v4302 = vld [vmem:[%s3] sm:$0x1]
      %v4304 = vlaneseq
      %v4305 = vshrl.u32 %v4304, 7
      %v4306 = vsub.s32 0, %v4305
      %v4307 = vrot.slane %v4302, %v4306
      %v4325 = vunpack.c.l.b16 %v4286
      %v4326 = vunpack.c.l.b16 %v4287
      %v4327 = vunpack.c.l.b16 %v4288
      %v4328 = vunpack.c.l.b16 %v4289
      %v4329 = vunpack.c.l.b16 %v4290
      %v4330 = vunpack.c.l.b16 %v4291
      %v4331 = vunpack.c.l.b16 %v4292
      %v4332 = vunpack.c.l.b16 %v4293
      %v4333 = vunpack.c.l.b16 %v4294
      %v4334 = vunpack.c.l.b16 %v4295
      %v4335 = vunpack.c.l.b16 %v4296
      %v4336 = vunpack.c.l.b16 %v4297
      %v4337 = vunpack.c.l.b16 %v4298
      %v4338 = vunpack.c.l.b16 %v4299
      %v4339 = vunpack.c.l.b16 %v4300
      %v4340 = vunpack.c.l.b16 %v4301
      %v4341 = vpack.c.b16 %v4326, %v4325
      %v4342 = vpack.c.b16 %v4328, %v4327
      %v4343 = vpack.c.b16 %v4330, %v4329
      %v4344 = vpack.c.b16 %v4332, %v4331
      %v4345 = vpack.c.b16 %v4334, %v4333
      %v4346 = vpack.c.b16 %v4336, %v4335
      %v4347 = vpack.c.b16 %v4338, %v4337
      %v4348 = vpack.c.b16 %v4340, %v4339
      %4357 = vmatprep.subr.bf16.mxu0 0
      %4358 = vmatpush1.bf16.msra.mxu0 %v4341
      %4359 = vmatprep.subr.bf16.mxu0 0
      %4360 = vmatpush1.bf16.msra.mxu0 %v4342
      %4361 = vmatprep.subr.bf16.mxu0 0
      %4362 = vmatpush1.bf16.msra.mxu0 %v4343
      %4363 = vmatprep.subr.bf16.mxu0 0
      %4364 = vmatpush1.bf16.msra.mxu0 %v4344
      %4365 = vmatprep.subr.bf16.mxu0 0
      %4366 = vmatpush1.bf16.msra.mxu0 %v4345
      %4367 = vmatprep.subr.bf16.mxu0 0
      %4368 = vmatpush1.bf16.msra.mxu0 %v4346
      %4369 = vmatprep.subr.bf16.mxu0 0
      %4370 = vmatpush1.bf16.msra.mxu0 %v4347
      %4371 = vmatprep.subr.bf16.mxu0 0
      %4372 = vmatpush1.bf16.msra.mxu0 %v4348
      %4373 = vmatprep.subr.bf16.mxu0 0
      %4374 = vmatpush1.bf16.msra.mxu0 0
      %4375 = vmatprep.subr.bf16.mxu0 0
      %4376 = vmatpush1.bf16.msra.mxu0 0
      %4377 = vmatprep.subr.bf16.mxu0 0
      %4378 = vmatpush1.bf16.msra.mxu0 0
      %4379 = vmatprep.subr.bf16.mxu0 0
      %4380 = vmatpush1.bf16.msra.mxu0 0
      %4381 = vmatprep.subr.bf16.mxu0 0
      %4382 = vmatpush1.bf16.msra.mxu0 0
      %4383 = vmatprep.subr.bf16.mxu0 0
      %4384 = vmatpush1.bf16.msra.mxu0 0
      %4385 = vmatprep.subr.bf16.mxu0 0
      %4386 = vmatpush1.bf16.msra.mxu0 0
      %4387 = vmatprep.subr.bf16.mxu0 0
      %4388 = vmatpush1.bf16.msra.mxu0 0
      %4389 = vmatprep.mubr.bf16.mxu0 0
      %4390 = vmatmul.mubr.bf16.gmra.mrb[0].mxu0 %v4270
      %v4391 = vpop.f32.mrb[0].mxu0
      %v4392 = vadd.f32 %v4307, %v4391
      %v4393 = vpop.f32.mrb[0].mxu0
      %v4394 = vpop.f32.mrb[0].mxu0
      %v4395 = vadd.f32 %v4307, %v4394
      %v4396 = vpop.f32.mrb[0].mxu0
      %4397 = vmatprep.mubr.bf16.mxu0 0
      %4398 = vmatmul.mubr.bf16.gmra.mrb[0].mxu0 %v4271
      %v4399 = vpop.f32.mrb[0].mxu0
      %v4400 = vadd.f32 %v4307, %v4399
      %v4401 = vpop.f32.mrb[0].mxu0
      %v4402 = vpop.f32.mrb[0].mxu0
      %v4403 = vadd.f32 %v4307, %v4402
      %v4404 = vpop.f32.mrb[0].mxu0
      %4405 = vmatprep.mubr.bf16.mxu0 0
      %4406 = vmatmul.mubr.bf16.gmra.mrb[0].mxu0 %v4272
      %v4407 = vpop.f32.mrb[0].mxu0
      %v4408 = vadd.f32 %v4307, %v4407
      %v4409 = vpop.f32.mrb[0].mxu0
      %v4410 = vpop.f32.mrb[0].mxu0
      %v4411 = vadd.f32 %v4307, %v4410
      %v4412 = vpop.f32.mrb[0].mxu0
      %4413 = vmatprep.mubr.bf16.mxu0 0
      %4414 = vmatmul.mubr.bf16.gmra.mrb[0].mxu0 %v4273
      %v4415 = vpop.f32.mrb[0].mxu0
      %v4416 = vadd.f32 %v4307, %v4415
      %v4417 = vpop.f32.mrb[0].mxu0
      %v4418 = vpop.f32.mrb[0].mxu0
      %v4419 = vadd.f32 %v4307, %v4418
      %v4420 = vpop.f32.mrb[0].mxu0
      %4421 = vmatprep.mubr.bf16.mxu0 0
      %4422 = vmatmul.mubr.bf16.gmra.mrb[0].mxu0 %v4274
      %v4423 = vpop.f32.mrb[0].mxu0
      %v4424 = vadd.f32 %v4307, %v4423
      %v4425 = vpop.f32.mrb[0].mxu0
      %v4426 = vpop.f32.mrb[0].mxu0
      %v4427 = vadd.f32 %v4307, %v4426
      %v4428 = vpop.f32.mrb[0].mxu0
      %4429 = vmatprep.mubr.bf16.mxu0 0
      %4430 = vmatmul.mubr.bf16.gmra.mrb[0].mxu0 %v4275
      %v4431 = vpop.f32.mrb[0].mxu0
      %v4432 = vadd.f32 %v4307, %v4431
      %v4433 = vpop.f32.mrb[0].mxu0
      %v4434 = vpop.f32.mrb[0].mxu0
      %v4435 = vadd.f32 %v4307, %v4434
      %v4436 = vpop.f32.mrb[0].mxu0
      %4437 = vmatprep.mubr.bf16.mxu0 0
      %4438 = vmatmul.mubr.bf16.gmra.mrb[0].mxu0 %v4276
      %v4439 = vpop.f32.mrb[0].mxu0
      %v4440 = vadd.f32 %v4307, %v4439
      %v4441 = vpop.f32.mrb[0].mxu0
      %v4442 = vpop.f32.mrb[0].mxu0
      %v4443 = vadd.f32 %v4307, %v4442
      %v4444 = vpop.f32.mrb[0].mxu0
      %4445 = vmatprep.mubr.bf16.mxu0 0
      %4446 = vmatmul.mubr.bf16.gmra.mrb[0].mxu0 %v4277
      %v4447 = vpop.f32.mrb[0].mxu0
      %v4448 = vadd.f32 %v4307, %v4447
      %v4449 = vpop.f32.mrb[0].mxu0
      %v4450 = vpop.f32.mrb[0].mxu0
      %v4451 = vadd.f32 %v4307, %v4450
      %v4452 = vpop.f32.mrb[0].mxu0
      %4453 = vmatprep.mubr.bf16.mxu0 0
      %4454 = vmatmul.mubr.bf16.gmra.mrb[0].mxu0 %v4278
      %v4455 = vpop.f32.mrb[0].mxu0
      %v4456 = vadd.f32 %v4307, %v4455
      %v4457 = vpop.f32.mrb[0].mxu0
      %v4458 = vpop.f32.mrb[0].mxu0
      %v4459 = vadd.f32 %v4307, %v4458
      %v4460 = vpop.f32.mrb[0].mxu0
      %4461 = vmatprep.mubr.bf16.mxu0 0
      %4462 = vmatmul.mubr.bf16.gmra.mrb[0].mxu0 %v4279
      %v4463 = vpop.f32.mrb[0].mxu0
      %v4464 = vadd.f32 %v4307, %v4463
      %v4465 = vpop.f32.mrb[0].mxu0
      %v4466 = vpop.f32.mrb[0].mxu0
      %v4467 = vadd.f32 %v4307, %v4466
      %v4468 = vpop.f32.mrb[0].mxu0
      %4469 = vmatprep.mubr.bf16.mxu0 0
      %4470 = vmatmul.mubr.bf16.gmra.mrb[0].mxu0 %v4280
      %v4471 = vpop.f32.mrb[0].mxu0
      %v4472 = vadd.f32 %v4307, %v4471
      %v4473 = vpop.f32.mrb[0].mxu0
      %v4474 = vpop.f32.mrb[0].mxu0
      %v4475 = vadd.f32 %v4307, %v4474
      %v4476 = vpop.f32.mrb[0].mxu0
      %4477 = vmatprep.mubr.bf16.mxu0 0
      %4478 = vmatmul.mubr.bf16.gmra.mrb[0].mxu0 %v4281
      %v4479 = vpop.f32.mrb[0].mxu0
      %v4480 = vadd.f32 %v4307, %v4479
      %v4481 = vpop.f32.mrb[0].mxu0
      %v4482 = vpop.f32.mrb[0].mxu0
      %v4483 = vadd.f32 %v4307, %v4482
      %v4484 = vpop.f32.mrb[0].mxu0
      %4485 = vmatprep.mubr.bf16.mxu0 0
      %4486 = vmatmul.mubr.bf16.gmra.mrb[0].mxu0 %v4282
      %v4487 = vpop.f32.mrb[0].mxu0
      %v4488 = vadd.f32 %v4307, %v4487
      %v4489 = vpop.f32.mrb[0].mxu0
      %v4490 = vpop.f32.mrb[0].mxu0
      %v4491 = vadd.f32 %v4307, %v4490
      %v4492 = vpop.f32.mrb[0].mxu0
      %4493 = vmatprep.mubr.bf16.mxu0 0
      %4494 = vmatmul.mubr.bf16.gmra.mrb[0].mxu0 %v4283
      %v4495 = vpop.f32.mrb[0].mxu0
      %v4496 = vadd.f32 %v4307, %v4495
      %v4497 = vpop.f32.mrb[0].mxu0
      %v4498 = vpop.f32.mrb[0].mxu0
      %v4499 = vadd.f32 %v4307, %v4498
      %v4500 = vpop.f32.mrb[0].mxu0
      %4501 = vmatprep.mubr.bf16.mxu0 0
      %4502 = vmatmul.mubr.bf16.gmra.mrb[0].mxu0 %v4284
      %v4503 = vpop.f32.mrb[0].mxu0
      %v4504 = vadd.f32 %v4307, %v4503
      %v4505 = vpop.f32.mrb[0].mxu0
      %v4506 = vpop.f32.mrb[0].mxu0
      %v4507 = vadd.f32 %v4307, %v4506
      %v4508 = vpop.f32.mrb[0].mxu0
      %4509 = vmatprep.mubr.bf16.mxu0 0
      %4510 = vmatmul.mubr.bf16.gmra.mrb[0].mxu0 %v4285
      %v4511 = vpop.f32.mrb[0].mxu0
      %v4512 = vadd.f32 %v4307, %v4511
      %v4513 = vpop.f32.mrb[0].mxu0
      %v4514 = vpop.f32.mrb[0].mxu0
      %v4515 = vadd.f32 %v4307, %v4514
      %v4516 = vpop.f32.mrb[0].mxu0
      %4517 = vdwg.mxu0
      %v4518 = vmax.f32 %v4392, 0.0
      %v4519 = vmax.f32 %v4395, 0.0
      %v4520 = vmax.f32 %v4400, 0.0
      %v4521 = vmax.f32 %v4403, 0.0
      %v4522 = vmax.f32 %v4408, 0.0
      %v4523 = vmax.f32 %v4411, 0.0
      %v4524 = vmax.f32 %v4416, 0.0
      %v4525 = vmax.f32 %v4419, 0.0
      %v4526 = vmax.f32 %v4424, 0.0
      %v4527 = vmax.f32 %v4427, 0.0
      %v4528 = vmax.f32 %v4432, 0.0
      %v4529 = vmax.f32 %v4435, 0.0
      %v4530 = vmax.f32 %v4440, 0.0
      %v4531 = vmax.f32 %v4443, 0.0
      %v4532 = vmax.f32 %v4448, 0.0
      %v4533 = vmax.f32 %v4451, 0.0
      %v4534 = vmax.f32 %v4456, 0.0
      %v4535 = vmax.f32 %v4459, 0.0
      %v4536 = vmax.f32 %v4464, 0.0
      %v4537 = vmax.f32 %v4467, 0.0
      %v4538 = vmax.f32 %v4472, 0.0
      %v4539 = vmax.f32 %v4475, 0.0
      %v4540 = vmax.f32 %v4480, 0.0
      %v4541 = vmax.f32 %v4483, 0.0
      %v4542 = vmax.f32 %v4488, 0.0
      %v4543 = vmax.f32 %v4491, 0.0
      %v4544 = vmax.f32 %v4496, 0.0
      %v4545 = vmax.f32 %v4499, 0.0
      %v4546 = vmax.f32 %v4504, 0.0
      %v4547 = vmax.f32 %v4507, 0.0
      %v4548 = vmax.f32 %v4512, 0.0
      %v4549 = vmax.f32 %v4515, 0.0
      %s4550 = scalar_lea.vmem %s175, 256
      %4551 = vst [vmem:[%s4550] sm:$0xff] %v4518
      %4552 = vst [vmem:[%s4550 + $0x8] sm:$0xff] %v4519
      %4553 = vst [vmem:[%s4550 + $0x10] sm:$0xff] %v4520
      %4554 = vst [vmem:[%s4550 + $0x18] sm:$0xff] %v4521
      %4555 = vst [vmem:[%s4550 + $0x20] sm:$0xff] %v4522
      %4556 = vst [vmem:[%s4550 + $0x28] sm:$0xff] %v4523
      %4557 = vst [vmem:[%s4550 + $0x30] sm:$0xff] %v4524
      %4558 = vst [vmem:[%s4550 + $0x38] sm:$0xff] %v4525
      %4559 = vst [vmem:[%s4550 + $0x40] sm:$0xff] %v4526
      %4560 = vst [vmem:[%s4550 + $0x48] sm:$0xff] %v4527
      %4561 = vst [vmem:[%s4550 + $0x50] sm:$0xff] %v4528
      %4562 = vst [vmem:[%s4550 + $0x58] sm:$0xff] %v4529
      %4563 = vst [vmem:[%s4550 + $0x60] sm:$0xff] %v4530
      %4564 = vst [vmem:[%s4550 + $0x68] sm:$0xff] %v4531
      %4565 = vst [vmem:[%s4550 + $0x70] sm:$0xff] %v4532
      %4566 = vst [vmem:[%s4550 + $0x78] sm:$0xff] %v4533
      %4567 = vst [vmem:[%s4550 + $0x80] sm:$0xff] %v4534
      %4568 = vst [vmem:[%s4550 + $0x88] sm:$0xff] %v4535
      %4569 = vst [vmem:[%s4550 + $0x90] sm:$0xff] %v4536
      %4570 = vst [vmem:[%s4550 + $0x98] sm:$0xff] %v4537
      %4571 = vst [vmem:[%s4550 + $0xa0] sm:$0xff] %v4538
      %4572 = vst [vmem:[%s4550 + $0xa8] sm:$0xff] %v4539
      %4573 = vst [vmem:[%s4550 + $0xb0] sm:$0xff] %v4540
      %4574 = vst [vmem:[%s4550 + $0xb8] sm:$0xff] %v4541
      %4575 = vst [vmem:[%s4550 + $0xc0] sm:$0xff] %v4542
      %4576 = vst [vmem:[%s4550 + $0xc8] sm:$0xff] %v4543
      %4577 = vst [vmem:[%s4550 + $0xd0] sm:$0xff] %v4544
      %4578 = vst [vmem:[%s4550 + $0xd8] sm:$0xff] %v4545
      %4579 = vst [vmem:[%s4550 + $0xe0] sm:$0xff] %v4546
      %4580 = vst [vmem:[%s4550 + $0xe8] sm:$0xff] %v4547
      %4581 = vst [vmem:[%s4550 + $0xf0] sm:$0xff] %v4548
      %4582 = vst [vmem:[%s4550 + $0xf8] sm:$0xff] %v4549
      %s4583 = smul.u32 16, %s20
      %p4584 = scmp.lt.s32.totalorder %s19, 1
      %s4585 = scalar_select %p4584, %s19, 1
      %p4586 = scmp.lt.s32.totalorder %s4583, 31
      %s4587 = scalar_select %p4586, %s4583, 31
      %s4588 = smul.addr %s4587, 4
      %s4589 = smul.addr %s4585, 128
      %s4590 = sadd.s32 %s4588, %s4589
      %s4591 = smul.addr %s4590, 8
      %s4592 = scalar_lea.vmem %s4, %s4591
      // Predicated region
      $region115: #{separable_conv2d.1} parent=31 // pred_check
        %p4593 = pneg %p110
      $region116: #{separable_conv2d.1} parent=31 // pred_check_branch
        %4595 = sbr.rel (%p4593) target = $region118
      $region117: #{separable_conv2d.1} parent=31 // pred_region
        %s4596 = smul.u32 16, %s20
      $region118: #{separable_conv2d.1} parent=31 // pred_fallthru
        _
    $region32: #{separable_conv2d.1} parent=5 // pred_fallthru
      _
    %p4597 = scmp.le.s32.totalorder 2, %s10
    // Predicated region
    $region119: #{separable_conv2d.1} parent=5 // pred_check
      %p4598 = pneg %p4597
    $region120: #{separable_conv2d.1} parent=5 // pred_check_branch
      %4600 = sbr.rel (%p4598) target = $region122
    $region121: #{separable_conv2d.1} parent=5 // pred_region
      %s4601 = ssub.s32 %s10, 2
      // Predicated region
      $region123: #{separable_conv2d.1} parent=121 // pred_check
        %p4602 = pneg %p116
      $region124: #{separable_conv2d.1} parent=121 // pred_check_branch
        %4604 = sbr.rel (%p4602) target = $region126
      $region125: #{separable_conv2d.1} parent=121 // pred_region
        %s4605 = smul.u32 16, %s22
        %p4606 = scmp.lt.s32.totalorder %s21, 1
        %s4607 = scalar_select %p4606, %s21, 1
        %p4608 = scmp.lt.s32.totalorder %s4605, 31
        %s4609 = scalar_select %p4608, %s4605, 31
        %s4610 = smul.addr %s4609, 4
        %s4611 = smul.addr %s4607, 128
        %s4612 = sadd.s32 %s4610, %s4611
        %s4613 = smul.addr %s4612, 8
        %s4614 = scalar_lea.vmem %s4, %s4613
      $region126: #{separable_conv2d.1} parent=121 // pred_fallthru
        _
    $region122: #{separable_conv2d.1} parent=5 // pred_fallthru
      _
  $region6: #{separable_conv2d.1} parent=0 // loop_footer
    %s14 = sadd.s32 1, %s10
  $region7: #{separable_conv2d.1} parent=0 // loop_footer_branch
    %9 = sbr.rel target = $region3
  $region8: #{separable_conv2d.1} parent=0 // loop_exit
    _
  %4615 = vsyncmov [#allocation3]
  %s4616 = vpop.sfrf %4615
  %p4617 = scmp.eq.s32.totalorder %s4616, 0
  %p4618 = pneg %p4617
  %4620 = shalt.err (%p4618)
  %s4621 = scalar_lea.sflag [#allocation3], 1
  %4622 = vsyncmov %s4621
  %s4623 = vpop.sfrf %4622
  %p4624 = scmp.eq.s32.totalorder %s4623, 0
  %p4625 = pneg %p4624
  %4627 = shalt.err (%p4625)

</llo_original>
